<compile_context>
chip_gen: v7x
topology: tpu7x:2x2x1
jax: 0.10.0
libtpu: 0.0.40
codegen_flags: <defaults>
</compile_context>

<pallas_src>
import functools
import math

import jax
import jax.numpy as jnp
from jax import lax
from jax.experimental import pallas as pl
from jax.experimental.pallas import tpu as pltpu

MY_INF = 2.0 ** 32


# ---------------------------------------------------------------------------
# Fused MHA kernel: one block of `block_b` batch elements per grid step.
# ---------------------------------------------------------------------------
def _fused_mha_kernel(q_ref, k_ref, v_ref,
                      wq_ref, bq_ref, wk_ref, bk_ref, wv_ref, bv_ref,
                      wo_ref, bo_ref, o_ref, attn_ref,
                      *, block_b, num_heads, causal, mxu_dtype):
    H = num_heads
    nh = wq_ref.shape[1]
    dh = nh // H
    Lq = q_ref.shape[0] // block_b
    Lk = k_ref.shape[0] // block_b
    scale = jnp.float32(1.0 / math.sqrt(dh))
    neg = jnp.float32(-MY_INF + 1.0)
    md = mxu_dtype      # matmul-input dtype; accumulation is always f32

    # --- fused Q/K/V projections + ReLU on the whole (block_b*L, D) slab.
    Qf = jnp.maximum(
        jnp.dot(q_ref[...].astype(md), wq_ref[...].astype(md),
                preferred_element_type=jnp.float32) + bq_ref[...], 0.0)      # (bLq, nh)
    Kf = jnp.maximum(
        jnp.dot(k_ref[...].astype(md), wk_ref[...].astype(md),
                preferred_element_type=jnp.float32) + bk_ref[...], 0.0)      # (bLk, nh)
    Vf = jnp.maximum(
        jnp.dot(v_ref[...].astype(md), wv_ref[...].astype(md),
                preferred_element_type=jnp.float32) + bv_ref[...], 0.0)      # (bLk, nh)

    # --- causal mask (compile-time flag), hoisted out of the head loop.
    if causal:
        row = lax.broadcasted_iota(jnp.int32, (1, Lq, Lk), 1)
        col = lax.broadcasted_iota(jnp.int32, (1, Lq, Lk), 2)
        causal_cond = col > row                       # upper triangle masked

    # --- per-head attention.  H is small and static -> unrolled loop; each head
    # writes its result directly into the persistent VMEM scratch (no concat).
    # TODO(synk): for large H / seq lengths, switch to lax.fori_loop plus a single
    # batched all-head dot_general (one head-relayout) and flash-style Lk tiling
    # to bound live ranges and VMEM (v7x: 64 MiB physical).
    for h in range(H):
        sl = slice(h * dh, (h + 1) * dh)
        qh = Qf[:, sl].reshape(block_b, Lq, dh)
        kh = Kf[:, sl].reshape(block_b, Lk, dh)
        vh = Vf[:, sl].reshape(block_b, Lk, dh)

        s = jnp.einsum('bqd,bkd->bqk', qh.astype(md), kh.astype(md),
                       preferred_element_type=jnp.float32) * scale           # (b, Lq, Lk)

        # key-padding mask: key j masked iff sum over its head slice of relu(K) == 0
        ksum = jnp.sum(kh, axis=-1)                                          # (b, Lk)
        s = jnp.where((ksum == 0.0)[:, None, :], neg, s)
        if causal:
            s = jnp.where(causal_cond, neg, s)

        # stable softmax (exact divide for parity with the f32 reference)
        m = jnp.max(s, axis=-1, keepdims=True)
        e = jnp.exp(s - m)
        p = e / jnp.sum(e, axis=-1, keepdims=True)
        # TODO(synk): dropout on attention probabilities omitted (eval-mode / deterministic).

        oh = jnp.einsum('bqk,bkd->bqd', p.astype(md), vh.astype(md),
                        preferred_element_type=jnp.float32)                  # (b, Lq, dh)
        attn_ref[:, sl] = oh.reshape(block_b * Lq, dh)

    # --- output projection; Wo/bo are zero-padded to a multiple of 128 columns
    # in the wrapper, so this store is lane-dense (unmasked vst).
    out = jnp.dot(attn_ref[...].astype(md), wo_ref[...].astype(md),
                  preferred_element_type=jnp.float32) + bo_ref[...]
    o_ref[...] = out.astype(o_ref.dtype)


# ---------------------------------------------------------------------------
# Wrapper
# ---------------------------------------------------------------------------
def multihead_attention(params, query, key, value, num_heads, attn_mask=False,
                        block_b=None, mxu_dtype=jnp.float32):
    B, Lq, Dq = query.shape
    _, Lk, Dk = key.shape
    Dv = value.shape[2]
    nh = params["Wq"].shape[1]
    Dout = params["Wo"].shape[1]
    assert nh % num_heads == 0

    if block_b is None:
        # Fold the whole batch into one grid step when it is small (max MXU row
        # utilisation); keep >=2 steps once B >= 4 so v7x's two TensorCores both work.
        block_b = B if (B < 4 or B % 2 != 0) else B // 2
    assert B % block_b == 0
    grid_b = B // block_b

    # Lane-dense output: pad output-projection columns up to a multiple of 128.
    LANE = 128
    Dout_p = ((Dout + LANE - 1) // LANE) * LANE
    Wo_p = jnp.pad(params["Wo"], ((0, 0), (0, Dout_p - Dout)))
    bo_p = jnp.pad(params["bo"], (0, Dout_p - Dout)).reshape(1, Dout_p)

    bq = params["bq"].reshape(1, nh)
    bk = params["bk"].reshape(1, nh)
    bv = params["bv"].reshape(1, nh)

    # Flatten (batch, seq) so the projections run on one (block_b*L, D) slab per step.
    q2d = query.reshape(B * Lq, Dq)
    k2d = key.reshape(B * Lk, Dk)
    v2d = value.reshape(B * Lk, Dv)

    kernel = functools.partial(_fused_mha_kernel, block_b=block_b,
                               num_heads=num_heads, causal=bool(attn_mask),
                               mxu_dtype=mxu_dtype)

    const = lambda b: (0, 0)       # weights/biases stay resident across the batch grid

    out_flat = pl.pallas_call(
        kernel,
        out_shape=jax.ShapeDtypeStruct((B * Lq, Dout_p), query.dtype),
        grid_spec=pltpu.PrefetchScalarGridSpec(
            num_scalar_prefetch=0,
            grid=(grid_b,),
            in_specs=[
                pl.BlockSpec((block_b * Lq, Dq), lambda b: (b, 0)),
                pl.BlockSpec((block_b * Lk, Dk), lambda b: (b, 0)),
                pl.BlockSpec((block_b * Lk, Dv), lambda b: (b, 0)),
                pl.BlockSpec((Dq, nh), const),
                pl.BlockSpec((1, nh), const),
                pl.BlockSpec((Dk, nh), const),
                pl.BlockSpec((1, nh), const),
                pl.BlockSpec((Dv, nh), const),
                pl.BlockSpec((1, nh), const),
                pl.BlockSpec((nh, Dout_p), const),
                pl.BlockSpec((1, Dout_p), const),
            ],
            out_specs=pl.BlockSpec((block_b * Lq, Dout_p), lambda b: (b, 0)),
            scratch_shapes=[pltpu.VMEM((block_b * Lq, nh), jnp.float32)],
        ),
        compiler_params=pltpu.CompilerParams(
            dimension_semantics=("parallel",),          # batch-block axis shards across TCs
            vmem_limit_bytes=32 * 1024 * 1024,          # explicit budget (v7x-safe)
        ),
    )(q2d, k2d, v2d,
      params["Wq"], bq, params["Wk"], bk, params["Wv"], bv,
      Wo_p, bo_p)

    return out_flat[:, :Dout].reshape(B, Lq, Dout)


# ---------------------------------------------------------------------------
# Pure-JAX reference (mirrors the PyTorch module) for a quick parity check.
# ---------------------------------------------------------------------------
def multihead_attention_ref(params, query, key, value, num_heads, attn_mask=False):
    Q = jnp.maximum(query @ params["Wq"] + params["bq"], 0.0)
    K = jnp.maximum(key @ params["Wk"] + params["bk"], 0.0)
    V = jnp.maximum(value @ params["Wv"] + params["bv"], 0.0)
    B, Lq, nh = Q.shape
    Lk = K.shape[1]
    H = num_heads
    dh = nh // H

    def split(x, L):
        return x.reshape(B, L, H, dh).transpose(0, 2, 1, 3)

    Qh, Kh, Vh = split(Q, Lq), split(K, Lk), split(V, Lk)
    s = jnp.einsum('bhqd,bhkd->bhqk', Qh, Kh) / math.sqrt(dh)
    neg = -MY_INF + 1.0
    kmask = (jnp.sum(Kh, axis=-1) == 0.0)[:, :, None, :]
    s = jnp.where(kmask, neg, s)
    if attn_mask:
        row = jnp.arange(Lq)[:, None]
        col = jnp.arange(Lk)[None, :]
        s = jnp.where(col > row, neg, s)
    p = jax.nn.softmax(s, axis=-1)
    o = jnp.einsum('bhqk,bhkd->bhqd', p, Vh)
    o = o.transpose(0, 2, 1, 3).reshape(B, Lq, nh)
    return o @ params["Wo"] + params["bo"]


def init_params(key, query_size, key_size, value_size, num_hiddens, output_channel,
                dtype=jnp.float32):
    ks = jax.random.split(key, 8)

    def xavier(k, fan_in, fan_out):
        bound = math.sqrt(6.0 / (fan_in + fan_out))
        return jax.random.uniform(k, (fan_in, fan_out), dtype, -bound, bound)

    return {
        "Wq": xavier(ks[0], query_size, num_hiddens),
        "bq": jax.random.normal(ks[1], (num_hiddens,), dtype) * 0.02,
        "Wk": xavier(ks[2], key_size, num_hiddens),
        "bk": jax.random.normal(ks[3], (num_hiddens,), dtype) * 0.02,
        "Wv": xavier(ks[4], value_size, num_hiddens),
        "bv": jax.random.normal(ks[5], (num_hiddens,), dtype) * 0.02,
        "Wo": xavier(ks[6], num_hiddens, output_channel),
        "bo": jax.random.normal(ks[7], (output_channel,), dtype) * 0.02,
    }


if __name__ == "__main__":
    # small, module-consistent shapes
    B, Lq, Lk = 2, 8, 8
    query_size = key_size = value_size = 16
    num_hiddens = 32
    num_heads = 4
    output_channel = 16

    root = jax.random.PRNGKey(0)
    kp, kq, kk, kv = jax.random.split(root, 4)

    params = init_params(kp, query_size, key_size, value_size, num_hiddens, output_channel)

    query = jax.random.normal(kq, (B, Lq, query_size), jnp.float32)
    key_in = jax.random.normal(kk, (B, Lk, key_size), jnp.float32)
    value_in = jax.random.normal(kv, (B, Lk, value_size), jnp.float32)

    for causal in (False, True):
        out = multihead_attention(params, query, key_in, value_in, num_heads,
                                  attn_mask=causal)
        jax.block_until_ready(out)
        assert out.shape == (B, Lq, output_channel)
        with jax.default_matmul_precision("highest"):
            ref = multihead_attention_ref(params, query, key_in, value_in, num_heads,
                                          attn_mask=causal)
        jax.block_until_ready(ref)
        assert jnp.allclose(out, ref, rtol=1e-2, atol=1e-2), (
            f"mismatch (causal={causal}): max abs err "
            f"{float(jnp.max(jnp.abs(out - ref)))}")

    print("KERNEL_OK")
</pallas_src>

<mosaic_0001>
module attributes {stable_mosaic.version = 11 : i64} {
  func.func @_fused_mha_kernel(%arg0: i32, %arg1: memref<16x16xf32, #tpu.memory_space<vmem>>, %arg2: memref<16x16xf32, #tpu.memory_space<vmem>>, %arg3: memref<16x16xf32, #tpu.memory_space<vmem>>, %arg4: memref<16x32xf32, #tpu.memory_space<vmem>>, %arg5: memref<1x32xf32, #tpu.memory_space<vmem>>, %arg6: memref<16x32xf32, #tpu.memory_space<vmem>>, %arg7: memref<1x32xf32, #tpu.memory_space<vmem>>, %arg8: memref<16x32xf32, #tpu.memory_space<vmem>>, %arg9: memref<1x32xf32, #tpu.memory_space<vmem>>, %arg10: memref<32x128xf32, #tpu.memory_space<vmem>>, %arg11: memref<1x128xf32, #tpu.memory_space<vmem>>, %arg12: memref<16x128xf32, #tpu.memory_space<vmem>>, %arg13: memref<16x32xf32, #tpu.memory_space<vmem>>) attributes {dimension_semantics = [#tpu.dimension_semantics<parallel>], iteration_bounds = array<i64: 1>, scalar_prefetch = 0 : i64, scratch_operands = 1 : i64, tpu.core_type = #tpu.core_type<tc>, window_params = [{transform_indices = @transform_0, window_bounds = array<i64: 16, 16>}, {transform_indices = @transform_1, window_bounds = array<i64: 16, 16>}, {transform_indices = @transform_2, window_bounds = array<i64: 16, 16>}, {pipeline_mode = #tpu.pipeline_mode<synchronous>, transform_indices = @transform_3, window_bounds = array<i64: 16, 32>}, {pipeline_mode = #tpu.pipeline_mode<synchronous>, transform_indices = @transform_4, window_bounds = array<i64: 1, 32>}, {pipeline_mode = #tpu.pipeline_mode<synchronous>, transform_indices = @transform_5, window_bounds = array<i64: 16, 32>}, {pipeline_mode = #tpu.pipeline_mode<synchronous>, transform_indices = @transform_6, window_bounds = array<i64: 1, 32>}, {pipeline_mode = #tpu.pipeline_mode<synchronous>, transform_indices = @transform_7, window_bounds = array<i64: 16, 32>}, {pipeline_mode = #tpu.pipeline_mode<synchronous>, transform_indices = @transform_8, window_bounds = array<i64: 1, 32>}, {pipeline_mode = #tpu.pipeline_mode<synchronous>, transform_indices = @transform_9, window_bounds = array<i64: 32, 128>}, {pipeline_mode = #tpu.pipeline_mode<synchronous>, transform_indices = @transform_10, window_bounds = array<i64: 1, 128>}, {transform_indices = @transform_11, window_bounds = array<i64: 16, 128>}]} {
    %c0 = arith.constant 0 : index
    %c0_0 = arith.constant 0 : index
    %0 = vector.load %arg1[%c0, %c0_0] : memref<16x16xf32, #tpu.memory_space<vmem>>, vector<16x16xf32>
    %c0_1 = arith.constant 0 : index
    %c0_2 = arith.constant 0 : index
    %1 = vector.load %arg4[%c0_1, %c0_2] : memref<16x32xf32, #tpu.memory_space<vmem>>, vector<16x32xf32>
    %cst = arith.constant dense<0.000000e+00> : vector<16x32xf32>
    %2 = tpu.matmul %0, %1, %cst {dimension_numbers = #tpu.dot_dimension_numbers<[1], [0], [0], [1], [0, 0, 1, 1], [], []>} : vector<16x16xf32>, vector<16x32xf32>, vector<16x32xf32> -> vector<16x32xf32>
    %c0_3 = arith.constant 0 : index
    %c0_4 = arith.constant 0 : index
    %3 = vector.load %arg5[%c0_3, %c0_4] : memref<1x32xf32, #tpu.memory_space<vmem>>, vector<1x32xf32>
    %4 = vector.broadcast %3 : vector<1x32xf32> to vector<16x32xf32>
    %5 = arith.addf %2, %4 : vector<16x32xf32>
    %cst_5 = arith.constant 0.000000e+00 : f32
    %6 = vector.broadcast %cst_5 : f32 to vector<16x32xf32>
    %7 = arith.maximumf %5, %6 : vector<16x32xf32>
    %c0_6 = arith.constant 0 : index
    %c0_7 = arith.constant 0 : index
    %8 = vector.load %arg2[%c0_6, %c0_7] : memref<16x16xf32, #tpu.memory_space<vmem>>, vector<16x16xf32>
    %c0_8 = arith.constant 0 : index
    %c0_9 = arith.constant 0 : index
    %9 = vector.load %arg6[%c0_8, %c0_9] : memref<16x32xf32, #tpu.memory_space<vmem>>, vector<16x32xf32>
    %cst_10 = arith.constant dense<0.000000e+00> : vector<16x32xf32>
    %10 = tpu.matmul %8, %9, %cst_10 {dimension_numbers = #tpu.dot_dimension_numbers<[1], [0], [0], [1], [0, 0, 1, 1], [], []>} : vector<16x16xf32>, vector<16x32xf32>, vector<16x32xf32> -> vector<16x32xf32>
    %c0_11 = arith.constant 0 : index
    %c0_12 = arith.constant 0 : index
    %11 = vector.load %arg7[%c0_11, %c0_12] : memref<1x32xf32, #tpu.memory_space<vmem>>, vector<1x32xf32>
    %12 = vector.broadcast %11 : vector<1x32xf32> to vector<16x32xf32>
    %13 = arith.addf %10, %12 : vector<16x32xf32>
    %cst_13 = arith.constant 0.000000e+00 : f32
    %14 = vector.broadcast %cst_13 : f32 to vector<16x32xf32>
    %15 = arith.maximumf %13, %14 : vector<16x32xf32>
    %c0_14 = arith.constant 0 : index
    %c0_15 = arith.constant 0 : index
    %16 = vector.load %arg3[%c0_14, %c0_15] : memref<16x16xf32, #tpu.memory_space<vmem>>, vector<16x16xf32>
    %c0_16 = arith.constant 0 : index
    %c0_17 = arith.constant 0 : index
    %17 = vector.load %arg8[%c0_16, %c0_17] : memref<16x32xf32, #tpu.memory_space<vmem>>, vector<16x32xf32>
    %cst_18 = arith.constant dense<0.000000e+00> : vector<16x32xf32>
    %18 = tpu.matmul %16, %17, %cst_18 {dimension_numbers = #tpu.dot_dimension_numbers<[1], [0], [0], [1], [0, 0, 1, 1], [], []>} : vector<16x16xf32>, vector<16x32xf32>, vector<16x32xf32> -> vector<16x32xf32>
    %c0_19 = arith.constant 0 : index
    %c0_20 = arith.constant 0 : index
    %19 = vector.load %arg9[%c0_19, %c0_20] : memref<1x32xf32, #tpu.memory_space<vmem>>, vector<1x32xf32>
    %20 = vector.broadcast %19 : vector<1x32xf32> to vector<16x32xf32>
    %21 = arith.addf %18, %20 : vector<16x32xf32>
    %cst_21 = arith.constant 0.000000e+00 : f32
    %22 = vector.broadcast %cst_21 : f32 to vector<16x32xf32>
    %23 = arith.maximumf %21, %22 : vector<16x32xf32>
    %24 = vector.extract_strided_slice %7 {offsets = [0, 0], sizes = [16, 8], strides = [1, 1]} : vector<16x32xf32> to vector<16x8xf32>
    %25 = vector.shape_cast %24 : vector<16x8xf32> to vector<2x8x8xf32>
    %26 = vector.extract_strided_slice %15 {offsets = [0, 0], sizes = [16, 8], strides = [1, 1]} : vector<16x32xf32> to vector<16x8xf32>
    %27 = vector.shape_cast %26 : vector<16x8xf32> to vector<2x8x8xf32>
    %28 = vector.extract_strided_slice %23 {offsets = [0, 0], sizes = [16, 8], strides = [1, 1]} : vector<16x32xf32> to vector<16x8xf32>
    %29 = vector.shape_cast %28 : vector<16x8xf32> to vector<2x8x8xf32>
    "tpu.trace_start"() <{level = 10 : i32, message = "bqd,bkd->bqk"}> : () -> ()
    %cst_22 = arith.constant dense<0.000000e+00> : vector<2x8x8xf32>
    %30 = tpu.matmul %25, %27, %cst_22 {dimension_numbers = #tpu.dot_dimension_numbers<[2], [2], [1], [1], [0, 0, 0, 1, 1, 1], [0], [0]>} : vector<2x8x8xf32>, vector<2x8x8xf32>, vector<2x8x8xf32> -> vector<2x8x8xf32>
    "tpu.trace_stop"() : () -> ()
    %cst_23 = arith.constant 0.353553385 : f32
    %31 = vector.broadcast %cst_23 : f32 to vector<2x8x8xf32>
    %32 = arith.mulf %30, %31 : vector<2x8x8xf32>
    %cst_24 = arith.constant dense<0.000000e+00> : vector<2x8xf32>
    %33 = vector.multi_reduction <add>, %27, %cst_24 [2] : vector<2x8x8xf32> to vector<2x8xf32>
    %cst_25 = arith.constant 0.000000e+00 : f32
    %34 = vector.broadcast %cst_25 : f32 to vector<2x8xf32>
    %35 = arith.cmpf oeq, %33, %34 : vector<2x8xf32>
    %36 = vector.shape_cast %35 : vector<2x8xi1> to vector<2x1x8xi1>
    %cst_26 = arith.constant -4.2949673E+9 : f32
    %37 = vector.shape_cast %36 : vector<2x1x8xi1> to vector<2x1x8xi1>
    %38 = vector.broadcast %37 : vector<2x1x8xi1> to vector<2x8x8xi1>
    %39 = vector.broadcast %cst_26 : f32 to vector<2x8x8xf32>
    %40 = arith.select %38, %39, %32 : vector<2x8x8xi1>, vector<2x8x8xf32>
    %cst_27 = arith.constant dense<0xFF800000> : vector<2x8xf32>
    %41 = vector.multi_reduction <maximumf>, %40, %cst_27 [2] : vector<2x8x8xf32> to vector<2x8xf32>
    %42 = vector.shape_cast %41 : vector<2x8xf32> to vector<2x8x1xf32>
    %43 = vector.broadcast %42 : vector<2x8x1xf32> to vector<2x8x8xf32>
    %44 = arith.subf %40, %43 : vector<2x8x8xf32>
    %45 = math.exp %44 : vector<2x8x8xf32>
    %cst_28 = arith.constant dense<0.000000e+00> : vector<2x8xf32>
    %46 = vector.multi_reduction <add>, %45, %cst_28 [2] : vector<2x8x8xf32> to vector<2x8xf32>
    %47 = vector.shape_cast %46 : vector<2x8xf32> to vector<2x8x1xf32>
    %48 = vector.broadcast %47 : vector<2x8x1xf32> to vector<2x8x8xf32>
    %49 = arith.divf %45, %48 : vector<2x8x8xf32>
    "tpu.trace_start"() <{level = 10 : i32, message = "bqk,bkd->bqd"}> : () -> ()
    %cst_29 = arith.constant dense<0.000000e+00> : vector<2x8x8xf32>
    %50 = tpu.matmul %49, %29, %cst_29 {dimension_numbers = #tpu.dot_dimension_numbers<[2], [1], [1], [2], [0, 0, 0, 1, 1, 2], [0], [0]>} : vector<2x8x8xf32>, vector<2x8x8xf32>, vector<2x8x8xf32> -> vector<2x8x8xf32>
    "tpu.trace_stop"() : () -> ()
    %51 = vector.shape_cast %50 : vector<2x8x8xf32> to vector<16x8xf32>
    %c0_30 = arith.constant 0 : index
    %c0_31 = arith.constant 0 : index
    %52 = vector.load %arg13[%c0_30, %c0_31] : memref<16x32xf32, #tpu.memory_space<vmem>>, vector<16x8xf32>
    tpu.vector_store %arg13[%c0_30, %c0_31], %51 {strides = array<i32>} : memref<16x32xf32, #tpu.memory_space<vmem>>, vector<16x8xf32>,
    %53 = vector.extract_strided_slice %7 {offsets = [0, 8], sizes = [16, 8], strides = [1, 1]} : vector<16x32xf32> to vector<16x8xf32>
    %54 = vector.shape_cast %53 : vector<16x8xf32> to vector<2x8x8xf32>
    %55 = vector.extract_strided_slice %15 {offsets = [0, 8], sizes = [16, 8], strides = [1, 1]} : vector<16x32xf32> to vector<16x8xf32>
    %56 = vector.shape_cast %55 : vector<16x8xf32> to vector<2x8x8xf32>
    %57 = vector.extract_strided_slice %23 {offsets = [0, 8], sizes = [16, 8], strides = [1, 1]} : vector<16x32xf32> to vector<16x8xf32>
    %58 = vector.shape_cast %57 : vector<16x8xf32> to vector<2x8x8xf32>
    "tpu.trace_start"() <{level = 10 : i32, message = "bqd,bkd->bqk"}> : () -> ()
    %cst_32 = arith.constant dense<0.000000e+00> : vector<2x8x8xf32>
    %59 = tpu.matmul %54, %56, %cst_32 {dimension_numbers = #tpu.dot_dimension_numbers<[2], [2], [1], [1], [0, 0, 0, 1, 1, 1], [0], [0]>} : vector<2x8x8xf32>, vector<2x8x8xf32>, vector<2x8x8xf32> -> vector<2x8x8xf32>
    "tpu.trace_stop"() : () -> ()
    %cst_33 = arith.constant 0.353553385 : f32
    %60 = vector.broadcast %cst_33 : f32 to vector<2x8x8xf32>
    %61 = arith.mulf %59, %60 : vector<2x8x8xf32>
    %cst_34 = arith.constant dense<0.000000e+00> : vector<2x8xf32>
    %62 = vector.multi_reduction <add>, %56, %cst_34 [2] : vector<2x8x8xf32> to vector<2x8xf32>
    %cst_35 = arith.constant 0.000000e+00 : f32
    %63 = vector.broadcast %cst_35 : f32 to vector<2x8xf32>
    %64 = arith.cmpf oeq, %62, %63 : vector<2x8xf32>
    %65 = vector.shape_cast %64 : vector<2x8xi1> to vector<2x1x8xi1>
    %cst_36 = arith.constant -4.2949673E+9 : f32
    %66 = vector.shape_cast %65 : vector<2x1x8xi1> to vector<2x1x8xi1>
    %67 = vector.broadcast %66 : vector<2x1x8xi1> to vector<2x8x8xi1>
    %68 = vector.broadcast %cst_36 : f32 to vector<2x8x8xf32>
    %69 = arith.select %67, %68, %61 : vector<2x8x8xi1>, vector<2x8x8xf32>
    %cst_37 = arith.constant dense<0xFF800000> : vector<2x8xf32>
    %70 = vector.multi_reduction <maximumf>, %69, %cst_37 [2] : vector<2x8x8xf32> to vector<2x8xf32>
    %71 = vector.shape_cast %70 : vector<2x8xf32> to vector<2x8x1xf32>
    %72 = vector.broadcast %71 : vector<2x8x1xf32> to vector<2x8x8xf32>
    %73 = arith.subf %69, %72 : vector<2x8x8xf32>
    %74 = math.exp %73 : vector<2x8x8xf32>
    %cst_38 = arith.constant dense<0.000000e+00> : vector<2x8xf32>
    %75 = vector.multi_reduction <add>, %74, %cst_38 [2] : vector<2x8x8xf32> to vector<2x8xf32>
    %76 = vector.shape_cast %75 : vector<2x8xf32> to vector<2x8x1xf32>
    %77 = vector.broadcast %76 : vector<2x8x1xf32> to vector<2x8x8xf32>
    %78 = arith.divf %74, %77 : vector<2x8x8xf32>
    "tpu.trace_start"() <{level = 10 : i32, message = "bqk,bkd->bqd"}> : () -> ()
    %cst_39 = arith.constant dense<0.000000e+00> : vector<2x8x8xf32>
    %79 = tpu.matmul %78, %58, %cst_39 {dimension_numbers = #tpu.dot_dimension_numbers<[2], [1], [1], [2], [0, 0, 0, 1, 1, 2], [0], [0]>} : vector<2x8x8xf32>, vector<2x8x8xf32>, vector<2x8x8xf32> -> vector<2x8x8xf32>
    "tpu.trace_stop"() : () -> ()
    %80 = vector.shape_cast %79 : vector<2x8x8xf32> to vector<16x8xf32>
    %c0_40 = arith.constant 0 : index
    %c8 = arith.constant 8 : index
    %81 = vector.load %arg13[%c0_40, %c8] : memref<16x32xf32, #tpu.memory_space<vmem>>, vector<16x8xf32>
    tpu.vector_store %arg13[%c0_40, %c8], %80 {strides = array<i32>} : memref<16x32xf32, #tpu.memory_space<vmem>>, vector<16x8xf32>,
    %82 = vector.extract_strided_slice %7 {offsets = [0, 16], sizes = [16, 8], strides = [1, 1]} : vector<16x32xf32> to vector<16x8xf32>
    %83 = vector.shape_cast %82 : vector<16x8xf32> to vector<2x8x8xf32>
    %84 = vector.extract_strided_slice %15 {offsets = [0, 16], sizes = [16, 8], strides = [1, 1]} : vector<16x32xf32> to vector<16x8xf32>
    %85 = vector.shape_cast %84 : vector<16x8xf32> to vector<2x8x8xf32>
    %86 = vector.extract_strided_slice %23 {offsets = [0, 16], sizes = [16, 8], strides = [1, 1]} : vector<16x32xf32> to vector<16x8xf32>
    %87 = vector.shape_cast %86 : vector<16x8xf32> to vector<2x8x8xf32>
    "tpu.trace_start"() <{level = 10 : i32, message = "bqd,bkd->bqk"}> : () -> ()
    %cst_41 = arith.constant dense<0.000000e+00> : vector<2x8x8xf32>
    %88 = tpu.matmul %83, %85, %cst_41 {dimension_numbers = #tpu.dot_dimension_numbers<[2], [2], [1], [1], [0, 0, 0, 1, 1, 1], [0], [0]>} : vector<2x8x8xf32>, vector<2x8x8xf32>, vector<2x8x8xf32> -> vector<2x8x8xf32>
    "tpu.trace_stop"() : () -> ()
    %cst_42 = arith.constant 0.353553385 : f32
    %89 = vector.broadcast %cst_42 : f32 to vector<2x8x8xf32>
    %90 = arith.mulf %88, %89 : vector<2x8x8xf32>
    %cst_43 = arith.constant dense<0.000000e+00> : vector<2x8xf32>
    %91 = vector.multi_reduction <add>, %85, %cst_43 [2] : vector<2x8x8xf32> to vector<2x8xf32>
    %cst_44 = arith.constant 0.000000e+00 : f32
    %92 = vector.broadcast %cst_44 : f32 to vector<2x8xf32>
    %93 = arith.cmpf oeq, %91, %92 : vector<2x8xf32>
    %94 = vector.shape_cast %93 : vector<2x8xi1> to vector<2x1x8xi1>
    %cst_45 = arith.constant -4.2949673E+9 : f32
    %95 = vector.shape_cast %94 : vector<2x1x8xi1> to vector<2x1x8xi1>
    %96 = vector.broadcast %95 : vector<2x1x8xi1> to vector<2x8x8xi1>
    %97 = vector.broadcast %cst_45 : f32 to vector<2x8x8xf32>
    %98 = arith.select %96, %97, %90 : vector<2x8x8xi1>, vector<2x8x8xf32>
    %cst_46 = arith.constant dense<0xFF800000> : vector<2x8xf32>
    %99 = vector.multi_reduction <maximumf>, %98, %cst_46 [2] : vector<2x8x8xf32> to vector<2x8xf32>
    %100 = vector.shape_cast %99 : vector<2x8xf32> to vector<2x8x1xf32>
    %101 = vector.broadcast %100 : vector<2x8x1xf32> to vector<2x8x8xf32>
    %102 = arith.subf %98, %101 : vector<2x8x8xf32>
    %103 = math.exp %102 : vector<2x8x8xf32>
    %cst_47 = arith.constant dense<0.000000e+00> : vector<2x8xf32>
    %104 = vector.multi_reduction <add>, %103, %cst_47 [2] : vector<2x8x8xf32> to vector<2x8xf32>
    %105 = vector.shape_cast %104 : vector<2x8xf32> to vector<2x8x1xf32>
    %106 = vector.broadcast %105 : vector<2x8x1xf32> to vector<2x8x8xf32>
    %107 = arith.divf %103, %106 : vector<2x8x8xf32>
    "tpu.trace_start"() <{level = 10 : i32, message = "bqk,bkd->bqd"}> : () -> ()
    %cst_48 = arith.constant dense<0.000000e+00> : vector<2x8x8xf32>
    %108 = tpu.matmul %107, %87, %cst_48 {dimension_numbers = #tpu.dot_dimension_numbers<[2], [1], [1], [2], [0, 0, 0, 1, 1, 2], [0], [0]>} : vector<2x8x8xf32>, vector<2x8x8xf32>, vector<2x8x8xf32> -> vector<2x8x8xf32>
    "tpu.trace_stop"() : () -> ()
    %109 = vector.shape_cast %108 : vector<2x8x8xf32> to vector<16x8xf32>
    %c0_49 = arith.constant 0 : index
    %c16 = arith.constant 16 : index
    %110 = vector.load %arg13[%c0_49, %c16] : memref<16x32xf32, #tpu.memory_space<vmem>>, vector<16x8xf32>
    tpu.vector_store %arg13[%c0_49, %c16], %109 {strides = array<i32>} : memref<16x32xf32, #tpu.memory_space<vmem>>, vector<16x8xf32>,
    %111 = vector.extract_strided_slice %7 {offsets = [0, 24], sizes = [16, 8], strides = [1, 1]} : vector<16x32xf32> to vector<16x8xf32>
    %112 = vector.shape_cast %111 : vector<16x8xf32> to vector<2x8x8xf32>
    %113 = vector.extract_strided_slice %15 {offsets = [0, 24], sizes = [16, 8], strides = [1, 1]} : vector<16x32xf32> to vector<16x8xf32>
    %114 = vector.shape_cast %113 : vector<16x8xf32> to vector<2x8x8xf32>
    %115 = vector.extract_strided_slice %23 {offsets = [0, 24], sizes = [16, 8], strides = [1, 1]} : vector<16x32xf32> to vector<16x8xf32>
    %116 = vector.shape_cast %115 : vector<16x8xf32> to vector<2x8x8xf32>
    "tpu.trace_start"() <{level = 10 : i32, message = "bqd,bkd->bqk"}> : () -> ()
    %cst_50 = arith.constant dense<0.000000e+00> : vector<2x8x8xf32>
    %117 = tpu.matmul %112, %114, %cst_50 {dimension_numbers = #tpu.dot_dimension_numbers<[2], [2], [1], [1], [0, 0, 0, 1, 1, 1], [0], [0]>} : vector<2x8x8xf32>, vector<2x8x8xf32>, vector<2x8x8xf32> -> vector<2x8x8xf32>
    "tpu.trace_stop"() : () -> ()
    %cst_51 = arith.constant 0.353553385 : f32
    %118 = vector.broadcast %cst_51 : f32 to vector<2x8x8xf32>
    %119 = arith.mulf %117, %118 : vector<2x8x8xf32>
    %cst_52 = arith.constant dense<0.000000e+00> : vector<2x8xf32>
    %120 = vector.multi_reduction <add>, %114, %cst_52 [2] : vector<2x8x8xf32> to vector<2x8xf32>
    %cst_53 = arith.constant 0.000000e+00 : f32
    %121 = vector.broadcast %cst_53 : f32 to vector<2x8xf32>
    %122 = arith.cmpf oeq, %120, %121 : vector<2x8xf32>
    %123 = vector.shape_cast %122 : vector<2x8xi1> to vector<2x1x8xi1>
    %cst_54 = arith.constant -4.2949673E+9 : f32
    %124 = vector.shape_cast %123 : vector<2x1x8xi1> to vector<2x1x8xi1>
    %125 = vector.broadcast %124 : vector<2x1x8xi1> to vector<2x8x8xi1>
    %126 = vector.broadcast %cst_54 : f32 to vector<2x8x8xf32>
    %127 = arith.select %125, %126, %119 : vector<2x8x8xi1>, vector<2x8x8xf32>
    %cst_55 = arith.constant dense<0xFF800000> : vector<2x8xf32>
    %128 = vector.multi_reduction <maximumf>, %127, %cst_55 [2] : vector<2x8x8xf32> to vector<2x8xf32>
    %129 = vector.shape_cast %128 : vector<2x8xf32> to vector<2x8x1xf32>
    %130 = vector.broadcast %129 : vector<2x8x1xf32> to vector<2x8x8xf32>
    %131 = arith.subf %127, %130 : vector<2x8x8xf32>
    %132 = math.exp %131 : vector<2x8x8xf32>
    %cst_56 = arith.constant dense<0.000000e+00> : vector<2x8xf32>
    %133 = vector.multi_reduction <add>, %132, %cst_56 [2] : vector<2x8x8xf32> to vector<2x8xf32>
    %134 = vector.shape_cast %133 : vector<2x8xf32> to vector<2x8x1xf32>
    %135 = vector.broadcast %134 : vector<2x8x1xf32> to vector<2x8x8xf32>
    %136 = arith.divf %132, %135 : vector<2x8x8xf32>
    "tpu.trace_start"() <{level = 10 : i32, message = "bqk,bkd->bqd"}> : () -> ()
    %cst_57 = arith.constant dense<0.000000e+00> : vector<2x8x8xf32>
    %137 = tpu.matmul %136, %116, %cst_57 {dimension_numbers = #tpu.dot_dimension_numbers<[2], [1], [1], [2], [0, 0, 0, 1, 1, 2], [0], [0]>} : vector<2x8x8xf32>, vector<2x8x8xf32>, vector<2x8x8xf32> -> vector<2x8x8xf32>
    "tpu.trace_stop"() : () -> ()
    %138 = vector.shape_cast %137 : vector<2x8x8xf32> to vector<16x8xf32>
    %c0_58 = arith.constant 0 : index
    %c24 = arith.constant 24 : index
    %139 = vector.load %arg13[%c0_58, %c24] : memref<16x32xf32, #tpu.memory_space<vmem>>, vector<16x8xf32>
    tpu.vector_store %arg13[%c0_58, %c24], %138 {strides = array<i32>} : memref<16x32xf32, #tpu.memory_space<vmem>>, vector<16x8xf32>,
    %c0_59 = arith.constant 0 : index
    %c0_60 = arith.constant 0 : index
    %140 = vector.load %arg13[%c0_59, %c0_60] : memref<16x32xf32, #tpu.memory_space<vmem>>, vector<16x32xf32>
    %c0_61 = arith.constant 0 : index
    %c0_62 = arith.constant 0 : index
    %141 = vector.load %arg10[%c0_61, %c0_62] : memref<32x128xf32, #tpu.memory_space<vmem>>, vector<32x128xf32>
    %cst_63 = arith.constant dense<0.000000e+00> : vector<16x128xf32>
    %142 = tpu.matmul %140, %141, %cst_63 {dimension_numbers = #tpu.dot_dimension_numbers<[1], [0], [0], [1], [0, 0, 1, 1], [], []>} : vector<16x32xf32>, vector<32x128xf32>, vector<16x128xf32> -> vector<16x128xf32>
    %c0_64 = arith.constant 0 : index
    %c0_65 = arith.constant 0 : index
    %143 = vector.load %arg11[%c0_64, %c0_65] : memref<1x128xf32, #tpu.memory_space<vmem>>, vector<1x128xf32>
    %144 = vector.broadcast %143 : vector<1x128xf32> to vector<16x128xf32>
    %145 = arith.addf %142, %144 : vector<16x128xf32>
    %c0_66 = arith.constant 0 : index
    %c0_67 = arith.constant 0 : index
    %146 = vector.load %arg12[%c0_66, %c0_67] : memref<16x128xf32, #tpu.memory_space<vmem>>, vector<16x128xf32>
    tpu.vector_store %arg12[%c0_66, %c0_67], %145 {strides = array<i32>} : memref<16x128xf32, #tpu.memory_space<vmem>>, vector<16x128xf32>,
    return
  }
  func.func @transform_0(%arg0: i32) -> (i32, i32) {
    %c0_i32 = arith.constant 0 : i32
    %c0_i32_0 = arith.constant 0 : i32
    return %arg0, %c0_i32 : i32, i32
  }
  func.func @transform_1(%arg0: i32) -> (i32, i32) {
    %c0_i32 = arith.constant 0 : i32
    %c0_i32_0 = arith.constant 0 : i32
    return %arg0, %c0_i32 : i32, i32
  }
  func.func @transform_2(%arg0: i32) -> (i32, i32) {
    %c0_i32 = arith.constant 0 : i32
    %c0_i32_0 = arith.constant 0 : i32
    return %arg0, %c0_i32 : i32, i32
  }
  func.func @transform_3(%arg0: i32) -> (i32, i32) {
    %c0_i32 = arith.constant 0 : i32
    %c0_i32_0 = arith.constant 0 : i32
    %c0_i32_1 = arith.constant 0 : i32
    return %c0_i32, %c0_i32_0 : i32, i32
  }
  func.func @transform_4(%arg0: i32) -> (i32, i32) {
    %c0_i32 = arith.constant 0 : i32
    %c0_i32_0 = arith.constant 0 : i32
    %c0_i32_1 = arith.constant 0 : i32
    return %c0_i32, %c0_i32_0 : i32, i32
  }
  func.func @transform_5(%arg0: i32) -> (i32, i32) {
    %c0_i32 = arith.constant 0 : i32
    %c0_i32_0 = arith.constant 0 : i32
    %c0_i32_1 = arith.constant 0 : i32
    return %c0_i32, %c0_i32_0 : i32, i32
  }
  func.func @transform_6(%arg0: i32) -> (i32, i32) {
    %c0_i32 = arith.constant 0 : i32
    %c0_i32_0 = arith.constant 0 : i32
    %c0_i32_1 = arith.constant 0 : i32
    return %c0_i32, %c0_i32_0 : i32, i32
  }
  func.func @transform_7(%arg0: i32) -> (i32, i32) {
    %c0_i32 = arith.constant 0 : i32
    %c0_i32_0 = arith.constant 0 : i32
    %c0_i32_1 = arith.constant 0 : i32
    return %c0_i32, %c0_i32_0 : i32, i32
  }
  func.func @transform_8(%arg0: i32) -> (i32, i32) {
    %c0_i32 = arith.constant 0 : i32
    %c0_i32_0 = arith.constant 0 : i32
    %c0_i32_1 = arith.constant 0 : i32
    return %c0_i32, %c0_i32_0 : i32, i32
  }
  func.func @transform_9(%arg0: i32) -> (i32, i32) {
    %c0_i32 = arith.constant 0 : i32
    %c0_i32_0 = arith.constant 0 : i32
    %c0_i32_1 = arith.constant 0 : i32
    return %c0_i32, %c0_i32_0 : i32, i32
  }
  func.func @transform_10(%arg0: i32) -> (i32, i32) {
    %c0_i32 = arith.constant 0 : i32
    %c0_i32_0 = arith.constant 0 : i32
    %c0_i32_1 = arith.constant 0 : i32
    return %c0_i32, %c0_i32_0 : i32, i32
  }
  func.func @transform_11(%arg0: i32) -> (i32, i32) {
    %c0_i32 = arith.constant 0 : i32
    %c0_i32_0 = arith.constant 0 : i32
    return %arg0, %c0_i32 : i32, i32
  }
}

</mosaic_0001>

<llo_original>
// kernel: tpu_custom_call.1
$region0: #{tpu_custom_call.1}
  #allocation0 [shape = 'u32[]', space=smem, size = 0x4, offset = 0x4, fixed_abs, tag = 'smem constant byte address 0x4 - core index']
  #allocation1 [shape = 'u32[144,128]{1,0:T(1,128)}', space=vmem, size = 0x12000, scoped, tag = 'internal scratch']
  #allocation2 [shape = 'f32[16,32]{1,0:T(8,128)}', space=vmem, size = 0x2000, scoped, tag = 'scratch operand']
  %s0 = inlined_call_operand.hbm [shape: f32[16,16], index: 0, kind: input, shape index: {}]
  %s1 = inlined_call_operand.hbm [shape: f32[16,16], index: 1, kind: input, shape index: {}]
  %s2 = inlined_call_operand.hbm [shape: f32[16,16], index: 2, kind: input, shape index: {}]
  %s3 = inlined_call_operand.hbm [shape: f32[16,32], index: 3, kind: input, shape index: {}]
  %s4 = inlined_call_operand.vmem [shape: f32[1,32], index: 4, kind: input, shape index: {}]
  %s5 = inlined_call_operand.hbm [shape: f32[16,32], index: 5, kind: input, shape index: {}]
  %s6 = inlined_call_operand.vmem [shape: f32[1,32], index: 6, kind: input, shape index: {}]
  %s7 = inlined_call_operand.hbm [shape: f32[16,32], index: 7, kind: input, shape index: {}]
  %s8 = inlined_call_operand.hbm [shape: f32[1,32], index: 8, kind: input, shape index: {}]
  %s9 = inlined_call_operand.vmem [shape: f32[32,128], index: 9, kind: input, shape index: {}]
  %s10 = inlined_call_operand.vmem [shape: f32[1,128], index: 10, kind: input, shape index: {}]
  %s11 = inlined_call_operand.hbm [shape: f32[16,128], index: 11, kind: output, shape index: {}]
  %s12 = sld [smem:[#allocation0]]
  $region82: #{tpu_custom_call.1} parent=0
    _
  %s14 = ssub.s32 1, %s12
  %s15 = scalar_select 0, %s14, %s12
  $region1: #{tpu_custom_call.1} parent=0
    #allocation3 [shape = 'u8[8192]{0}', space=vmem, size = 0x2000, scoped, tag = 'input window, operand 0, single buffered']
    #allocation4 [shape = 's32[1]{0}', space=sflag, size = 0x4, scoped, tag = 'scoped memory for tpu_custom_call.1']
    #allocation5 [shape = 's32[1]{0}', space=sflag, size = 0x4, scoped, tag = 'scoped memory for tpu_custom_call.1']
    #allocation6 [shape = 'u8[8192]{0}', space=vmem, size = 0x2000, scoped, tag = 'input window, operand 1, single buffered']
    #allocation7 [shape = 's32[1]{0}', space=sflag, size = 0x4, scoped, tag = 'scoped memory for tpu_custom_call.1']
    #allocation8 [shape = 'u8[8192]{0}', space=vmem, size = 0x2000, scoped, tag = 'input window, operand 2, single buffered']
    #allocation9 [shape = 'u8[8192]{0}', space=vmem, size = 0x2000, scoped, tag = 'input window, operand 3, single buffered']
    #allocation10 [shape = 's32[1]{0}', space=sflag, size = 0x4, scoped, tag = 'scoped memory for tpu_custom_call.1']
    #allocation11 [shape = 'u8[8192]{0}', space=vmem, size = 0x2000, scoped, tag = 'input window, operand 5, single buffered']
    #allocation12 [shape = 'u8[8192]{0}', space=vmem, size = 0x2000, scoped, tag = 'input window, operand 7, single buffered']
    #allocation13 [shape = 's32[1]{0}', space=sflag, size = 0x4, scoped, tag = 'scoped memory for tpu_custom_call.1']
    #allocation14 [shape = 'u8[512]{0}', space=vmem, size = 0x400, scoped, tag = 'input window, operand 8, single buffered']
    #allocation15 [shape = 'u8[8192]{0}', space=vmem, size = 0x2000, scoped, tag = 'output window, operand 0, single buffered']
    %16 = vsyncpa [#allocation4], 0
    %17 = vsyncpa [#allocation7], 0
    %18 = vsyncpa [#allocation10], 0
    %19 = vsyncpa [#allocation13], 0
    %20 = vsyncpa [#allocation5], 0
    // Predicated region
    $region2: #{tpu_custom_call.1} parent=1 // pred_check
      _
    $region3: #{tpu_custom_call.1} parent=1 // pred_check_branch
      %22 = sbr.rel (0) target = $region5
    $region4: #{tpu_custom_call.1} parent=1 // pred_region
      %s24 = ssub.s32 256, 256
      %25 = vsyncadd [#allocation4], %s24
      %s26 = sshll.u32 [#allocation3], 4
      %s27 = int_to_ptr.vmem [resolvable:$true] %s26
      %32 = dma.hbm_to_vmem [thread:$0]  %s0, 256, %s27, [#allocation4], 128, 128, 8
    $region5: #{tpu_custom_call.1} parent=1 // pred_fallthru
      _
    // Predicated region
    $region6: #{tpu_custom_call.1} parent=1 // pred_check
      _
    $region7: #{tpu_custom_call.1} parent=1 // pred_check_branch
      %34 = sbr.rel (0) target = $region9
    $region8: #{tpu_custom_call.1} parent=1 // pred_region
      %s36 = ssub.s32 256, 256
      %37 = vsyncadd [#allocation7], %s36
      %s38 = sshll.u32 [#allocation6], 4
      %s39 = int_to_ptr.vmem [resolvable:$true] %s38
      %44 = dma.hbm_to_vmem [thread:$0]  %s1, 256, %s39, [#allocation7], 128, 128, 8
    $region9: #{tpu_custom_call.1} parent=1 // pred_fallthru
      _
    // Predicated region
    $region10: #{tpu_custom_call.1} parent=1 // pred_check
      _
    $region11: #{tpu_custom_call.1} parent=1 // pred_check_branch
      %46 = sbr.rel (0) target = $region13
    $region12: #{tpu_custom_call.1} parent=1 // pred_region
      %s48 = ssub.s32 256, 256
      %49 = vsyncadd [#allocation7], %s48
      %s50 = sshll.u32 [#allocation8], 4
      %s51 = int_to_ptr.vmem [resolvable:$true] %s50
      %56 = dma.hbm_to_vmem [thread:$0]  %s2, 256, %s51, [#allocation7], 128, 128, 8
    $region13: #{tpu_custom_call.1} parent=1 // pred_fallthru
      _
    // Predicated region
    $region14: #{tpu_custom_call.1} parent=1 // pred_check
      _
    $region15: #{tpu_custom_call.1} parent=1 // pred_check_branch
      %58 = sbr.rel (0) target = $region17
    $region16: #{tpu_custom_call.1} parent=1 // pred_region
      %s60 = ssub.s32 256, 256
      %61 = vsyncadd [#allocation10], %s60
      %s62 = sshll.u32 [#allocation9], 4
      %s63 = int_to_ptr.vmem [resolvable:$true] %s62
      %68 = dma.hbm_to_vmem [thread:$0]  %s3, 256, %s63, [#allocation10], 128, 128, 8
    $region17: #{tpu_custom_call.1} parent=1 // pred_fallthru
      _
    // Predicated region
    $region18: #{tpu_custom_call.1} parent=1 // pred_check
      _
    $region19: #{tpu_custom_call.1} parent=1 // pred_check_branch
      %70 = sbr.rel (0) target = $region21
    $region20: #{tpu_custom_call.1} parent=1 // pred_region
      _
    $region21: #{tpu_custom_call.1} parent=1 // pred_fallthru
      _
    // Predicated region
    $region22: #{tpu_custom_call.1} parent=1 // pred_check
      _
    $region23: #{tpu_custom_call.1} parent=1 // pred_check_branch
      %72 = sbr.rel (0) target = $region25
    $region24: #{tpu_custom_call.1} parent=1 // pred_region
      %s74 = ssub.s32 256, 256
      %75 = vsyncadd [#allocation10], %s74
      %s76 = sshll.u32 [#allocation11], 4
      %s77 = int_to_ptr.vmem [resolvable:$true] %s76
      %82 = dma.hbm_to_vmem [thread:$0]  %s5, 256, %s77, [#allocation10], 128, 128, 8
    $region25: #{tpu_custom_call.1} parent=1 // pred_fallthru
      _
    // Predicated region
    $region26: #{tpu_custom_call.1} parent=1 // pred_check
      _
    $region27: #{tpu_custom_call.1} parent=1 // pred_check_branch
      %84 = sbr.rel (0) target = $region29
    $region28: #{tpu_custom_call.1} parent=1 // pred_region
      _
    $region29: #{tpu_custom_call.1} parent=1 // pred_fallthru
      _
    // Predicated region
    $region30: #{tpu_custom_call.1} parent=1 // pred_check
      _
    $region31: #{tpu_custom_call.1} parent=1 // pred_check_branch
      %86 = sbr.rel (0) target = $region33
    $region32: #{tpu_custom_call.1} parent=1 // pred_region
      %s88 = ssub.s32 256, 256
      %89 = vsyncadd [#allocation13], %s88
      %s90 = sshll.u32 [#allocation12], 4
      %s91 = int_to_ptr.vmem [resolvable:$true] %s90
      %96 = dma.hbm_to_vmem [thread:$0]  %s7, 256, %s91, [#allocation13], 128, 128, 8
    $region33: #{tpu_custom_call.1} parent=1 // pred_fallthru
      _
    // Predicated region
    $region34: #{tpu_custom_call.1} parent=1 // pred_check
      _
    $region35: #{tpu_custom_call.1} parent=1 // pred_check_branch
      %98 = sbr.rel (0) target = $region37
    $region36: #{tpu_custom_call.1} parent=1 // pred_region
      %s100 = ssub.s32 16, 16
      %101 = vsyncadd [#allocation13], %s100
      %s103 = sshll.u32 [#allocation14], 4
      %s104 = int_to_ptr.vmem [resolvable:$true] %s103
      %106 = dma.hbm_to_vmem [thread:$0]  %s8, 16, %s104, [#allocation13]
    $region37: #{tpu_custom_call.1} parent=1 // pred_fallthru
      _
    // Predicated region
    $region38: #{tpu_custom_call.1} parent=1 // pred_check
      _
    $region39: #{tpu_custom_call.1} parent=1 // pred_check_branch
      %108 = sbr.rel (0) target = $region41
    $region40: #{tpu_custom_call.1} parent=1 // pred_region
      _
    $region41: #{tpu_custom_call.1} parent=1 // pred_fallthru
      _
    // Predicated region
    $region42: #{tpu_custom_call.1} parent=1 // pred_check
      _
    $region43: #{tpu_custom_call.1} parent=1 // pred_check_branch
      %110 = sbr.rel (0) target = $region45
    $region44: #{tpu_custom_call.1} parent=1 // pred_region
      _
    $region45: #{tpu_custom_call.1} parent=1 // pred_fallthru
      _
    // Predicated region
    $region46: #{tpu_custom_call.1} parent=1 // pred_check
      _
    $region47: #{tpu_custom_call.1} parent=1 // pred_check_branch
      %112 = sbr.rel (0) target = $region49
    $region48: #{tpu_custom_call.1} parent=1 // pred_region
      %113 = dma.done [#allocation4], 256
    $region49: #{tpu_custom_call.1} parent=1 // pred_fallthru
      _
    // Predicated region
    $region50: #{tpu_custom_call.1} parent=1 // pred_check
      _
    $region51: #{tpu_custom_call.1} parent=1 // pred_check_branch
      %115 = sbr.rel (0) target = $region53
    $region52: #{tpu_custom_call.1} parent=1 // pred_region
      %116 = dma.done [#allocation7], 256
    $region53: #{tpu_custom_call.1} parent=1 // pred_fallthru
      _
    // Predicated region
    $region54: #{tpu_custom_call.1} parent=1 // pred_check
      _
    $region55: #{tpu_custom_call.1} parent=1 // pred_check_branch
      %118 = sbr.rel (0) target = $region57
    $region56: #{tpu_custom_call.1} parent=1 // pred_region
      %119 = dma.done [#allocation7], 256
    $region57: #{tpu_custom_call.1} parent=1 // pred_fallthru
      _
    // Predicated region
    $region58: #{tpu_custom_call.1} parent=1 // pred_check
      _
    $region59: #{tpu_custom_call.1} parent=1 // pred_check_branch
      %121 = sbr.rel (0) target = $region61
    $region60: #{tpu_custom_call.1} parent=1 // pred_region
      %122 = dma.done [#allocation10], 256
    $region61: #{tpu_custom_call.1} parent=1 // pred_fallthru
      _
    // Predicated region
    $region62: #{tpu_custom_call.1} parent=1 // pred_check
      _
    $region63: #{tpu_custom_call.1} parent=1 // pred_check_branch
      %124 = sbr.rel (0) target = $region65
    $region64: #{tpu_custom_call.1} parent=1 // pred_region
      %125 = dma.done [#allocation10], 256
    $region65: #{tpu_custom_call.1} parent=1 // pred_fallthru
      _
    // Predicated region
    $region66: #{tpu_custom_call.1} parent=1 // pred_check
      _
    $region67: #{tpu_custom_call.1} parent=1 // pred_check_branch
      %127 = sbr.rel (0) target = $region69
    $region68: #{tpu_custom_call.1} parent=1 // pred_region
      %128 = dma.done [#allocation13], 256
    $region69: #{tpu_custom_call.1} parent=1 // pred_fallthru
      _
    // Predicated region
    $region70: #{tpu_custom_call.1} parent=1 // pred_check
      _
    $region71: #{tpu_custom_call.1} parent=1 // pred_check_branch
      %130 = sbr.rel (0) target = $region73
    $region72: #{tpu_custom_call.1} parent=1 // pred_region
      %131 = dma.done [#allocation13], 16
    $region73: #{tpu_custom_call.1} parent=1 // pred_fallthru
      _
    %v132 = vld [vmem:[#allocation3] sm:$0xff]
    %v133 = vld [vmem:[#allocation3 + $0x8] sm:$0xff]
    %v134 = vld [vmem:[#allocation9] sm:$0xff]
    %v135 = vld [vmem:[#allocation9 + $0x8] sm:$0xff]
    %v136 = vld [vmem:[%s4] sm:$0x1]
    %v138 = vlaneseq
    %v139 = vshrl.u32 %v138, 7
    %v140 = vsub.s32 0, %v139
    %v141 = vrot.slane %v136, %v140
    %vm143 = vcmask 130048
    %v145 = vsel %vm143, %v132, 0
    %v148 = vsel %vm143, %v133, 0
    %150 = vmatprep.subr.mxu0 0.0
    %151 = vmatpush1.msra.mxu0 %v134
    %152 = vmatprep.subr.mxu0 0.0
    %153 = vmatpush1.msra.mxu0 %v135
    %154 = vmatprep.subr.mxu0 0.0
    %155 = vmatpush1.msra.mxu0 0.0
    %156 = vmatprep.subr.mxu0 0.0
    %157 = vmatpush1.msra.mxu0 0.0
    %158 = vmatprep.subr.mxu0 0.0
    %159 = vmatpush1.msra.mxu0 0.0
    %160 = vmatprep.subr.mxu0 0.0
    %161 = vmatpush1.msra.mxu0 0.0
    %162 = vmatprep.subr.mxu0 0.0
    %163 = vmatpush1.msra.mxu0 0.0
    %164 = vmatprep.subr.mxu0 0.0
    %165 = vmatpush1.msra.mxu0 0.0
    %166 = vmatprep.subr.mxu0 0.0
    %167 = vmatpush1.msra.mxu0 0.0
    %168 = vmatprep.subr.mxu0 0.0
    %169 = vmatpush1.msra.mxu0 0.0
    %170 = vmatprep.subr.mxu0 0.0
    %171 = vmatpush1.msra.mxu0 0.0
    %172 = vmatprep.subr.mxu0 0.0
    %173 = vmatpush1.msra.mxu0 0.0
    %174 = vmatprep.subr.mxu0 0.0
    %175 = vmatpush1.msra.mxu0 0.0
    %176 = vmatprep.subr.mxu0 0.0
    %177 = vmatpush1.msra.mxu0 0.0
    %178 = vmatprep.subr.mxu0 0.0
    %179 = vmatpush1.msra.mxu0 0.0
    %180 = vmatprep.subr.mxu0 0.0
    %181 = vmatpush1.msra.mxu0 0.0
    %182 = vmatprep.subr.mxu0 0.0
    %183 = vmatpush1.msra.mxu0 0.0
    %184 = vmatprep.subr.mxu0 0.0
    %185 = vmatpush1.msra.mxu0 0.0
    %186 = vmatprep.subr.mxu0 0.0
    %187 = vmatpush1.msra.mxu0 0.0
    %188 = vmatprep.subr.mxu0 0.0
    %189 = vmatpush1.msra.mxu0 0.0
    %190 = vmatprep.subr.mxu0 0.0
    %191 = vmatpush1.msra.mxu0 0.0
    %192 = vmatprep.subr.mxu0 0.0
    %193 = vmatpush1.msra.mxu0 0.0
    %194 = vmatprep.subr.mxu0 0.0
    %195 = vmatpush1.msra.mxu0 0.0
    %196 = vmatprep.subr.mxu0 0.0
    %197 = vmatpush1.msra.mxu0 0.0
    %198 = vmatprep.subr.mxu0 0.0
    %199 = vmatpush1.msra.mxu0 0.0
    %200 = vmatprep.subr.mxu0 0.0
    %201 = vmatpush1.msra.mxu0 0.0
    %202 = vmatprep.subr.mxu0 0.0
    %203 = vmatpush1.msra.mxu0 0.0
    %204 = vmatprep.subr.mxu0 0.0
    %205 = vmatpush1.msra.mxu0 0.0
    %206 = vmatprep.subr.mxu0 0.0
    %207 = vmatpush1.msra.mxu0 0.0
    %208 = vmatprep.subr.mxu0 0.0
    %209 = vmatpush1.msra.mxu0 0.0
    %210 = vmatprep.subr.mxu0 0.0
    %211 = vmatpush1.msra.mxu0 0.0
    %212 = vmatprep.subr.mxu0 0.0
    %213 = vmatpush1.msra.mxu0 0.0
    %214 = vmatprep.mubr.f32.mxu0 0.0
    %215 = vmatmul.mubr.f32.gmra.mrb[0].mxu0 %v145
    %v216 = vpop.f32.mrb[0].mxu0
    %v217 = vadd.f32 %v141, %v216
    %v218 = vpop.f32.mrb[0].mxu0
    %219 = vmatprep.mubr.f32.mxu0 0.0
    %220 = vmatmul.mubr.f32.gmra.mrb[0].mxu0 %v148
    %v221 = vpop.f32.mrb[0].mxu0
    %v222 = vadd.f32 %v141, %v221
    %v223 = vpop.f32.mrb[0].mxu0
    %224 = vdwg.mxu0
    %v225 = vmax.f32 %v217, 0.0
    %v226 = vmax.f32 %v222, 0.0
    %v227 = vld [vmem:[#allocation6] sm:$0xff]
    %v228 = vld [vmem:[#allocation6 + $0x8] sm:$0xff]
    %v229 = vld [vmem:[#allocation11] sm:$0xff]
    %v230 = vld [vmem:[#allocation11 + $0x8] sm:$0xff]
    %v231 = vld [vmem:[%s6] sm:$0x1]
    %v233 = vlaneseq
    %v234 = vshrl.u32 %v233, 7
    %v235 = vsub.s32 0, %v234
    %v236 = vrot.slane %v231, %v235
    %v239 = vsel %vm143, %v227, 0
    %v242 = vsel %vm143, %v228, 0
    %244 = vmatprep.subr.mxu0 0.0
    %245 = vmatpush1.msra.mxu0 %v229
    %246 = vmatprep.subr.mxu0 0.0
    %247 = vmatpush1.msra.mxu0 %v230
    %248 = vmatprep.subr.mxu0 0.0
    %249 = vmatpush1.msra.mxu0 0.0
    %250 = vmatprep.subr.mxu0 0.0
    %251 = vmatpush1.msra.mxu0 0.0
    %252 = vmatprep.subr.mxu0 0.0
    %253 = vmatpush1.msra.mxu0 0.0
    %254 = vmatprep.subr.mxu0 0.0
    %255 = vmatpush1.msra.mxu0 0.0
    %256 = vmatprep.subr.mxu0 0.0
    %257 = vmatpush1.msra.mxu0 0.0
    %258 = vmatprep.subr.mxu0 0.0
    %259 = vmatpush1.msra.mxu0 0.0
    %260 = vmatprep.subr.mxu0 0.0
    %261 = vmatpush1.msra.mxu0 0.0
    %262 = vmatprep.subr.mxu0 0.0
    %263 = vmatpush1.msra.mxu0 0.0
    %264 = vmatprep.subr.mxu0 0.0
    %265 = vmatpush1.msra.mxu0 0.0
    %266 = vmatprep.subr.mxu0 0.0
    %267 = vmatpush1.msra.mxu0 0.0
    %268 = vmatprep.subr.mxu0 0.0
    %269 = vmatpush1.msra.mxu0 0.0
    %270 = vmatprep.subr.mxu0 0.0
    %271 = vmatpush1.msra.mxu0 0.0
    %272 = vmatprep.subr.mxu0 0.0
    %273 = vmatpush1.msra.mxu0 0.0
    %274 = vmatprep.subr.mxu0 0.0
    %275 = vmatpush1.msra.mxu0 0.0
    %276 = vmatprep.subr.mxu0 0.0
    %277 = vmatpush1.msra.mxu0 0.0
    %278 = vmatprep.subr.mxu0 0.0
    %279 = vmatpush1.msra.mxu0 0.0
    %280 = vmatprep.subr.mxu0 0.0
    %281 = vmatpush1.msra.mxu0 0.0
    %282 = vmatprep.subr.mxu0 0.0
    %283 = vmatpush1.msra.mxu0 0.0
    %284 = vmatprep.subr.mxu0 0.0
    %285 = vmatpush1.msra.mxu0 0.0
    %286 = vmatprep.subr.mxu0 0.0
    %287 = vmatpush1.msra.mxu0 0.0
    %288 = vmatprep.subr.mxu0 0.0
    %289 = vmatpush1.msra.mxu0 0.0
    %290 = vmatprep.subr.mxu0 0.0
    %291 = vmatpush1.msra.mxu0 0.0
    %292 = vmatprep.subr.mxu0 0.0
    %293 = vmatpush1.msra.mxu0 0.0
    %294 = vmatprep.subr.mxu0 0.0
    %295 = vmatpush1.msra.mxu0 0.0
    %296 = vmatprep.subr.mxu0 0.0
    %297 = vmatpush1.msra.mxu0 0.0
    %298 = vmatprep.subr.mxu0 0.0
    %299 = vmatpush1.msra.mxu0 0.0
    %300 = vmatprep.subr.mxu0 0.0
    %301 = vmatpush1.msra.mxu0 0.0
    %302 = vmatprep.subr.mxu0 0.0
    %303 = vmatpush1.msra.mxu0 0.0
    %304 = vmatprep.subr.mxu0 0.0
    %305 = vmatpush1.msra.mxu0 0.0
    %306 = vmatprep.subr.mxu0 0.0
    %307 = vmatpush1.msra.mxu0 0.0
    %308 = vmatprep.mubr.f32.mxu0 0.0
    %309 = vmatmul.mubr.f32.gmra.mrb[0].mxu0 %v239
    %v310 = vpop.f32.mrb[0].mxu0
    %v311 = vadd.f32 %v236, %v310
    %v312 = vpop.f32.mrb[0].mxu0
    %313 = vmatprep.mubr.f32.mxu0 0.0
    %314 = vmatmul.mubr.f32.gmra.mrb[0].mxu0 %v242
    %v315 = vpop.f32.mrb[0].mxu0
    %v316 = vadd.f32 %v236, %v315
    %v317 = vpop.f32.mrb[0].mxu0
    %318 = vdwg.mxu0
    %v319 = vmax.f32 %v311, 0.0
    %v320 = vmax.f32 %v316, 0.0
    %v321 = vld [vmem:[#allocation8] sm:$0xff]
    %v322 = vld [vmem:[#allocation8 + $0x8] sm:$0xff]
    %v323 = vld [vmem:[#allocation12] sm:$0xff]
    %v324 = vld [vmem:[#allocation12 + $0x8] sm:$0xff]
    %v325 = vld [vmem:[#allocation14] sm:$0x1]
    %v327 = vlaneseq
    %v328 = vshrl.u32 %v327, 7
    %v329 = vsub.s32 0, %v328
    %v330 = vrot.slane %v325, %v329
    %v333 = vsel %vm143, %v321, 0
    %v336 = vsel %vm143, %v322, 0
    %338 = vmatprep.subr.mxu0 0.0
    %339 = vmatpush1.msra.mxu0 %v323
    %340 = vmatprep.subr.mxu0 0.0
    %341 = vmatpush1.msra.mxu0 %v324
    %342 = vmatprep.subr.mxu0 0.0
    %343 = vmatpush1.msra.mxu0 0.0
    %344 = vmatprep.subr.mxu0 0.0
    %345 = vmatpush1.msra.mxu0 0.0
    %346 = vmatprep.subr.mxu0 0.0
    %347 = vmatpush1.msra.mxu0 0.0
    %348 = vmatprep.subr.mxu0 0.0
    %349 = vmatpush1.msra.mxu0 0.0
    %350 = vmatprep.subr.mxu0 0.0
    %351 = vmatpush1.msra.mxu0 0.0
    %352 = vmatprep.subr.mxu0 0.0
    %353 = vmatpush1.msra.mxu0 0.0
    %354 = vmatprep.subr.mxu0 0.0
    %355 = vmatpush1.msra.mxu0 0.0
    %356 = vmatprep.subr.mxu0 0.0
    %357 = vmatpush1.msra.mxu0 0.0
    %358 = vmatprep.subr.mxu0 0.0
    %359 = vmatpush1.msra.mxu0 0.0
    %360 = vmatprep.subr.mxu0 0.0
    %361 = vmatpush1.msra.mxu0 0.0
    %362 = vmatprep.subr.mxu0 0.0
    %363 = vmatpush1.msra.mxu0 0.0
    %364 = vmatprep.subr.mxu0 0.0
    %365 = vmatpush1.msra.mxu0 0.0
    %366 = vmatprep.subr.mxu0 0.0
    %367 = vmatpush1.msra.mxu0 0.0
    %368 = vmatprep.subr.mxu0 0.0
    %369 = vmatpush1.msra.mxu0 0.0
    %370 = vmatprep.subr.mxu0 0.0
    %371 = vmatpush1.msra.mxu0 0.0
    %372 = vmatprep.subr.mxu0 0.0
    %373 = vmatpush1.msra.mxu0 0.0
    %374 = vmatprep.subr.mxu0 0.0
    %375 = vmatpush1.msra.mxu0 0.0
    %376 = vmatprep.subr.mxu0 0.0
    %377 = vmatpush1.msra.mxu0 0.0
    %378 = vmatprep.subr.mxu0 0.0
    %379 = vmatpush1.msra.mxu0 0.0
    %380 = vmatprep.subr.mxu0 0.0
    %381 = vmatpush1.msra.mxu0 0.0
    %382 = vmatprep.subr.mxu0 0.0
    %383 = vmatpush1.msra.mxu0 0.0
    %384 = vmatprep.subr.mxu0 0.0
    %385 = vmatpush1.msra.mxu0 0.0
    %386 = vmatprep.subr.mxu0 0.0
    %387 = vmatpush1.msra.mxu0 0.0
    %388 = vmatprep.subr.mxu0 0.0
    %389 = vmatpush1.msra.mxu0 0.0
    %390 = vmatprep.subr.mxu0 0.0
    %391 = vmatpush1.msra.mxu0 0.0
    %392 = vmatprep.subr.mxu0 0.0
    %393 = vmatpush1.msra.mxu0 0.0
    %394 = vmatprep.subr.mxu0 0.0
    %395 = vmatpush1.msra.mxu0 0.0
    %396 = vmatprep.subr.mxu0 0.0
    %397 = vmatpush1.msra.mxu0 0.0
    %398 = vmatprep.subr.mxu0 0.0
    %399 = vmatpush1.msra.mxu0 0.0
    %400 = vmatprep.subr.mxu0 0.0
    %401 = vmatpush1.msra.mxu0 0.0
    %402 = vmatprep.mubr.f32.mxu0 0.0
    %403 = vmatmul.mubr.f32.gmra.mrb[0].mxu0 %v333
    %v404 = vpop.f32.mrb[0].mxu0
    %v405 = vadd.f32 %v330, %v404
    %v406 = vpop.f32.mrb[0].mxu0
    %407 = vmatprep.mubr.f32.mxu0 0.0
    %408 = vmatmul.mubr.f32.gmra.mrb[0].mxu0 %v336
    %v409 = vpop.f32.mrb[0].mxu0
    %v410 = vadd.f32 %v330, %v409
    %v411 = vpop.f32.mrb[0].mxu0
    %412 = vdwg.mxu0
    %v413 = vmax.f32 %v405, 0.0
    %v414 = vmax.f32 %v410, 0.0
    %vm415 = vcmask 64512
    %v417 = vsel %vm415, %v225, 0
    %v420 = vsel %vm415, %v319, 0
    %422 = vmatprep.subr.mxu0 0.0
    %423 = vmatpush1.xpose.msra.mxu0 %v420
    %424 = vmatprep.subr.mxu0 0.0
    %425 = vmatpush1.xpose.msra.mxu0 0.0
    %426 = vmatprep.subr.mxu0 0.0
    %427 = vmatpush1.xpose.msra.mxu0 0.0
    %428 = vmatprep.subr.mxu0 0.0
    %429 = vmatpush1.xpose.msra.mxu0 0.0
    %430 = vmatprep.subr.mxu0 0.0
    %431 = vmatpush1.xpose.msra.mxu0 0.0
    %432 = vmatprep.subr.mxu0 0.0
    %433 = vmatpush1.xpose.msra.mxu0 0.0
    %434 = vmatprep.subr.mxu0 0.0
    %435 = vmatpush1.xpose.msra.mxu0 0.0
    %436 = vmatprep.subr.mxu0 0.0
    %437 = vmatpush1.xpose.msra.mxu0 0.0
    %438 = vmatprep.subr.mxu0 0.0
    %439 = vmatpush1.xpose.msra.mxu0 0.0
    %440 = vmatprep.subr.mxu0 0.0
    %441 = vmatpush1.xpose.msra.mxu0 0.0
    %442 = vmatprep.subr.mxu0 0.0
    %443 = vmatpush1.xpose.msra.mxu0 0.0
    %444 = vmatprep.subr.mxu0 0.0
    %445 = vmatpush1.xpose.msra.mxu0 0.0
    %446 = vmatprep.subr.mxu0 0.0
    %447 = vmatpush1.xpose.msra.mxu0 0.0
    %448 = vmatprep.subr.mxu0 0.0
    %449 = vmatpush1.xpose.msra.mxu0 0.0
    %450 = vmatprep.subr.mxu0 0.0
    %451 = vmatpush1.xpose.msra.mxu0 0.0
    %452 = vmatprep.subr.mxu0 0.0
    %453 = vmatpush1.xpose.msra.mxu0 0.0
    %454 = vmatprep.subr.mxu0 0.0
    %455 = vmatpush1.xpose.msra.mxu0 0.0
    %456 = vmatprep.subr.mxu0 0.0
    %457 = vmatpush1.xpose.msra.mxu0 0.0
    %458 = vmatprep.subr.mxu0 0.0
    %459 = vmatpush1.xpose.msra.mxu0 0.0
    %460 = vmatprep.subr.mxu0 0.0
    %461 = vmatpush1.xpose.msra.mxu0 0.0
    %462 = vmatprep.subr.mxu0 0.0
    %463 = vmatpush1.xpose.msra.mxu0 0.0
    %464 = vmatprep.subr.mxu0 0.0
    %465 = vmatpush1.xpose.msra.mxu0 0.0
    %466 = vmatprep.subr.mxu0 0.0
    %467 = vmatpush1.xpose.msra.mxu0 0.0
    %468 = vmatprep.subr.mxu0 0.0
    %469 = vmatpush1.xpose.msra.mxu0 0.0
    %470 = vmatprep.subr.mxu0 0.0
    %471 = vmatpush1.xpose.msra.mxu0 0.0
    %472 = vmatprep.subr.mxu0 0.0
    %473 = vmatpush1.xpose.msra.mxu0 0.0
    %474 = vmatprep.subr.mxu0 0.0
    %475 = vmatpush1.xpose.msra.mxu0 0.0
    %476 = vmatprep.subr.mxu0 0.0
    %477 = vmatpush1.xpose.msra.mxu0 0.0
    %478 = vmatprep.subr.mxu0 0.0
    %479 = vmatpush1.xpose.msra.mxu0 0.0
    %480 = vmatprep.subr.mxu0 0.0
    %481 = vmatpush1.xpose.msra.mxu0 0.0
    %482 = vmatprep.subr.mxu0 0.0
    %483 = vmatpush1.xpose.msra.mxu0 0.0
    %484 = vmatprep.subr.mxu0 0.0
    %485 = vmatpush1.xpose.msra.mxu0 0.0
    %486 = vmatprep.mubr.f32.mxu0 0.0
    %487 = vmatmul.mubr.f32.gmra.mrb[0].mxu0 %v417
    %v488 = vpop.f32.mrb[0].mxu0
    %v489 = vadd.f32 0.0, %v488
    %v490 = vpop.f32.mrb[0].mxu0
    %491 = vdwg.mxu0
    %v493 = vsel %vm415, %v226, 0
    %v496 = vsel %vm415, %v320, 0
    %498 = vmatprep.subr.mxu0 0.0
    %499 = vmatpush1.xpose.msra.mxu0 %v496
    %500 = vmatprep.subr.mxu0 0.0
    %501 = vmatpush1.xpose.msra.mxu0 0.0
    %502 = vmatprep.subr.mxu0 0.0
    %503 = vmatpush1.xpose.msra.mxu0 0.0
    %504 = vmatprep.subr.mxu0 0.0
    %505 = vmatpush1.xpose.msra.mxu0 0.0
    %506 = vmatprep.subr.mxu0 0.0
    %507 = vmatpush1.xpose.msra.mxu0 0.0
    %508 = vmatprep.subr.mxu0 0.0
    %509 = vmatpush1.xpose.msra.mxu0 0.0
    %510 = vmatprep.subr.mxu0 0.0
    %511 = vmatpush1.xpose.msra.mxu0 0.0
    %512 = vmatprep.subr.mxu0 0.0
    %513 = vmatpush1.xpose.msra.mxu0 0.0
    %514 = vmatprep.subr.mxu0 0.0
    %515 = vmatpush1.xpose.msra.mxu0 0.0
    %516 = vmatprep.subr.mxu0 0.0
    %517 = vmatpush1.xpose.msra.mxu0 0.0
    %518 = vmatprep.subr.mxu0 0.0
    %519 = vmatpush1.xpose.msra.mxu0 0.0
    %520 = vmatprep.subr.mxu0 0.0
    %521 = vmatpush1.xpose.msra.mxu0 0.0
    %522 = vmatprep.subr.mxu0 0.0
    %523 = vmatpush1.xpose.msra.mxu0 0.0
    %524 = vmatprep.subr.mxu0 0.0
    %525 = vmatpush1.xpose.msra.mxu0 0.0
    %526 = vmatprep.subr.mxu0 0.0
    %527 = vmatpush1.xpose.msra.mxu0 0.0
    %528 = vmatprep.subr.mxu0 0.0
    %529 = vmatpush1.xpose.msra.mxu0 0.0
    %530 = vmatprep.subr.mxu0 0.0
    %531 = vmatpush1.xpose.msra.mxu0 0.0
    %532 = vmatprep.subr.mxu0 0.0
    %533 = vmatpush1.xpose.msra.mxu0 0.0
    %534 = vmatprep.subr.mxu0 0.0
    %535 = vmatpush1.xpose.msra.mxu0 0.0
    %536 = vmatprep.subr.mxu0 0.0
    %537 = vmatpush1.xpose.msra.mxu0 0.0
    %538 = vmatprep.subr.mxu0 0.0
    %539 = vmatpush1.xpose.msra.mxu0 0.0
    %540 = vmatprep.subr.mxu0 0.0
    %541 = vmatpush1.xpose.msra.mxu0 0.0
    %542 = vmatprep.subr.mxu0 0.0
    %543 = vmatpush1.xpose.msra.mxu0 0.0
    %544 = vmatprep.subr.mxu0 0.0
    %545 = vmatpush1.xpose.msra.mxu0 0.0
    %546 = vmatprep.subr.mxu0 0.0
    %547 = vmatpush1.xpose.msra.mxu0 0.0
    %548 = vmatprep.subr.mxu0 0.0
    %549 = vmatpush1.xpose.msra.mxu0 0.0
    %550 = vmatprep.subr.mxu0 0.0
    %551 = vmatpush1.xpose.msra.mxu0 0.0
    %552 = vmatprep.subr.mxu0 0.0
    %553 = vmatpush1.xpose.msra.mxu0 0.0
    %554 = vmatprep.subr.mxu0 0.0
    %555 = vmatpush1.xpose.msra.mxu0 0.0
    %556 = vmatprep.subr.mxu0 0.0
    %557 = vmatpush1.xpose.msra.mxu0 0.0
    %558 = vmatprep.subr.mxu0 0.0
    %559 = vmatpush1.xpose.msra.mxu0 0.0
    %560 = vmatprep.subr.mxu0 0.0
    %561 = vmatpush1.xpose.msra.mxu0 0.0
    %562 = vmatprep.mubr.f32.mxu0 0.0
    %563 = vmatmul.mubr.f32.gmra.mrb[0].mxu0 %v493
    %v564 = vpop.f32.mrb[0].mxu0
    %v565 = vadd.f32 0.0, %v564
    %v566 = vpop.f32.mrb[0].mxu0
    %567 = vdwg.mxu0
    %v568 = vmul.f32 %v489, 0.35355338
    %v569 = vmul.f32 %v565, 0.35355338
    %v570 = vsel %vm415, %v319, 0.0
    %571 = vadd.xlane.f32.xlu0 %v570
    %v572 = vpop.xlane.xlu0 %571
    %v573 = vsel %vm415, %v320, 0.0
    %574 = vadd.xlane.f32.xlu0 %v573
    %v575 = vpop.xlane.xlu0 %574
    %vm576 = vcmp.eq.f32.partialorder %v572, 0.0
    %vm577 = vcmp.eq.f32.partialorder %v575, 0.0
    %v578 = vsel %vm576, 1, 0
    %v579 = vsel %vm577, 1, 0
    %vm580 = vcmp.eq.s32.totalorder %v578, 1
    %vm581 = vcmp.eq.s32.totalorder %v579, 1
    %v584 = vlaneseq
    %v585 = vshrl.u32 %v584, 7
    %v586 = vsub.s32 0, %v585
    %v587 = vrot.slane %v568, %v586
    %589 = vbcast.lane.b32.xlu0 %v587, 256
    %v590 = vpop.permute.xlu0 %589
    %v591 = vlaneseq
    %v592 = vshrl.u32 %v591, 7
    %v593 = vsub.s32 1, %v592
    %v594 = vrot.slane %v568, %v593
    %596 = vbcast.lane.b32.xlu0 %v594, 256
    %v597 = vpop.permute.xlu0 %596
    %v598 = vlaneseq
    %v599 = vshrl.u32 %v598, 7
    %v600 = vsub.s32 2, %v599
    %v601 = vrot.slane %v568, %v600
    %603 = vbcast.lane.b32.xlu0 %v601, 256
    %v604 = vpop.permute.xlu0 %603
    %v605 = vlaneseq
    %v606 = vshrl.u32 %v605, 7
    %v607 = vsub.s32 3, %v606
    %v608 = vrot.slane %v568, %v607
    %610 = vbcast.lane.b32.xlu0 %v608, 256
    %v611 = vpop.permute.xlu0 %610
    %v612 = vlaneseq
    %v613 = vshrl.u32 %v612, 7
    %v614 = vsub.s32 4, %v613
    %v615 = vrot.slane %v568, %v614
    %617 = vbcast.lane.b32.xlu0 %v615, 256
    %v618 = vpop.permute.xlu0 %617
    %v619 = vlaneseq
    %v620 = vshrl.u32 %v619, 7
    %v621 = vsub.s32 5, %v620
    %v622 = vrot.slane %v568, %v621
    %624 = vbcast.lane.b32.xlu0 %v622, 256
    %v625 = vpop.permute.xlu0 %624
    %v626 = vlaneseq
    %v627 = vshrl.u32 %v626, 7
    %v628 = vsub.s32 6, %v627
    %v629 = vrot.slane %v568, %v628
    %631 = vbcast.lane.b32.xlu0 %v629, 256
    %v632 = vpop.permute.xlu0 %631
    %v633 = vlaneseq
    %v634 = vshrl.u32 %v633, 7
    %v635 = vsub.s32 7, %v634
    %v636 = vrot.slane %v568, %v635
    %638 = vbcast.lane.b32.xlu0 %v636, 256
    %v639 = vpop.permute.xlu0 %638
    %v640 = vlaneseq
    %v641 = vshrl.u32 %v640, 7
    %v642 = vsub.s32 0, %v641
    %v643 = vrot.slane %v569, %v642
    %645 = vbcast.lane.b32.xlu0 %v643, 256
    %v646 = vpop.permute.xlu0 %645
    %v647 = vlaneseq
    %v648 = vshrl.u32 %v647, 7
    %v649 = vsub.s32 1, %v648
    %v650 = vrot.slane %v569, %v649
    %652 = vbcast.lane.b32.xlu0 %v650, 256
    %v653 = vpop.permute.xlu0 %652
    %v654 = vlaneseq
    %v655 = vshrl.u32 %v654, 7
    %v656 = vsub.s32 2, %v655
    %v657 = vrot.slane %v569, %v656
    %659 = vbcast.lane.b32.xlu0 %v657, 256
    %v660 = vpop.permute.xlu0 %659
    %v661 = vlaneseq
    %v662 = vshrl.u32 %v661, 7
    %v663 = vsub.s32 3, %v662
    %v664 = vrot.slane %v569, %v663
    %666 = vbcast.lane.b32.xlu0 %v664, 256
    %v667 = vpop.permute.xlu0 %666
    %v668 = vlaneseq
    %v669 = vshrl.u32 %v668, 7
    %v670 = vsub.s32 4, %v669
    %v671 = vrot.slane %v569, %v670
    %673 = vbcast.lane.b32.xlu0 %v671, 256
    %v674 = vpop.permute.xlu0 %673
    %v675 = vlaneseq
    %v676 = vshrl.u32 %v675, 7
    %v677 = vsub.s32 5, %v676
    %v678 = vrot.slane %v569, %v677
    %680 = vbcast.lane.b32.xlu0 %v678, 256
    %v681 = vpop.permute.xlu0 %680
    %v682 = vlaneseq
    %v683 = vshrl.u32 %v682, 7
    %v684 = vsub.s32 6, %v683
    %v685 = vrot.slane %v569, %v684
    %687 = vbcast.lane.b32.xlu0 %v685, 256
    %v688 = vpop.permute.xlu0 %687
    %v689 = vlaneseq
    %v690 = vshrl.u32 %v689, 7
    %v691 = vsub.s32 7, %v690
    %v692 = vrot.slane %v569, %v691
    %694 = vbcast.lane.b32.xlu0 %v692, 256
    %v695 = vpop.permute.xlu0 %694
    %v712 = vsel %vm580, -4.2949673e+09, %v590
    %v713 = vsel %vm580, -4.2949673e+09, %v597
    %v714 = vsel %vm580, -4.2949673e+09, %v604
    %v715 = vsel %vm580, -4.2949673e+09, %v611
    %v716 = vsel %vm580, -4.2949673e+09, %v618
    %v717 = vsel %vm580, -4.2949673e+09, %v625
    %v718 = vsel %vm580, -4.2949673e+09, %v632
    %v719 = vsel %vm580, -4.2949673e+09, %v639
    %v720 = vsel %vm581, -4.2949673e+09, %v646
    %v721 = vsel %vm581, -4.2949673e+09, %v653
    %v722 = vsel %vm581, -4.2949673e+09, %v660
    %v723 = vsel %vm581, -4.2949673e+09, %v667
    %v724 = vsel %vm581, -4.2949673e+09, %v674
    %v725 = vsel %vm581, -4.2949673e+09, %v681
    %v726 = vsel %vm581, -4.2949673e+09, %v688
    %v727 = vsel %vm581, -4.2949673e+09, %v695
    %744 = vset.pattern.permute.xlu0 0
    %745 = vperm.xlu0 %744, %v712
    %v746 = vpop.permute.xlu0 %745
    %747 = vset.pattern.permute.xlu0 0
    %748 = vperm.xlu0 %747, %v713
    %v749 = vpop.permute.xlu0 %748
    %750 = vset.pattern.permute.xlu0 0
    %751 = vperm.xlu0 %750, %v714
    %v752 = vpop.permute.xlu0 %751
    %753 = vset.pattern.permute.xlu0 0
    %754 = vperm.xlu0 %753, %v715
    %v755 = vpop.permute.xlu0 %754
    %756 = vset.pattern.permute.xlu0 0
    %757 = vperm.xlu0 %756, %v716
    %v758 = vpop.permute.xlu0 %757
    %759 = vset.pattern.permute.xlu0 0
    %760 = vperm.xlu0 %759, %v717
    %v761 = vpop.permute.xlu0 %760
    %762 = vset.pattern.permute.xlu0 0
    %763 = vperm.xlu0 %762, %v718
    %v764 = vpop.permute.xlu0 %763
    %765 = vset.pattern.permute.xlu0 0
    %766 = vperm.xlu0 %765, %v719
    %v767 = vpop.permute.xlu0 %766
    %768 = vset.pattern.permute.xlu0 0
    %769 = vperm.xlu0 %768, %v720
    %v770 = vpop.permute.xlu0 %769
    %771 = vset.pattern.permute.xlu0 0
    %772 = vperm.xlu0 %771, %v721
    %v773 = vpop.permute.xlu0 %772
    %774 = vset.pattern.permute.xlu0 0
    %775 = vperm.xlu0 %774, %v722
    %v776 = vpop.permute.xlu0 %775
    %777 = vset.pattern.permute.xlu0 0
    %778 = vperm.xlu0 %777, %v723
    %v779 = vpop.permute.xlu0 %778
    %780 = vset.pattern.permute.xlu0 0
    %781 = vperm.xlu0 %780, %v724
    %v782 = vpop.permute.xlu0 %781
    %783 = vset.pattern.permute.xlu0 0
    %784 = vperm.xlu0 %783, %v725
    %v785 = vpop.permute.xlu0 %784
    %786 = vset.pattern.permute.xlu0 0
    %787 = vperm.xlu0 %786, %v726
    %v788 = vpop.permute.xlu0 %787
    %789 = vset.pattern.permute.xlu0 0
    %790 = vperm.xlu0 %789, %v727
    %v791 = vpop.permute.xlu0 %790
    %v792 = vlaneseq
    %v793 = vand.u32 %v792, 127
    %v794 = vlaneseq
    %v795 = vshrl.u32 %v794, 7
    %v796 = vsub.s32 %v793, %v795
    %v797 = vrot.slane %v746, %v796
    %v798 = vlaneseq
    %v799 = vshrl.u32 %v798, 7
    %v800 = vsub.s32 %v793, %v799
    %v801 = vrot.slane %v749, %v800
    %v802 = vlaneseq
    %v803 = vshrl.u32 %v802, 7
    %v804 = vsub.s32 %v793, %v803
    %v805 = vrot.slane %v752, %v804
    %v806 = vlaneseq
    %v807 = vshrl.u32 %v806, 7
    %v808 = vsub.s32 %v793, %v807
    %v809 = vrot.slane %v755, %v808
    %v810 = vlaneseq
    %v811 = vshrl.u32 %v810, 7
    %v812 = vsub.s32 %v793, %v811
    %v813 = vrot.slane %v758, %v812
    %v814 = vlaneseq
    %v815 = vshrl.u32 %v814, 7
    %v816 = vsub.s32 %v793, %v815
    %v817 = vrot.slane %v761, %v816
    %v818 = vlaneseq
    %v819 = vshrl.u32 %v818, 7
    %v820 = vsub.s32 %v793, %v819
    %v821 = vrot.slane %v764, %v820
    %v822 = vlaneseq
    %v823 = vshrl.u32 %v822, 7
    %v824 = vsub.s32 %v793, %v823
    %v825 = vrot.slane %v767, %v824
    %v826 = vlaneseq
    %v827 = vshrl.u32 %v826, 7
    %v828 = vsub.s32 %v793, %v827
    %v829 = vrot.slane %v770, %v828
    %v830 = vlaneseq
    %v831 = vshrl.u32 %v830, 7
    %v832 = vsub.s32 %v793, %v831
    %v833 = vrot.slane %v773, %v832
    %v834 = vlaneseq
    %v835 = vshrl.u32 %v834, 7
    %v836 = vsub.s32 %v793, %v835
    %v837 = vrot.slane %v776, %v836
    %v838 = vlaneseq
    %v839 = vshrl.u32 %v838, 7
    %v840 = vsub.s32 %v793, %v839
    %v841 = vrot.slane %v779, %v840
    %v842 = vlaneseq
    %v843 = vshrl.u32 %v842, 7
    %v844 = vsub.s32 %v793, %v843
    %v845 = vrot.slane %v782, %v844
    %v846 = vlaneseq
    %v847 = vshrl.u32 %v846, 7
    %v848 = vsub.s32 %v793, %v847
    %v849 = vrot.slane %v785, %v848
    %v850 = vlaneseq
    %v851 = vshrl.u32 %v850, 7
    %v852 = vsub.s32 %v793, %v851
    %v853 = vrot.slane %v788, %v852
    %v854 = vlaneseq
    %v855 = vshrl.u32 %v854, 7
    %v856 = vsub.s32 %v793, %v855
    %v857 = vrot.slane %v791, %v856
    %vm858 = vcmask 1041409
    %v859 = vsel %vm858, %v801, %v797
    %vm860 = vcmask 1042434
    %v861 = vsel %vm860, %v805, %v859
    %vm862 = vcmask 1043459
    %v863 = vsel %vm862, %v809, %v861
    %vm864 = vcmask 1044484
    %v865 = vsel %vm864, %v813, %v863
    %vm866 = vcmask 1045509
    %v867 = vsel %vm866, %v817, %v865
    %vm868 = vcmask 1046534
    %v869 = vsel %vm868, %v821, %v867
    %vm870 = vcmask 1047559
    %v871 = vsel %vm870, %v825, %v869
    %v872 = vsel %vm858, %v833, %v829
    %v873 = vsel %vm860, %v837, %v872
    %v874 = vsel %vm862, %v841, %v873
    %v875 = vsel %vm864, %v845, %v874
    %v876 = vsel %vm866, %v849, %v875
    %v877 = vsel %vm868, %v853, %v876
    %v878 = vsel %vm870, %v857, %v877
    %v881 = vsel %vm415, %v871, -inf
    %882 = vmax.xlane.f32.xlu0 %v881
    %v883 = vpop.xlane.xlu0 %882
    %v884 = vsel %vm415, %v878, -inf
    %885 = vmax.xlane.f32.xlu0 %v884
    %v886 = vpop.xlane.xlu0 %885
    %v889 = vlaneseq
    %v890 = vshrl.u32 %v889, 7
    %v891 = vsub.s32 0, %v890
    %v892 = vrot.slane %v883, %v891
    %v893 = vlaneseq
    %v894 = vshrl.u32 %v893, 7
    %v895 = vsub.s32 1, %v894
    %v896 = vrot.slane %v883, %v895
    %v897 = vlaneseq
    %v898 = vshrl.u32 %v897, 7
    %v899 = vsub.s32 2, %v898
    %v900 = vrot.slane %v883, %v899
    %v901 = vlaneseq
    %v902 = vshrl.u32 %v901, 7
    %v903 = vsub.s32 3, %v902
    %v904 = vrot.slane %v883, %v903
    %v905 = vlaneseq
    %v906 = vshrl.u32 %v905, 7
    %v907 = vsub.s32 4, %v906
    %v908 = vrot.slane %v883, %v907
    %v909 = vlaneseq
    %v910 = vshrl.u32 %v909, 7
    %v911 = vsub.s32 5, %v910
    %v912 = vrot.slane %v883, %v911
    %v913 = vlaneseq
    %v914 = vshrl.u32 %v913, 7
    %v915 = vsub.s32 6, %v914
    %v916 = vrot.slane %v883, %v915
    %v917 = vlaneseq
    %v918 = vshrl.u32 %v917, 7
    %v919 = vsub.s32 7, %v918
    %v920 = vrot.slane %v883, %v919
    %v921 = vlaneseq
    %v922 = vshrl.u32 %v921, 7
    %v923 = vsub.s32 0, %v922
    %v924 = vrot.slane %v886, %v923
    %v925 = vlaneseq
    %v926 = vshrl.u32 %v925, 7
    %v927 = vsub.s32 1, %v926
    %v928 = vrot.slane %v886, %v927
    %v929 = vlaneseq
    %v930 = vshrl.u32 %v929, 7
    %v931 = vsub.s32 2, %v930
    %v932 = vrot.slane %v886, %v931
    %v933 = vlaneseq
    %v934 = vshrl.u32 %v933, 7
    %v935 = vsub.s32 3, %v934
    %v936 = vrot.slane %v886, %v935
    %v937 = vlaneseq
    %v938 = vshrl.u32 %v937, 7
    %v939 = vsub.s32 4, %v938
    %v940 = vrot.slane %v886, %v939
    %v941 = vlaneseq
    %v942 = vshrl.u32 %v941, 7
    %v943 = vsub.s32 5, %v942
    %v944 = vrot.slane %v886, %v943
    %v945 = vlaneseq
    %v946 = vshrl.u32 %v945, 7
    %v947 = vsub.s32 6, %v946
    %v948 = vrot.slane %v886, %v947
    %v949 = vlaneseq
    %v950 = vshrl.u32 %v949, 7
    %v951 = vsub.s32 7, %v950
    %v952 = vrot.slane %v886, %v951
    %v969 = vsub.f32 %v712, %v892
    %v970 = vsub.f32 %v713, %v896
    %v971 = vsub.f32 %v714, %v900
    %v972 = vsub.f32 %v715, %v904
    %v973 = vsub.f32 %v716, %v908
    %v974 = vsub.f32 %v717, %v912
    %v975 = vsub.f32 %v718, %v916
    %v976 = vsub.f32 %v719, %v920
    %v977 = vsub.f32 %v720, %v924
    %v978 = vsub.f32 %v721, %v928
    %v979 = vsub.f32 %v722, %v932
    %v980 = vsub.f32 %v723, %v936
    %v981 = vsub.f32 %v724, %v940
    %v982 = vsub.f32 %v725, %v944
    %v983 = vsub.f32 %v726, %v948
    %v984 = vsub.f32 %v727, %v952
    %v985 = vmul.f32 %v969, 1.442695
    %v986 = vpow.pop %v985
    %v987 = vmul.f32 %v970, 1.442695
    %v988 = vpow.pop %v987
    %v989 = vmul.f32 %v971, 1.442695
    %v990 = vpow.pop %v989
    %v991 = vmul.f32 %v972, 1.442695
    %v992 = vpow.pop %v991
    %v993 = vmul.f32 %v973, 1.442695
    %v994 = vpow.pop %v993
    %v995 = vmul.f32 %v974, 1.442695
    %v996 = vpow.pop %v995
    %v997 = vmul.f32 %v975, 1.442695
    %v998 = vpow.pop %v997
    %v999 = vmul.f32 %v976, 1.442695
    %v1000 = vpow.pop %v999
    %v1001 = vmul.f32 %v977, 1.442695
    %v1002 = vpow.pop %v1001
    %v1003 = vmul.f32 %v978, 1.442695
    %v1004 = vpow.pop %v1003
    %v1005 = vmul.f32 %v979, 1.442695
    %v1006 = vpow.pop %v1005
    %v1007 = vmul.f32 %v980, 1.442695
    %v1008 = vpow.pop %v1007
    %v1009 = vmul.f32 %v981, 1.442695
    %v1010 = vpow.pop %v1009
    %v1011 = vmul.f32 %v982, 1.442695
    %v1012 = vpow.pop %v1011
    %v1013 = vmul.f32 %v983, 1.442695
    %v1014 = vpow.pop %v1013
    %v1015 = vmul.f32 %v984, 1.442695
    %v1016 = vpow.pop %v1015
    %1033 = vset.pattern.permute.xlu0 0
    %1034 = vperm.xlu0 %1033, %v986
    %v1035 = vpop.permute.xlu0 %1034
    %1036 = vset.pattern.permute.xlu0 0
    %1037 = vperm.xlu0 %1036, %v988
    %v1038 = vpop.permute.xlu0 %1037
    %1039 = vset.pattern.permute.xlu0 0
    %1040 = vperm.xlu0 %1039, %v990
    %v1041 = vpop.permute.xlu0 %1040
    %1042 = vset.pattern.permute.xlu0 0
    %1043 = vperm.xlu0 %1042, %v992
    %v1044 = vpop.permute.xlu0 %1043
    %1045 = vset.pattern.permute.xlu0 0
    %1046 = vperm.xlu0 %1045, %v994
    %v1047 = vpop.permute.xlu0 %1046
    %1048 = vset.pattern.permute.xlu0 0
    %1049 = vperm.xlu0 %1048, %v996
    %v1050 = vpop.permute.xlu0 %1049
    %1051 = vset.pattern.permute.xlu0 0
    %1052 = vperm.xlu0 %1051, %v998
    %v1053 = vpop.permute.xlu0 %1052
    %1054 = vset.pattern.permute.xlu0 0
    %1055 = vperm.xlu0 %1054, %v1000
    %v1056 = vpop.permute.xlu0 %1055
    %1057 = vset.pattern.permute.xlu0 0
    %1058 = vperm.xlu0 %1057, %v1002
    %v1059 = vpop.permute.xlu0 %1058
    %1060 = vset.pattern.permute.xlu0 0
    %1061 = vperm.xlu0 %1060, %v1004
    %v1062 = vpop.permute.xlu0 %1061
    %1063 = vset.pattern.permute.xlu0 0
    %1064 = vperm.xlu0 %1063, %v1006
    %v1065 = vpop.permute.xlu0 %1064
    %1066 = vset.pattern.permute.xlu0 0
    %1067 = vperm.xlu0 %1066, %v1008
    %v1068 = vpop.permute.xlu0 %1067
    %1069 = vset.pattern.permute.xlu0 0
    %1070 = vperm.xlu0 %1069, %v1010
    %v1071 = vpop.permute.xlu0 %1070
    %1072 = vset.pattern.permute.xlu0 0
    %1073 = vperm.xlu0 %1072, %v1012
    %v1074 = vpop.permute.xlu0 %1073
    %1075 = vset.pattern.permute.xlu0 0
    %1076 = vperm.xlu0 %1075, %v1014
    %v1077 = vpop.permute.xlu0 %1076
    %1078 = vset.pattern.permute.xlu0 0
    %1079 = vperm.xlu0 %1078, %v1016
    %v1080 = vpop.permute.xlu0 %1079
    %v1081 = vlaneseq
    %v1082 = vshrl.u32 %v1081, 7
    %v1083 = vsub.s32 %v793, %v1082
    %v1084 = vrot.slane %v1035, %v1083
    %v1085 = vlaneseq
    %v1086 = vshrl.u32 %v1085, 7
    %v1087 = vsub.s32 %v793, %v1086
    %v1088 = vrot.slane %v1038, %v1087
    %v1089 = vlaneseq
    %v1090 = vshrl.u32 %v1089, 7
    %v1091 = vsub.s32 %v793, %v1090
    %v1092 = vrot.slane %v1041, %v1091
    %v1093 = vlaneseq
    %v1094 = vshrl.u32 %v1093, 7
    %v1095 = vsub.s32 %v793, %v1094
    %v1096 = vrot.slane %v1044, %v1095
    %v1097 = vlaneseq
    %v1098 = vshrl.u32 %v1097, 7
    %v1099 = vsub.s32 %v793, %v1098
    %v1100 = vrot.slane %v1047, %v1099
    %v1101 = vlaneseq
    %v1102 = vshrl.u32 %v1101, 7
    %v1103 = vsub.s32 %v793, %v1102
    %v1104 = vrot.slane %v1050, %v1103
    %v1105 = vlaneseq
    %v1106 = vshrl.u32 %v1105, 7
    %v1107 = vsub.s32 %v793, %v1106
    %v1108 = vrot.slane %v1053, %v1107
    %v1109 = vlaneseq
    %v1110 = vshrl.u32 %v1109, 7
    %v1111 = vsub.s32 %v793, %v1110
    %v1112 = vrot.slane %v1056, %v1111
    %v1113 = vlaneseq
    %v1114 = vshrl.u32 %v1113, 7
    %v1115 = vsub.s32 %v793, %v1114
    %v1116 = vrot.slane %v1059, %v1115
    %v1117 = vlaneseq
    %v1118 = vshrl.u32 %v1117, 7
    %v1119 = vsub.s32 %v793, %v1118
    %v1120 = vrot.slane %v1062, %v1119
    %v1121 = vlaneseq
    %v1122 = vshrl.u32 %v1121, 7
    %v1123 = vsub.s32 %v793, %v1122
    %v1124 = vrot.slane %v1065, %v1123
    %v1125 = vlaneseq
    %v1126 = vshrl.u32 %v1125, 7
    %v1127 = vsub.s32 %v793, %v1126
    %v1128 = vrot.slane %v1068, %v1127
    %v1129 = vlaneseq
    %v1130 = vshrl.u32 %v1129, 7
    %v1131 = vsub.s32 %v793, %v1130
    %v1132 = vrot.slane %v1071, %v1131
    %v1133 = vlaneseq
    %v1134 = vshrl.u32 %v1133, 7
    %v1135 = vsub.s32 %v793, %v1134
    %v1136 = vrot.slane %v1074, %v1135
    %v1137 = vlaneseq
    %v1138 = vshrl.u32 %v1137, 7
    %v1139 = vsub.s32 %v793, %v1138
    %v1140 = vrot.slane %v1077, %v1139
    %v1141 = vlaneseq
    %v1142 = vshrl.u32 %v1141, 7
    %v1143 = vsub.s32 %v793, %v1142
    %v1144 = vrot.slane %v1080, %v1143
    %v1145 = vsel %vm858, %v1088, %v1084
    %v1146 = vsel %vm860, %v1092, %v1145
    %v1147 = vsel %vm862, %v1096, %v1146
    %v1148 = vsel %vm864, %v1100, %v1147
    %v1149 = vsel %vm866, %v1104, %v1148
    %v1150 = vsel %vm868, %v1108, %v1149
    %v1151 = vsel %vm870, %v1112, %v1150
    %v1152 = vsel %vm858, %v1120, %v1116
    %v1153 = vsel %vm860, %v1124, %v1152
    %v1154 = vsel %vm862, %v1128, %v1153
    %v1155 = vsel %vm864, %v1132, %v1154
    %v1156 = vsel %vm866, %v1136, %v1155
    %v1157 = vsel %vm868, %v1140, %v1156
    %v1158 = vsel %vm870, %v1144, %v1157
    %v1161 = vsel %vm415, %v1151, 0.0
    %1162 = vadd.xlane.f32.xlu0 %v1161
    %v1163 = vpop.xlane.xlu0 %1162
    %v1164 = vsel %vm415, %v1158, 0.0
    %1165 = vadd.xlane.f32.xlu0 %v1164
    %v1166 = vpop.xlane.xlu0 %1165
    %v1169 = vlaneseq
    %v1170 = vshrl.u32 %v1169, 7
    %v1171 = vsub.s32 0, %v1170
    %v1172 = vrot.slane %v1163, %v1171
    %v1173 = vlaneseq
    %v1174 = vshrl.u32 %v1173, 7
    %v1175 = vsub.s32 1, %v1174
    %v1176 = vrot.slane %v1163, %v1175
    %v1177 = vlaneseq
    %v1178 = vshrl.u32 %v1177, 7
    %v1179 = vsub.s32 2, %v1178
    %v1180 = vrot.slane %v1163, %v1179
    %v1181 = vlaneseq
    %v1182 = vshrl.u32 %v1181, 7
    %v1183 = vsub.s32 3, %v1182
    %v1184 = vrot.slane %v1163, %v1183
    %v1185 = vlaneseq
    %v1186 = vshrl.u32 %v1185, 7
    %v1187 = vsub.s32 4, %v1186
    %v1188 = vrot.slane %v1163, %v1187
    %v1189 = vlaneseq
    %v1190 = vshrl.u32 %v1189, 7
    %v1191 = vsub.s32 5, %v1190
    %v1192 = vrot.slane %v1163, %v1191
    %v1193 = vlaneseq
    %v1194 = vshrl.u32 %v1193, 7
    %v1195 = vsub.s32 6, %v1194
    %v1196 = vrot.slane %v1163, %v1195
    %v1197 = vlaneseq
    %v1198 = vshrl.u32 %v1197, 7
    %v1199 = vsub.s32 7, %v1198
    %v1200 = vrot.slane %v1163, %v1199
    %v1201 = vlaneseq
    %v1202 = vshrl.u32 %v1201, 7
    %v1203 = vsub.s32 0, %v1202
    %v1204 = vrot.slane %v1166, %v1203
    %v1205 = vlaneseq
    %v1206 = vshrl.u32 %v1205, 7
    %v1207 = vsub.s32 1, %v1206
    %v1208 = vrot.slane %v1166, %v1207
    %v1209 = vlaneseq
    %v1210 = vshrl.u32 %v1209, 7
    %v1211 = vsub.s32 2, %v1210
    %v1212 = vrot.slane %v1166, %v1211
    %v1213 = vlaneseq
    %v1214 = vshrl.u32 %v1213, 7
    %v1215 = vsub.s32 3, %v1214
    %v1216 = vrot.slane %v1166, %v1215
    %v1217 = vlaneseq
    %v1218 = vshrl.u32 %v1217, 7
    %v1219 = vsub.s32 4, %v1218
    %v1220 = vrot.slane %v1166, %v1219
    %v1221 = vlaneseq
    %v1222 = vshrl.u32 %v1221, 7
    %v1223 = vsub.s32 5, %v1222
    %v1224 = vrot.slane %v1166, %v1223
    %v1225 = vlaneseq
    %v1226 = vshrl.u32 %v1225, 7
    %v1227 = vsub.s32 6, %v1226
    %v1228 = vrot.slane %v1166, %v1227
    %v1229 = vlaneseq
    %v1230 = vshrl.u32 %v1229, 7
    %v1231 = vsub.s32 7, %v1230
    %v1232 = vrot.slane %v1166, %v1231
    %v1249 = vrcp.pop %v1172
    %v1250 = vmul.f32 %v986, %v1249
    %v1251 = vrcp.pop %v1176
    %v1252 = vmul.f32 %v988, %v1251
    %v1253 = vrcp.pop %v1180
    %v1254 = vmul.f32 %v990, %v1253
    %v1255 = vrcp.pop %v1184
    %v1256 = vmul.f32 %v992, %v1255
    %v1257 = vrcp.pop %v1188
    %v1258 = vmul.f32 %v994, %v1257
    %v1259 = vrcp.pop %v1192
    %v1260 = vmul.f32 %v996, %v1259
    %v1261 = vrcp.pop %v1196
    %v1262 = vmul.f32 %v998, %v1261
    %v1263 = vrcp.pop %v1200
    %v1264 = vmul.f32 %v1000, %v1263
    %v1265 = vrcp.pop %v1204
    %v1266 = vmul.f32 %v1002, %v1265
    %v1267 = vrcp.pop %v1208
    %v1268 = vmul.f32 %v1004, %v1267
    %v1269 = vrcp.pop %v1212
    %v1270 = vmul.f32 %v1006, %v1269
    %v1271 = vrcp.pop %v1216
    %v1272 = vmul.f32 %v1008, %v1271
    %v1273 = vrcp.pop %v1220
    %v1274 = vmul.f32 %v1010, %v1273
    %v1275 = vrcp.pop %v1224
    %v1276 = vmul.f32 %v1012, %v1275
    %v1277 = vrcp.pop %v1228
    %v1278 = vmul.f32 %v1014, %v1277
    %v1279 = vrcp.pop %v1232
    %v1280 = vmul.f32 %v1016, %v1279
    %1289 = vset.pattern.permute.xlu0 0
    %1290 = vperm.xlu0 %1289, %v1250
    %v1291 = vpop.permute.xlu0 %1290
    %1292 = vset.pattern.permute.xlu0 0
    %1293 = vperm.xlu0 %1292, %v1252
    %v1294 = vpop.permute.xlu0 %1293
    %1295 = vset.pattern.permute.xlu0 0
    %1296 = vperm.xlu0 %1295, %v1254
    %v1297 = vpop.permute.xlu0 %1296
    %1298 = vset.pattern.permute.xlu0 0
    %1299 = vperm.xlu0 %1298, %v1256
    %v1300 = vpop.permute.xlu0 %1299
    %1301 = vset.pattern.permute.xlu0 0
    %1302 = vperm.xlu0 %1301, %v1258
    %v1303 = vpop.permute.xlu0 %1302
    %1304 = vset.pattern.permute.xlu0 0
    %1305 = vperm.xlu0 %1304, %v1260
    %v1306 = vpop.permute.xlu0 %1305
    %1307 = vset.pattern.permute.xlu0 0
    %1308 = vperm.xlu0 %1307, %v1262
    %v1309 = vpop.permute.xlu0 %1308
    %1310 = vset.pattern.permute.xlu0 0
    %1311 = vperm.xlu0 %1310, %v1264
    %v1312 = vpop.permute.xlu0 %1311
    %v1313 = vlaneseq
    %v1314 = vshrl.u32 %v1313, 7
    %v1315 = vsub.s32 %v793, %v1314
    %v1316 = vrot.slane %v1291, %v1315
    %v1317 = vlaneseq
    %v1318 = vshrl.u32 %v1317, 7
    %v1319 = vsub.s32 %v793, %v1318
    %v1320 = vrot.slane %v1294, %v1319
    %v1321 = vlaneseq
    %v1322 = vshrl.u32 %v1321, 7
    %v1323 = vsub.s32 %v793, %v1322
    %v1324 = vrot.slane %v1297, %v1323
    %v1325 = vlaneseq
    %v1326 = vshrl.u32 %v1325, 7
    %v1327 = vsub.s32 %v793, %v1326
    %v1328 = vrot.slane %v1300, %v1327
    %v1329 = vlaneseq
    %v1330 = vshrl.u32 %v1329, 7
    %v1331 = vsub.s32 %v793, %v1330
    %v1332 = vrot.slane %v1303, %v1331
    %v1333 = vlaneseq
    %v1334 = vshrl.u32 %v1333, 7
    %v1335 = vsub.s32 %v793, %v1334
    %v1336 = vrot.slane %v1306, %v1335
    %v1337 = vlaneseq
    %v1338 = vshrl.u32 %v1337, 7
    %v1339 = vsub.s32 %v793, %v1338
    %v1340 = vrot.slane %v1309, %v1339
    %v1341 = vlaneseq
    %v1342 = vshrl.u32 %v1341, 7
    %v1343 = vsub.s32 %v793, %v1342
    %v1344 = vrot.slane %v1312, %v1343
    %v1345 = vsel %vm858, %v1320, %v1316
    %v1346 = vsel %vm860, %v1324, %v1345
    %v1347 = vsel %vm862, %v1328, %v1346
    %v1348 = vsel %vm864, %v1332, %v1347
    %v1349 = vsel %vm866, %v1336, %v1348
    %v1350 = vsel %vm868, %v1340, %v1349
    %v1351 = vsel %vm870, %v1344, %v1350
    %v1352 = vsel %vm415, %v1351, 0
    %1354 = vmatprep.subr.mxu0 0.0
    %1355 = vmatpush1.msra.mxu0 %v413
    %1356 = vmatprep.subr.mxu0 0.0
    %1357 = vmatpush1.msra.mxu0 0.0
    %1358 = vmatprep.subr.mxu0 0.0
    %1359 = vmatpush1.msra.mxu0 0.0
    %1360 = vmatprep.subr.mxu0 0.0
    %1361 = vmatpush1.msra.mxu0 0.0
    %1362 = vmatprep.subr.mxu0 0.0
    %1363 = vmatpush1.msra.mxu0 0.0
    %1364 = vmatprep.subr.mxu0 0.0
    %1365 = vmatpush1.msra.mxu0 0.0
    %1366 = vmatprep.subr.mxu0 0.0
    %1367 = vmatpush1.msra.mxu0 0.0
    %1368 = vmatprep.subr.mxu0 0.0
    %1369 = vmatpush1.msra.mxu0 0.0
    %1370 = vmatprep.subr.mxu0 0.0
    %1371 = vmatpush1.msra.mxu0 0.0
    %1372 = vmatprep.subr.mxu0 0.0
    %1373 = vmatpush1.msra.mxu0 0.0
    %1374 = vmatprep.subr.mxu0 0.0
    %1375 = vmatpush1.msra.mxu0 0.0
    %1376 = vmatprep.subr.mxu0 0.0
    %1377 = vmatpush1.msra.mxu0 0.0
    %1378 = vmatprep.subr.mxu0 0.0
    %1379 = vmatpush1.msra.mxu0 0.0
    %1380 = vmatprep.subr.mxu0 0.0
    %1381 = vmatpush1.msra.mxu0 0.0
    %1382 = vmatprep.subr.mxu0 0.0
    %1383 = vmatpush1.msra.mxu0 0.0
    %1384 = vmatprep.subr.mxu0 0.0
    %1385 = vmatpush1.msra.mxu0 0.0
    %1386 = vmatprep.subr.mxu0 0.0
    %1387 = vmatpush1.msra.mxu0 0.0
    %1388 = vmatprep.subr.mxu0 0.0
    %1389 = vmatpush1.msra.mxu0 0.0
    %1390 = vmatprep.subr.mxu0 0.0
    %1391 = vmatpush1.msra.mxu0 0.0
    %1392 = vmatprep.subr.mxu0 0.0
    %1393 = vmatpush1.msra.mxu0 0.0
    %1394 = vmatprep.subr.mxu0 0.0
    %1395 = vmatpush1.msra.mxu0 0.0
    %1396 = vmatprep.subr.mxu0 0.0
    %1397 = vmatpush1.msra.mxu0 0.0
    %1398 = vmatprep.subr.mxu0 0.0
    %1399 = vmatpush1.msra.mxu0 0.0
    %1400 = vmatprep.subr.mxu0 0.0
    %1401 = vmatpush1.msra.mxu0 0.0
    %1402 = vmatprep.subr.mxu0 0.0
    %1403 = vmatpush1.msra.mxu0 0.0
    %1404 = vmatprep.subr.mxu0 0.0
    %1405 = vmatpush1.msra.mxu0 0.0
    %1406 = vmatprep.subr.mxu0 0.0
    %1407 = vmatpush1.msra.mxu0 0.0
    %1408 = vmatprep.subr.mxu0 0.0
    %1409 = vmatpush1.msra.mxu0 0.0
    %1410 = vmatprep.subr.mxu0 0.0
    %1411 = vmatpush1.msra.mxu0 0.0
    %1412 = vmatprep.subr.mxu0 0.0
    %1413 = vmatpush1.msra.mxu0 0.0
    %1414 = vmatprep.subr.mxu0 0.0
    %1415 = vmatpush1.msra.mxu0 0.0
    %1416 = vmatprep.subr.mxu0 0.0
    %1417 = vmatpush1.msra.mxu0 0.0
    %1418 = vmatprep.mubr.f32.mxu0 0.0
    %1419 = vmatmul.mubr.f32.gmra.mrb[0].mxu0 %v1352
    %v1420 = vpop.f32.mrb[0].mxu0
    %v1421 = vadd.f32 0.0, %v1420
    %v1422 = vpop.f32.mrb[0].mxu0
    %1423 = vdwg.mxu0
    %1432 = vset.pattern.permute.xlu0 0
    %1433 = vperm.xlu0 %1432, %v1266
    %v1434 = vpop.permute.xlu0 %1433
    %1435 = vset.pattern.permute.xlu0 0
    %1436 = vperm.xlu0 %1435, %v1268
    %v1437 = vpop.permute.xlu0 %1436
    %1438 = vset.pattern.permute.xlu0 0
    %1439 = vperm.xlu0 %1438, %v1270
    %v1440 = vpop.permute.xlu0 %1439
    %1441 = vset.pattern.permute.xlu0 0
    %1442 = vperm.xlu0 %1441, %v1272
    %v1443 = vpop.permute.xlu0 %1442
    %1444 = vset.pattern.permute.xlu0 0
    %1445 = vperm.xlu0 %1444, %v1274
    %v1446 = vpop.permute.xlu0 %1445
    %1447 = vset.pattern.permute.xlu0 0
    %1448 = vperm.xlu0 %1447, %v1276
    %v1449 = vpop.permute.xlu0 %1448
    %1450 = vset.pattern.permute.xlu0 0
    %1451 = vperm.xlu0 %1450, %v1278
    %v1452 = vpop.permute.xlu0 %1451
    %1453 = vset.pattern.permute.xlu0 0
    %1454 = vperm.xlu0 %1453, %v1280
    %v1455 = vpop.permute.xlu0 %1454
    %v1456 = vlaneseq
    %v1457 = vshrl.u32 %v1456, 7
    %v1458 = vsub.s32 %v793, %v1457
    %v1459 = vrot.slane %v1434, %v1458
    %v1460 = vlaneseq
    %v1461 = vshrl.u32 %v1460, 7
    %v1462 = vsub.s32 %v793, %v1461
    %v1463 = vrot.slane %v1437, %v1462
    %v1464 = vlaneseq
    %v1465 = vshrl.u32 %v1464, 7
    %v1466 = vsub.s32 %v793, %v1465
    %v1467 = vrot.slane %v1440, %v1466
    %v1468 = vlaneseq
    %v1469 = vshrl.u32 %v1468, 7
    %v1470 = vsub.s32 %v793, %v1469
    %v1471 = vrot.slane %v1443, %v1470
    %v1472 = vlaneseq
    %v1473 = vshrl.u32 %v1472, 7
    %v1474 = vsub.s32 %v793, %v1473
    %v1475 = vrot.slane %v1446, %v1474
    %v1476 = vlaneseq
    %v1477 = vshrl.u32 %v1476, 7
    %v1478 = vsub.s32 %v793, %v1477
    %v1479 = vrot.slane %v1449, %v1478
    %v1480 = vlaneseq
    %v1481 = vshrl.u32 %v1480, 7
    %v1482 = vsub.s32 %v793, %v1481
    %v1483 = vrot.slane %v1452, %v1482
    %v1484 = vlaneseq
    %v1485 = vshrl.u32 %v1484, 7
    %v1486 = vsub.s32 %v793, %v1485
    %v1487 = vrot.slane %v1455, %v1486
    %v1488 = vsel %vm858, %v1463, %v1459
    %v1489 = vsel %vm860, %v1467, %v1488
    %v1490 = vsel %vm862, %v1471, %v1489
    %v1491 = vsel %vm864, %v1475, %v1490
    %v1492 = vsel %vm866, %v1479, %v1491
    %v1493 = vsel %vm868, %v1483, %v1492
    %v1494 = vsel %vm870, %v1487, %v1493
    %v1495 = vsel %vm415, %v1494, 0
    %1497 = vmatprep.subr.mxu0 0.0
    %1498 = vmatpush1.msra.mxu0 %v414
    %1499 = vmatprep.subr.mxu0 0.0
    %1500 = vmatpush1.msra.mxu0 0.0
    %1501 = vmatprep.subr.mxu0 0.0
    %1502 = vmatpush1.msra.mxu0 0.0
    %1503 = vmatprep.subr.mxu0 0.0
    %1504 = vmatpush1.msra.mxu0 0.0
    %1505 = vmatprep.subr.mxu0 0.0
    %1506 = vmatpush1.msra.mxu0 0.0
    %1507 = vmatprep.subr.mxu0 0.0
    %1508 = vmatpush1.msra.mxu0 0.0
    %1509 = vmatprep.subr.mxu0 0.0
    %1510 = vmatpush1.msra.mxu0 0.0
    %1511 = vmatprep.subr.mxu0 0.0
    %1512 = vmatpush1.msra.mxu0 0.0
    %1513 = vmatprep.subr.mxu0 0.0
    %1514 = vmatpush1.msra.mxu0 0.0
    %1515 = vmatprep.subr.mxu0 0.0
    %1516 = vmatpush1.msra.mxu0 0.0
    %1517 = vmatprep.subr.mxu0 0.0
    %1518 = vmatpush1.msra.mxu0 0.0
    %1519 = vmatprep.subr.mxu0 0.0
    %1520 = vmatpush1.msra.mxu0 0.0
    %1521 = vmatprep.subr.mxu0 0.0
    %1522 = vmatpush1.msra.mxu0 0.0
    %1523 = vmatprep.subr.mxu0 0.0
    %1524 = vmatpush1.msra.mxu0 0.0
    %1525 = vmatprep.subr.mxu0 0.0
    %1526 = vmatpush1.msra.mxu0 0.0
    %1527 = vmatprep.subr.mxu0 0.0
    %1528 = vmatpush1.msra.mxu0 0.0
    %1529 = vmatprep.subr.mxu0 0.0
    %1530 = vmatpush1.msra.mxu0 0.0
    %1531 = vmatprep.subr.mxu0 0.0
    %1532 = vmatpush1.msra.mxu0 0.0
    %1533 = vmatprep.subr.mxu0 0.0
    %1534 = vmatpush1.msra.mxu0 0.0
    %1535 = vmatprep.subr.mxu0 0.0
    %1536 = vmatpush1.msra.mxu0 0.0
    %1537 = vmatprep.subr.mxu0 0.0
    %1538 = vmatpush1.msra.mxu0 0.0
    %1539 = vmatprep.subr.mxu0 0.0
    %1540 = vmatpush1.msra.mxu0 0.0
    %1541 = vmatprep.subr.mxu0 0.0
    %1542 = vmatpush1.msra.mxu0 0.0
    %1543 = vmatprep.subr.mxu0 0.0
    %1544 = vmatpush1.msra.mxu0 0.0
    %1545 = vmatprep.subr.mxu0 0.0
    %1546 = vmatpush1.msra.mxu0 0.0
    %1547 = vmatprep.subr.mxu0 0.0
    %1548 = vmatpush1.msra.mxu0 0.0
    %1549 = vmatprep.subr.mxu0 0.0
    %1550 = vmatpush1.msra.mxu0 0.0
    %1551 = vmatprep.subr.mxu0 0.0
    %1552 = vmatpush1.msra.mxu0 0.0
    %1553 = vmatprep.subr.mxu0 0.0
    %1554 = vmatpush1.msra.mxu0 0.0
    %1555 = vmatprep.subr.mxu0 0.0
    %1556 = vmatpush1.msra.mxu0 0.0
    %1557 = vmatprep.subr.mxu0 0.0
    %1558 = vmatpush1.msra.mxu0 0.0
    %1559 = vmatprep.subr.mxu0 0.0
    %1560 = vmatpush1.msra.mxu0 0.0
    %1561 = vmatprep.mubr.f32.mxu0 0.0
    %1562 = vmatmul.mubr.f32.gmra.mrb[0].mxu0 %v1495
    %v1563 = vpop.f32.mrb[0].mxu0
    %v1564 = vadd.f32 0.0, %v1563
    %v1565 = vpop.f32.mrb[0].mxu0
    %1566 = vdwg.mxu0
    %1567 = vst.msk [vmem:[#allocation2] sm:$0xff] %vm415, %v1421
    %1568 = vst.msk [vmem:[#allocation2 + $0x8] sm:$0xff] %vm415, %v1564
    %1569 = vrot.lane.b32.xlu0 %v225, 120
    %v1570 = vpop.permute.xlu0 %1569
    %1571 = vrot.lane.b32.xlu0 %v319, 120
    %v1572 = vpop.permute.xlu0 %1571
    %v1573 = vsel %vm415, %v1570, 0
    %v1575 = vsel %vm415, %v1572, 0
    %1577 = vmatprep.subr.mxu0 0.0
    %1578 = vmatpush1.xpose.msra.mxu0 %v1575
    %1579 = vmatprep.subr.mxu0 0.0
    %1580 = vmatpush1.xpose.msra.mxu0 0.0
    %1581 = vmatprep.subr.mxu0 0.0
    %1582 = vmatpush1.xpose.msra.mxu0 0.0
    %1583 = vmatprep.subr.mxu0 0.0
    %1584 = vmatpush1.xpose.msra.mxu0 0.0
    %1585 = vmatprep.subr.mxu0 0.0
    %1586 = vmatpush1.xpose.msra.mxu0 0.0
    %1587 = vmatprep.subr.mxu0 0.0
    %1588 = vmatpush1.xpose.msra.mxu0 0.0
    %1589 = vmatprep.subr.mxu0 0.0
    %1590 = vmatpush1.xpose.msra.mxu0 0.0
    %1591 = vmatprep.subr.mxu0 0.0
    %1592 = vmatpush1.xpose.msra.mxu0 0.0
    %1593 = vmatprep.subr.mxu0 0.0
    %1594 = vmatpush1.xpose.msra.mxu0 0.0
    %1595 = vmatprep.subr.mxu0 0.0
    %1596 = vmatpush1.xpose.msra.mxu0 0.0
    %1597 = vmatprep.subr.mxu0 0.0
    %1598 = vmatpush1.xpose.msra.mxu0 0.0
    %1599 = vmatprep.subr.mxu0 0.0
    %1600 = vmatpush1.xpose.msra.mxu0 0.0
    %1601 = vmatprep.subr.mxu0 0.0
    %1602 = vmatpush1.xpose.msra.mxu0 0.0
    %1603 = vmatprep.subr.mxu0 0.0
    %1604 = vmatpush1.xpose.msra.mxu0 0.0
    %1605 = vmatprep.subr.mxu0 0.0
    %1606 = vmatpush1.xpose.msra.mxu0 0.0
    %1607 = vmatprep.subr.mxu0 0.0
    %1608 = vmatpush1.xpose.msra.mxu0 0.0
    %1609 = vmatprep.subr.mxu0 0.0
    %1610 = vmatpush1.xpose.msra.mxu0 0.0
    %1611 = vmatprep.subr.mxu0 0.0
    %1612 = vmatpush1.xpose.msra.mxu0 0.0
    %1613 = vmatprep.subr.mxu0 0.0
    %1614 = vmatpush1.xpose.msra.mxu0 0.0
    %1615 = vmatprep.subr.mxu0 0.0
    %1616 = vmatpush1.xpose.msra.mxu0 0.0
    %1617 = vmatprep.subr.mxu0 0.0
    %1618 = vmatpush1.xpose.msra.mxu0 0.0
    %1619 = vmatprep.subr.mxu0 0.0
    %1620 = vmatpush1.xpose.msra.mxu0 0.0
    %1621 = vmatprep.subr.mxu0 0.0
    %1622 = vmatpush1.xpose.msra.mxu0 0.0
    %1623 = vmatprep.subr.mxu0 0.0
    %1624 = vmatpush1.xpose.msra.mxu0 0.0
    %1625 = vmatprep.subr.mxu0 0.0
    %1626 = vmatpush1.xpose.msra.mxu0 0.0
    %1627 = vmatprep.subr.mxu0 0.0
    %1628 = vmatpush1.xpose.msra.mxu0 0.0
    %1629 = vmatprep.subr.mxu0 0.0
    %1630 = vmatpush1.xpose.msra.mxu0 0.0
    %1631 = vmatprep.subr.mxu0 0.0
    %1632 = vmatpush1.xpose.msra.mxu0 0.0
    %1633 = vmatprep.subr.mxu0 0.0
    %1634 = vmatpush1.xpose.msra.mxu0 0.0
    %1635 = vmatprep.subr.mxu0 0.0
    %1636 = vmatpush1.xpose.msra.mxu0 0.0
    %1637 = vmatprep.subr.mxu0 0.0
    %1638 = vmatpush1.xpose.msra.mxu0 0.0
    %1639 = vmatprep.subr.mxu0 0.0
    %1640 = vmatpush1.xpose.msra.mxu0 0.0
    %1641 = vmatprep.mubr.f32.mxu0 0.0
    %1642 = vmatmul.mubr.f32.gmra.mrb[0].mxu0 %v1573
    %v1643 = vpop.f32.mrb[0].mxu0
    %v1644 = vadd.f32 0.0, %v1643
    %v1645 = vpop.f32.mrb[0].mxu0
    %1646 = vdwg.mxu0
    %1647 = vrot.lane.b32.xlu0 %v226, 120
    %v1648 = vpop.permute.xlu0 %1647
    %1649 = vrot.lane.b32.xlu0 %v320, 120
    %v1650 = vpop.permute.xlu0 %1649
    %v1651 = vsel %vm415, %v1648, 0
    %v1653 = vsel %vm415, %v1650, 0
    %1655 = vmatprep.subr.mxu0 0.0
    %1656 = vmatpush1.xpose.msra.mxu0 %v1653
    %1657 = vmatprep.subr.mxu0 0.0
    %1658 = vmatpush1.xpose.msra.mxu0 0.0
    %1659 = vmatprep.subr.mxu0 0.0
    %1660 = vmatpush1.xpose.msra.mxu0 0.0
    %1661 = vmatprep.subr.mxu0 0.0
    %1662 = vmatpush1.xpose.msra.mxu0 0.0
    %1663 = vmatprep.subr.mxu0 0.0
    %1664 = vmatpush1.xpose.msra.mxu0 0.0
    %1665 = vmatprep.subr.mxu0 0.0
    %1666 = vmatpush1.xpose.msra.mxu0 0.0
    %1667 = vmatprep.subr.mxu0 0.0
    %1668 = vmatpush1.xpose.msra.mxu0 0.0
    %1669 = vmatprep.subr.mxu0 0.0
    %1670 = vmatpush1.xpose.msra.mxu0 0.0
    %1671 = vmatprep.subr.mxu0 0.0
    %1672 = vmatpush1.xpose.msra.mxu0 0.0
    %1673 = vmatprep.subr.mxu0 0.0
    %1674 = vmatpush1.xpose.msra.mxu0 0.0
    %1675 = vmatprep.subr.mxu0 0.0
    %1676 = vmatpush1.xpose.msra.mxu0 0.0
    %1677 = vmatprep.subr.mxu0 0.0
    %1678 = vmatpush1.xpose.msra.mxu0 0.0
    %1679 = vmatprep.subr.mxu0 0.0
    %1680 = vmatpush1.xpose.msra.mxu0 0.0
    %1681 = vmatprep.subr.mxu0 0.0
    %1682 = vmatpush1.xpose.msra.mxu0 0.0
    %1683 = vmatprep.subr.mxu0 0.0
    %1684 = vmatpush1.xpose.msra.mxu0 0.0
    %1685 = vmatprep.subr.mxu0 0.0
    %1686 = vmatpush1.xpose.msra.mxu0 0.0
    %1687 = vmatprep.subr.mxu0 0.0
    %1688 = vmatpush1.xpose.msra.mxu0 0.0
    %1689 = vmatprep.subr.mxu0 0.0
    %1690 = vmatpush1.xpose.msra.mxu0 0.0
    %1691 = vmatprep.subr.mxu0 0.0
    %1692 = vmatpush1.xpose.msra.mxu0 0.0
    %1693 = vmatprep.subr.mxu0 0.0
    %1694 = vmatpush1.xpose.msra.mxu0 0.0
    %1695 = vmatprep.subr.mxu0 0.0
    %1696 = vmatpush1.xpose.msra.mxu0 0.0
    %1697 = vmatprep.subr.mxu0 0.0
    %1698 = vmatpush1.xpose.msra.mxu0 0.0
    %1699 = vmatprep.subr.mxu0 0.0
    %1700 = vmatpush1.xpose.msra.mxu0 0.0
    %1701 = vmatprep.subr.mxu0 0.0
    %1702 = vmatpush1.xpose.msra.mxu0 0.0
    %1703 = vmatprep.subr.mxu0 0.0
    %1704 = vmatpush1.xpose.msra.mxu0 0.0
    %1705 = vmatprep.subr.mxu0 0.0
    %1706 = vmatpush1.xpose.msra.mxu0 0.0
    %1707 = vmatprep.subr.mxu0 0.0
    %1708 = vmatpush1.xpose.msra.mxu0 0.0
    %1709 = vmatprep.subr.mxu0 0.0
    %1710 = vmatpush1.xpose.msra.mxu0 0.0
    %1711 = vmatprep.subr.mxu0 0.0
    %1712 = vmatpush1.xpose.msra.mxu0 0.0
    %1713 = vmatprep.subr.mxu0 0.0
    %1714 = vmatpush1.xpose.msra.mxu0 0.0
    %1715 = vmatprep.subr.mxu0 0.0
    %1716 = vmatpush1.xpose.msra.mxu0 0.0
    %1717 = vmatprep.subr.mxu0 0.0
    %1718 = vmatpush1.xpose.msra.mxu0 0.0
    %1719 = vmatprep.mubr.f32.mxu0 0.0
    %1720 = vmatmul.mubr.f32.gmra.mrb[0].mxu0 %v1651
    %v1721 = vpop.f32.mrb[0].mxu0
    %v1722 = vadd.f32 0.0, %v1721
    %v1723 = vpop.f32.mrb[0].mxu0
    %1724 = vdwg.mxu0
    %v1725 = vmul.f32 %v1644, 0.35355338
    %v1726 = vmul.f32 %v1722, 0.35355338
    %v1729 = vsel %vm415, %v1572, 0.0
    %1730 = vadd.xlane.f32.xlu0 %v1729
    %v1731 = vpop.xlane.xlu0 %1730
    %v1732 = vsel %vm415, %v1650, 0.0
    %1733 = vadd.xlane.f32.xlu0 %v1732
    %v1734 = vpop.xlane.xlu0 %1733
    %vm1735 = vcmp.eq.f32.partialorder %v1731, 0.0
    %vm1736 = vcmp.eq.f32.partialorder %v1734, 0.0
    %v1737 = vsel %vm1735, 1, 0
    %v1738 = vsel %vm1736, 1, 0
    %vm1739 = vcmp.eq.s32.totalorder %v1737, 1
    %vm1740 = vcmp.eq.s32.totalorder %v1738, 1
    %v1743 = vlaneseq
    %v1744 = vshrl.u32 %v1743, 7
    %v1745 = vsub.s32 0, %v1744
    %v1746 = vrot.slane %v1725, %v1745
    %1748 = vbcast.lane.b32.xlu0 %v1746, 256
    %v1749 = vpop.permute.xlu0 %1748
    %v1750 = vlaneseq
    %v1751 = vshrl.u32 %v1750, 7
    %v1752 = vsub.s32 1, %v1751
    %v1753 = vrot.slane %v1725, %v1752
    %1755 = vbcast.lane.b32.xlu0 %v1753, 256
    %v1756 = vpop.permute.xlu0 %1755
    %v1757 = vlaneseq
    %v1758 = vshrl.u32 %v1757, 7
    %v1759 = vsub.s32 2, %v1758
    %v1760 = vrot.slane %v1725, %v1759
    %1762 = vbcast.lane.b32.xlu0 %v1760, 256
    %v1763 = vpop.permute.xlu0 %1762
    %v1764 = vlaneseq
    %v1765 = vshrl.u32 %v1764, 7
    %v1766 = vsub.s32 3, %v1765
    %v1767 = vrot.slane %v1725, %v1766
    %1769 = vbcast.lane.b32.xlu0 %v1767, 256
    %v1770 = vpop.permute.xlu0 %1769
    %v1771 = vlaneseq
    %v1772 = vshrl.u32 %v1771, 7
    %v1773 = vsub.s32 4, %v1772
    %v1774 = vrot.slane %v1725, %v1773
    %1776 = vbcast.lane.b32.xlu0 %v1774, 256
    %v1777 = vpop.permute.xlu0 %1776
    %v1778 = vlaneseq
    %v1779 = vshrl.u32 %v1778, 7
    %v1780 = vsub.s32 5, %v1779
    %v1781 = vrot.slane %v1725, %v1780
    %1783 = vbcast.lane.b32.xlu0 %v1781, 256
    %v1784 = vpop.permute.xlu0 %1783
    %v1785 = vlaneseq
    %v1786 = vshrl.u32 %v1785, 7
    %v1787 = vsub.s32 6, %v1786
    %v1788 = vrot.slane %v1725, %v1787
    %1790 = vbcast.lane.b32.xlu0 %v1788, 256
    %v1791 = vpop.permute.xlu0 %1790
    %v1792 = vlaneseq
    %v1793 = vshrl.u32 %v1792, 7
    %v1794 = vsub.s32 7, %v1793
    %v1795 = vrot.slane %v1725, %v1794
    %1797 = vbcast.lane.b32.xlu0 %v1795, 256
    %v1798 = vpop.permute.xlu0 %1797
    %v1799 = vlaneseq
    %v1800 = vshrl.u32 %v1799, 7
    %v1801 = vsub.s32 0, %v1800
    %v1802 = vrot.slane %v1726, %v1801
    %1804 = vbcast.lane.b32.xlu0 %v1802, 256
    %v1805 = vpop.permute.xlu0 %1804
    %v1806 = vlaneseq
    %v1807 = vshrl.u32 %v1806, 7
    %v1808 = vsub.s32 1, %v1807
    %v1809 = vrot.slane %v1726, %v1808
    %1811 = vbcast.lane.b32.xlu0 %v1809, 256
    %v1812 = vpop.permute.xlu0 %1811
    %v1813 = vlaneseq
    %v1814 = vshrl.u32 %v1813, 7
    %v1815 = vsub.s32 2, %v1814
    %v1816 = vrot.slane %v1726, %v1815
    %1818 = vbcast.lane.b32.xlu0 %v1816, 256
    %v1819 = vpop.permute.xlu0 %1818
    %v1820 = vlaneseq
    %v1821 = vshrl.u32 %v1820, 7
    %v1822 = vsub.s32 3, %v1821
    %v1823 = vrot.slane %v1726, %v1822
    %1825 = vbcast.lane.b32.xlu0 %v1823, 256
    %v1826 = vpop.permute.xlu0 %1825
    %v1827 = vlaneseq
    %v1828 = vshrl.u32 %v1827, 7
    %v1829 = vsub.s32 4, %v1828
    %v1830 = vrot.slane %v1726, %v1829
    %1832 = vbcast.lane.b32.xlu0 %v1830, 256
    %v1833 = vpop.permute.xlu0 %1832
    %v1834 = vlaneseq
    %v1835 = vshrl.u32 %v1834, 7
    %v1836 = vsub.s32 5, %v1835
    %v1837 = vrot.slane %v1726, %v1836
    %1839 = vbcast.lane.b32.xlu0 %v1837, 256
    %v1840 = vpop.permute.xlu0 %1839
    %v1841 = vlaneseq
    %v1842 = vshrl.u32 %v1841, 7
    %v1843 = vsub.s32 6, %v1842
    %v1844 = vrot.slane %v1726, %v1843
    %1846 = vbcast.lane.b32.xlu0 %v1844, 256
    %v1847 = vpop.permute.xlu0 %1846
    %v1848 = vlaneseq
    %v1849 = vshrl.u32 %v1848, 7
    %v1850 = vsub.s32 7, %v1849
    %v1851 = vrot.slane %v1726, %v1850
    %1853 = vbcast.lane.b32.xlu0 %v1851, 256
    %v1854 = vpop.permute.xlu0 %1853
    %v1871 = vsel %vm1739, -4.2949673e+09, %v1749
    %v1872 = vsel %vm1739, -4.2949673e+09, %v1756
    %v1873 = vsel %vm1739, -4.2949673e+09, %v1763
    %v1874 = vsel %vm1739, -4.2949673e+09, %v1770
    %v1875 = vsel %vm1739, -4.2949673e+09, %v1777
    %v1876 = vsel %vm1739, -4.2949673e+09, %v1784
    %v1877 = vsel %vm1739, -4.2949673e+09, %v1791
    %v1878 = vsel %vm1739, -4.2949673e+09, %v1798
    %v1879 = vsel %vm1740, -4.2949673e+09, %v1805
    %v1880 = vsel %vm1740, -4.2949673e+09, %v1812
    %v1881 = vsel %vm1740, -4.2949673e+09, %v1819
    %v1882 = vsel %vm1740, -4.2949673e+09, %v1826
    %v1883 = vsel %vm1740, -4.2949673e+09, %v1833
    %v1884 = vsel %vm1740, -4.2949673e+09, %v1840
    %v1885 = vsel %vm1740, -4.2949673e+09, %v1847
    %v1886 = vsel %vm1740, -4.2949673e+09, %v1854
    %1903 = vset.pattern.permute.xlu0 0
    %1904 = vperm.xlu0 %1903, %v1871
    %v1905 = vpop.permute.xlu0 %1904
    %1906 = vset.pattern.permute.xlu0 0
    %1907 = vperm.xlu0 %1906, %v1872
    %v1908 = vpop.permute.xlu0 %1907
    %1909 = vset.pattern.permute.xlu0 0
    %1910 = vperm.xlu0 %1909, %v1873
    %v1911 = vpop.permute.xlu0 %1910
    %1912 = vset.pattern.permute.xlu0 0
    %1913 = vperm.xlu0 %1912, %v1874
    %v1914 = vpop.permute.xlu0 %1913
    %1915 = vset.pattern.permute.xlu0 0
    %1916 = vperm.xlu0 %1915, %v1875
    %v1917 = vpop.permute.xlu0 %1916
    %1918 = vset.pattern.permute.xlu0 0
    %1919 = vperm.xlu0 %1918, %v1876
    %v1920 = vpop.permute.xlu0 %1919
    %1921 = vset.pattern.permute.xlu0 0
    %1922 = vperm.xlu0 %1921, %v1877
    %v1923 = vpop.permute.xlu0 %1922
    %1924 = vset.pattern.permute.xlu0 0
    %1925 = vperm.xlu0 %1924, %v1878
    %v1926 = vpop.permute.xlu0 %1925
    %1927 = vset.pattern.permute.xlu0 0
    %1928 = vperm.xlu0 %1927, %v1879
    %v1929 = vpop.permute.xlu0 %1928
    %1930 = vset.pattern.permute.xlu0 0
    %1931 = vperm.xlu0 %1930, %v1880
    %v1932 = vpop.permute.xlu0 %1931
    %1933 = vset.pattern.permute.xlu0 0
    %1934 = vperm.xlu0 %1933, %v1881
    %v1935 = vpop.permute.xlu0 %1934
    %1936 = vset.pattern.permute.xlu0 0
    %1937 = vperm.xlu0 %1936, %v1882
    %v1938 = vpop.permute.xlu0 %1937
    %1939 = vset.pattern.permute.xlu0 0
    %1940 = vperm.xlu0 %1939, %v1883
    %v1941 = vpop.permute.xlu0 %1940
    %1942 = vset.pattern.permute.xlu0 0
    %1943 = vperm.xlu0 %1942, %v1884
    %v1944 = vpop.permute.xlu0 %1943
    %1945 = vset.pattern.permute.xlu0 0
    %1946 = vperm.xlu0 %1945, %v1885
    %v1947 = vpop.permute.xlu0 %1946
    %1948 = vset.pattern.permute.xlu0 0
    %1949 = vperm.xlu0 %1948, %v1886
    %v1950 = vpop.permute.xlu0 %1949
    %v1951 = vlaneseq
    %v1952 = vshrl.u32 %v1951, 7
    %v1953 = vsub.s32 %v793, %v1952
    %v1954 = vrot.slane %v1905, %v1953
    %v1955 = vlaneseq
    %v1956 = vshrl.u32 %v1955, 7
    %v1957 = vsub.s32 %v793, %v1956
    %v1958 = vrot.slane %v1908, %v1957
    %v1959 = vlaneseq
    %v1960 = vshrl.u32 %v1959, 7
    %v1961 = vsub.s32 %v793, %v1960
    %v1962 = vrot.slane %v1911, %v1961
    %v1963 = vlaneseq
    %v1964 = vshrl.u32 %v1963, 7
    %v1965 = vsub.s32 %v793, %v1964
    %v1966 = vrot.slane %v1914, %v1965
    %v1967 = vlaneseq
    %v1968 = vshrl.u32 %v1967, 7
    %v1969 = vsub.s32 %v793, %v1968
    %v1970 = vrot.slane %v1917, %v1969
    %v1971 = vlaneseq
    %v1972 = vshrl.u32 %v1971, 7
    %v1973 = vsub.s32 %v793, %v1972
    %v1974 = vrot.slane %v1920, %v1973
    %v1975 = vlaneseq
    %v1976 = vshrl.u32 %v1975, 7
    %v1977 = vsub.s32 %v793, %v1976
    %v1978 = vrot.slane %v1923, %v1977
    %v1979 = vlaneseq
    %v1980 = vshrl.u32 %v1979, 7
    %v1981 = vsub.s32 %v793, %v1980
    %v1982 = vrot.slane %v1926, %v1981
    %v1983 = vlaneseq
    %v1984 = vshrl.u32 %v1983, 7
    %v1985 = vsub.s32 %v793, %v1984
    %v1986 = vrot.slane %v1929, %v1985
    %v1987 = vlaneseq
    %v1988 = vshrl.u32 %v1987, 7
    %v1989 = vsub.s32 %v793, %v1988
    %v1990 = vrot.slane %v1932, %v1989
    %v1991 = vlaneseq
    %v1992 = vshrl.u32 %v1991, 7
    %v1993 = vsub.s32 %v793, %v1992
    %v1994 = vrot.slane %v1935, %v1993
    %v1995 = vlaneseq
    %v1996 = vshrl.u32 %v1995, 7
    %v1997 = vsub.s32 %v793, %v1996
    %v1998 = vrot.slane %v1938, %v1997
    %v1999 = vlaneseq
    %v2000 = vshrl.u32 %v1999, 7
    %v2001 = vsub.s32 %v793, %v2000
    %v2002 = vrot.slane %v1941, %v2001
    %v2003 = vlaneseq
    %v2004 = vshrl.u32 %v2003, 7
    %v2005 = vsub.s32 %v793, %v2004
    %v2006 = vrot.slane %v1944, %v2005
    %v2007 = vlaneseq
    %v2008 = vshrl.u32 %v2007, 7
    %v2009 = vsub.s32 %v793, %v2008
    %v2010 = vrot.slane %v1947, %v2009
    %v2011 = vlaneseq
    %v2012 = vshrl.u32 %v2011, 7
    %v2013 = vsub.s32 %v793, %v2012
    %v2014 = vrot.slane %v1950, %v2013
    %v2015 = vsel %vm858, %v1958, %v1954
    %v2016 = vsel %vm860, %v1962, %v2015
    %v2017 = vsel %vm862, %v1966, %v2016
    %v2018 = vsel %vm864, %v1970, %v2017
    %v2019 = vsel %vm866, %v1974, %v2018
    %v2020 = vsel %vm868, %v1978, %v2019
    %v2021 = vsel %vm870, %v1982, %v2020
    %v2022 = vsel %vm858, %v1990, %v1986
    %v2023 = vsel %vm860, %v1994, %v2022
    %v2024 = vsel %vm862, %v1998, %v2023
    %v2025 = vsel %vm864, %v2002, %v2024
    %v2026 = vsel %vm866, %v2006, %v2025
    %v2027 = vsel %vm868, %v2010, %v2026
    %v2028 = vsel %vm870, %v2014, %v2027
    %v2031 = vsel %vm415, %v2021, -inf
    %2032 = vmax.xlane.f32.xlu0 %v2031
    %v2033 = vpop.xlane.xlu0 %2032
    %v2034 = vsel %vm415, %v2028, -inf
    %2035 = vmax.xlane.f32.xlu0 %v2034
    %v2036 = vpop.xlane.xlu0 %2035
    %v2039 = vlaneseq
    %v2040 = vshrl.u32 %v2039, 7
    %v2041 = vsub.s32 0, %v2040
    %v2042 = vrot.slane %v2033, %v2041
    %v2043 = vlaneseq
    %v2044 = vshrl.u32 %v2043, 7
    %v2045 = vsub.s32 1, %v2044
    %v2046 = vrot.slane %v2033, %v2045
    %v2047 = vlaneseq
    %v2048 = vshrl.u32 %v2047, 7
    %v2049 = vsub.s32 2, %v2048
    %v2050 = vrot.slane %v2033, %v2049
    %v2051 = vlaneseq
    %v2052 = vshrl.u32 %v2051, 7
    %v2053 = vsub.s32 3, %v2052
    %v2054 = vrot.slane %v2033, %v2053
    %v2055 = vlaneseq
    %v2056 = vshrl.u32 %v2055, 7
    %v2057 = vsub.s32 4, %v2056
    %v2058 = vrot.slane %v2033, %v2057
    %v2059 = vlaneseq
    %v2060 = vshrl.u32 %v2059, 7
    %v2061 = vsub.s32 5, %v2060
    %v2062 = vrot.slane %v2033, %v2061
    %v2063 = vlaneseq
    %v2064 = vshrl.u32 %v2063, 7
    %v2065 = vsub.s32 6, %v2064
    %v2066 = vrot.slane %v2033, %v2065
    %v2067 = vlaneseq
    %v2068 = vshrl.u32 %v2067, 7
    %v2069 = vsub.s32 7, %v2068
    %v2070 = vrot.slane %v2033, %v2069
    %v2071 = vlaneseq
    %v2072 = vshrl.u32 %v2071, 7
    %v2073 = vsub.s32 0, %v2072
    %v2074 = vrot.slane %v2036, %v2073
    %v2075 = vlaneseq
    %v2076 = vshrl.u32 %v2075, 7
    %v2077 = vsub.s32 1, %v2076
    %v2078 = vrot.slane %v2036, %v2077
    %v2079 = vlaneseq
    %v2080 = vshrl.u32 %v2079, 7
    %v2081 = vsub.s32 2, %v2080
    %v2082 = vrot.slane %v2036, %v2081
    %v2083 = vlaneseq
    %v2084 = vshrl.u32 %v2083, 7
    %v2085 = vsub.s32 3, %v2084
    %v2086 = vrot.slane %v2036, %v2085
    %v2087 = vlaneseq
    %v2088 = vshrl.u32 %v2087, 7
    %v2089 = vsub.s32 4, %v2088
    %v2090 = vrot.slane %v2036, %v2089
    %v2091 = vlaneseq
    %v2092 = vshrl.u32 %v2091, 7
    %v2093 = vsub.s32 5, %v2092
    %v2094 = vrot.slane %v2036, %v2093
    %v2095 = vlaneseq
    %v2096 = vshrl.u32 %v2095, 7
    %v2097 = vsub.s32 6, %v2096
    %v2098 = vrot.slane %v2036, %v2097
    %v2099 = vlaneseq
    %v2100 = vshrl.u32 %v2099, 7
    %v2101 = vsub.s32 7, %v2100
    %v2102 = vrot.slane %v2036, %v2101
    %v2119 = vsub.f32 %v1871, %v2042
    %v2120 = vsub.f32 %v1872, %v2046
    %v2121 = vsub.f32 %v1873, %v2050
    %v2122 = vsub.f32 %v1874, %v2054
    %v2123 = vsub.f32 %v1875, %v2058
    %v2124 = vsub.f32 %v1876, %v2062
    %v2125 = vsub.f32 %v1877, %v2066
    %v2126 = vsub.f32 %v1878, %v2070
    %v2127 = vsub.f32 %v1879, %v2074
    %v2128 = vsub.f32 %v1880, %v2078
    %v2129 = vsub.f32 %v1881, %v2082
    %v2130 = vsub.f32 %v1882, %v2086
    %v2131 = vsub.f32 %v1883, %v2090
    %v2132 = vsub.f32 %v1884, %v2094
    %v2133 = vsub.f32 %v1885, %v2098
    %v2134 = vsub.f32 %v1886, %v2102
    %v2135 = vmul.f32 %v2119, 1.442695
    %v2136 = vpow.pop %v2135
    %v2137 = vmul.f32 %v2120, 1.442695
    %v2138 = vpow.pop %v2137
    %v2139 = vmul.f32 %v2121, 1.442695
    %v2140 = vpow.pop %v2139
    %v2141 = vmul.f32 %v2122, 1.442695
    %v2142 = vpow.pop %v2141
    %v2143 = vmul.f32 %v2123, 1.442695
    %v2144 = vpow.pop %v2143
    %v2145 = vmul.f32 %v2124, 1.442695
    %v2146 = vpow.pop %v2145
    %v2147 = vmul.f32 %v2125, 1.442695
    %v2148 = vpow.pop %v2147
    %v2149 = vmul.f32 %v2126, 1.442695
    %v2150 = vpow.pop %v2149
    %v2151 = vmul.f32 %v2127, 1.442695
    %v2152 = vpow.pop %v2151
    %v2153 = vmul.f32 %v2128, 1.442695
    %v2154 = vpow.pop %v2153
    %v2155 = vmul.f32 %v2129, 1.442695
    %v2156 = vpow.pop %v2155
    %v2157 = vmul.f32 %v2130, 1.442695
    %v2158 = vpow.pop %v2157
    %v2159 = vmul.f32 %v2131, 1.442695
    %v2160 = vpow.pop %v2159
    %v2161 = vmul.f32 %v2132, 1.442695
    %v2162 = vpow.pop %v2161
    %v2163 = vmul.f32 %v2133, 1.442695
    %v2164 = vpow.pop %v2163
    %v2165 = vmul.f32 %v2134, 1.442695
    %v2166 = vpow.pop %v2165
    %2183 = vset.pattern.permute.xlu0 0
    %2184 = vperm.xlu0 %2183, %v2136
    %v2185 = vpop.permute.xlu0 %2184
    %2186 = vset.pattern.permute.xlu0 0
    %2187 = vperm.xlu0 %2186, %v2138
    %v2188 = vpop.permute.xlu0 %2187
    %2189 = vset.pattern.permute.xlu0 0
    %2190 = vperm.xlu0 %2189, %v2140
    %v2191 = vpop.permute.xlu0 %2190
    %2192 = vset.pattern.permute.xlu0 0
    %2193 = vperm.xlu0 %2192, %v2142
    %v2194 = vpop.permute.xlu0 %2193
    %2195 = vset.pattern.permute.xlu0 0
    %2196 = vperm.xlu0 %2195, %v2144
    %v2197 = vpop.permute.xlu0 %2196
    %2198 = vset.pattern.permute.xlu0 0
    %2199 = vperm.xlu0 %2198, %v2146
    %v2200 = vpop.permute.xlu0 %2199
    %2201 = vset.pattern.permute.xlu0 0
    %2202 = vperm.xlu0 %2201, %v2148
    %v2203 = vpop.permute.xlu0 %2202
    %2204 = vset.pattern.permute.xlu0 0
    %2205 = vperm.xlu0 %2204, %v2150
    %v2206 = vpop.permute.xlu0 %2205
    %2207 = vset.pattern.permute.xlu0 0
    %2208 = vperm.xlu0 %2207, %v2152
    %v2209 = vpop.permute.xlu0 %2208
    %2210 = vset.pattern.permute.xlu0 0
    %2211 = vperm.xlu0 %2210, %v2154
    %v2212 = vpop.permute.xlu0 %2211
    %2213 = vset.pattern.permute.xlu0 0
    %2214 = vperm.xlu0 %2213, %v2156
    %v2215 = vpop.permute.xlu0 %2214
    %2216 = vset.pattern.permute.xlu0 0
    %2217 = vperm.xlu0 %2216, %v2158
    %v2218 = vpop.permute.xlu0 %2217
    %2219 = vset.pattern.permute.xlu0 0
    %2220 = vperm.xlu0 %2219, %v2160
    %v2221 = vpop.permute.xlu0 %2220
    %2222 = vset.pattern.permute.xlu0 0
    %2223 = vperm.xlu0 %2222, %v2162
    %v2224 = vpop.permute.xlu0 %2223
    %2225 = vset.pattern.permute.xlu0 0
    %2226 = vperm.xlu0 %2225, %v2164
    %v2227 = vpop.permute.xlu0 %2226
    %2228 = vset.pattern.permute.xlu0 0
    %2229 = vperm.xlu0 %2228, %v2166
    %v2230 = vpop.permute.xlu0 %2229
    %v2231 = vlaneseq
    %v2232 = vshrl.u32 %v2231, 7
    %v2233 = vsub.s32 %v793, %v2232
    %v2234 = vrot.slane %v2185, %v2233
    %v2235 = vlaneseq
    %v2236 = vshrl.u32 %v2235, 7
    %v2237 = vsub.s32 %v793, %v2236
    %v2238 = vrot.slane %v2188, %v2237
    %v2239 = vlaneseq
    %v2240 = vshrl.u32 %v2239, 7
    %v2241 = vsub.s32 %v793, %v2240
    %v2242 = vrot.slane %v2191, %v2241
    %v2243 = vlaneseq
    %v2244 = vshrl.u32 %v2243, 7
    %v2245 = vsub.s32 %v793, %v2244
    %v2246 = vrot.slane %v2194, %v2245
    %v2247 = vlaneseq
    %v2248 = vshrl.u32 %v2247, 7
    %v2249 = vsub.s32 %v793, %v2248
    %v2250 = vrot.slane %v2197, %v2249
    %v2251 = vlaneseq
    %v2252 = vshrl.u32 %v2251, 7
    %v2253 = vsub.s32 %v793, %v2252
    %v2254 = vrot.slane %v2200, %v2253
    %v2255 = vlaneseq
    %v2256 = vshrl.u32 %v2255, 7
    %v2257 = vsub.s32 %v793, %v2256
    %v2258 = vrot.slane %v2203, %v2257
    %v2259 = vlaneseq
    %v2260 = vshrl.u32 %v2259, 7
    %v2261 = vsub.s32 %v793, %v2260
    %v2262 = vrot.slane %v2206, %v2261
    %v2263 = vlaneseq
    %v2264 = vshrl.u32 %v2263, 7
    %v2265 = vsub.s32 %v793, %v2264
    %v2266 = vrot.slane %v2209, %v2265
    %v2267 = vlaneseq
    %v2268 = vshrl.u32 %v2267, 7
    %v2269 = vsub.s32 %v793, %v2268
    %v2270 = vrot.slane %v2212, %v2269
    %v2271 = vlaneseq
    %v2272 = vshrl.u32 %v2271, 7
    %v2273 = vsub.s32 %v793, %v2272
    %v2274 = vrot.slane %v2215, %v2273
    %v2275 = vlaneseq
    %v2276 = vshrl.u32 %v2275, 7
    %v2277 = vsub.s32 %v793, %v2276
    %v2278 = vrot.slane %v2218, %v2277
    %v2279 = vlaneseq
    %v2280 = vshrl.u32 %v2279, 7
    %v2281 = vsub.s32 %v793, %v2280
    %v2282 = vrot.slane %v2221, %v2281
    %v2283 = vlaneseq
    %v2284 = vshrl.u32 %v2283, 7
    %v2285 = vsub.s32 %v793, %v2284
    %v2286 = vrot.slane %v2224, %v2285
    %v2287 = vlaneseq
    %v2288 = vshrl.u32 %v2287, 7
    %v2289 = vsub.s32 %v793, %v2288
    %v2290 = vrot.slane %v2227, %v2289
    %v2291 = vlaneseq
    %v2292 = vshrl.u32 %v2291, 7
    %v2293 = vsub.s32 %v793, %v2292
    %v2294 = vrot.slane %v2230, %v2293
    %v2295 = vsel %vm858, %v2238, %v2234
    %v2296 = vsel %vm860, %v2242, %v2295
    %v2297 = vsel %vm862, %v2246, %v2296
    %v2298 = vsel %vm864, %v2250, %v2297
    %v2299 = vsel %vm866, %v2254, %v2298
    %v2300 = vsel %vm868, %v2258, %v2299
    %v2301 = vsel %vm870, %v2262, %v2300
    %v2302 = vsel %vm858, %v2270, %v2266
    %v2303 = vsel %vm860, %v2274, %v2302
    %v2304 = vsel %vm862, %v2278, %v2303
    %v2305 = vsel %vm864, %v2282, %v2304
    %v2306 = vsel %vm866, %v2286, %v2305
    %v2307 = vsel %vm868, %v2290, %v2306
    %v2308 = vsel %vm870, %v2294, %v2307
    %v2311 = vsel %vm415, %v2301, 0.0
    %2312 = vadd.xlane.f32.xlu0 %v2311
    %v2313 = vpop.xlane.xlu0 %2312
    %v2314 = vsel %vm415, %v2308, 0.0
    %2315 = vadd.xlane.f32.xlu0 %v2314
    %v2316 = vpop.xlane.xlu0 %2315
    %v2319 = vlaneseq
    %v2320 = vshrl.u32 %v2319, 7
    %v2321 = vsub.s32 0, %v2320
    %v2322 = vrot.slane %v2313, %v2321
    %v2323 = vlaneseq
    %v2324 = vshrl.u32 %v2323, 7
    %v2325 = vsub.s32 1, %v2324
    %v2326 = vrot.slane %v2313, %v2325
    %v2327 = vlaneseq
    %v2328 = vshrl.u32 %v2327, 7
    %v2329 = vsub.s32 2, %v2328
    %v2330 = vrot.slane %v2313, %v2329
    %v2331 = vlaneseq
    %v2332 = vshrl.u32 %v2331, 7
    %v2333 = vsub.s32 3, %v2332
    %v2334 = vrot.slane %v2313, %v2333
    %v2335 = vlaneseq
    %v2336 = vshrl.u32 %v2335, 7
    %v2337 = vsub.s32 4, %v2336
    %v2338 = vrot.slane %v2313, %v2337
    %v2339 = vlaneseq
    %v2340 = vshrl.u32 %v2339, 7
    %v2341 = vsub.s32 5, %v2340
    %v2342 = vrot.slane %v2313, %v2341
    %v2343 = vlaneseq
    %v2344 = vshrl.u32 %v2343, 7
    %v2345 = vsub.s32 6, %v2344
    %v2346 = vrot.slane %v2313, %v2345
    %v2347 = vlaneseq
    %v2348 = vshrl.u32 %v2347, 7
    %v2349 = vsub.s32 7, %v2348
    %v2350 = vrot.slane %v2313, %v2349
    %v2351 = vlaneseq
    %v2352 = vshrl.u32 %v2351, 7
    %v2353 = vsub.s32 0, %v2352
    %v2354 = vrot.slane %v2316, %v2353
    %v2355 = vlaneseq
    %v2356 = vshrl.u32 %v2355, 7
    %v2357 = vsub.s32 1, %v2356
    %v2358 = vrot.slane %v2316, %v2357
    %v2359 = vlaneseq
    %v2360 = vshrl.u32 %v2359, 7
    %v2361 = vsub.s32 2, %v2360
    %v2362 = vrot.slane %v2316, %v2361
    %v2363 = vlaneseq
    %v2364 = vshrl.u32 %v2363, 7
    %v2365 = vsub.s32 3, %v2364
    %v2366 = vrot.slane %v2316, %v2365
    %v2367 = vlaneseq
    %v2368 = vshrl.u32 %v2367, 7
    %v2369 = vsub.s32 4, %v2368
    %v2370 = vrot.slane %v2316, %v2369
    %v2371 = vlaneseq
    %v2372 = vshrl.u32 %v2371, 7
    %v2373 = vsub.s32 5, %v2372
    %v2374 = vrot.slane %v2316, %v2373
    %v2375 = vlaneseq
    %v2376 = vshrl.u32 %v2375, 7
    %v2377 = vsub.s32 6, %v2376
    %v2378 = vrot.slane %v2316, %v2377
    %v2379 = vlaneseq
    %v2380 = vshrl.u32 %v2379, 7
    %v2381 = vsub.s32 7, %v2380
    %v2382 = vrot.slane %v2316, %v2381
    %v2399 = vrcp.pop %v2322
    %v2400 = vmul.f32 %v2136, %v2399
    %v2401 = vrcp.pop %v2326
    %v2402 = vmul.f32 %v2138, %v2401
    %v2403 = vrcp.pop %v2330
    %v2404 = vmul.f32 %v2140, %v2403
    %v2405 = vrcp.pop %v2334
    %v2406 = vmul.f32 %v2142, %v2405
    %v2407 = vrcp.pop %v2338
    %v2408 = vmul.f32 %v2144, %v2407
    %v2409 = vrcp.pop %v2342
    %v2410 = vmul.f32 %v2146, %v2409
    %v2411 = vrcp.pop %v2346
    %v2412 = vmul.f32 %v2148, %v2411
    %v2413 = vrcp.pop %v2350
    %v2414 = vmul.f32 %v2150, %v2413
    %v2415 = vrcp.pop %v2354
    %v2416 = vmul.f32 %v2152, %v2415
    %v2417 = vrcp.pop %v2358
    %v2418 = vmul.f32 %v2154, %v2417
    %v2419 = vrcp.pop %v2362
    %v2420 = vmul.f32 %v2156, %v2419
    %v2421 = vrcp.pop %v2366
    %v2422 = vmul.f32 %v2158, %v2421
    %v2423 = vrcp.pop %v2370
    %v2424 = vmul.f32 %v2160, %v2423
    %v2425 = vrcp.pop %v2374
    %v2426 = vmul.f32 %v2162, %v2425
    %v2427 = vrcp.pop %v2378
    %v2428 = vmul.f32 %v2164, %v2427
    %v2429 = vrcp.pop %v2382
    %v2430 = vmul.f32 %v2166, %v2429
    %2439 = vset.pattern.permute.xlu0 0
    %2440 = vperm.xlu0 %2439, %v2400
    %v2441 = vpop.permute.xlu0 %2440
    %2442 = vset.pattern.permute.xlu0 0
    %2443 = vperm.xlu0 %2442, %v2402
    %v2444 = vpop.permute.xlu0 %2443
    %2445 = vset.pattern.permute.xlu0 0
    %2446 = vperm.xlu0 %2445, %v2404
    %v2447 = vpop.permute.xlu0 %2446
    %2448 = vset.pattern.permute.xlu0 0
    %2449 = vperm.xlu0 %2448, %v2406
    %v2450 = vpop.permute.xlu0 %2449
    %2451 = vset.pattern.permute.xlu0 0
    %2452 = vperm.xlu0 %2451, %v2408
    %v2453 = vpop.permute.xlu0 %2452
    %2454 = vset.pattern.permute.xlu0 0
    %2455 = vperm.xlu0 %2454, %v2410
    %v2456 = vpop.permute.xlu0 %2455
    %2457 = vset.pattern.permute.xlu0 0
    %2458 = vperm.xlu0 %2457, %v2412
    %v2459 = vpop.permute.xlu0 %2458
    %2460 = vset.pattern.permute.xlu0 0
    %2461 = vperm.xlu0 %2460, %v2414
    %v2462 = vpop.permute.xlu0 %2461
    %v2463 = vlaneseq
    %v2464 = vshrl.u32 %v2463, 7
    %v2465 = vsub.s32 %v793, %v2464
    %v2466 = vrot.slane %v2441, %v2465
    %v2467 = vlaneseq
    %v2468 = vshrl.u32 %v2467, 7
    %v2469 = vsub.s32 %v793, %v2468
    %v2470 = vrot.slane %v2444, %v2469
    %v2471 = vlaneseq
    %v2472 = vshrl.u32 %v2471, 7
    %v2473 = vsub.s32 %v793, %v2472
    %v2474 = vrot.slane %v2447, %v2473
    %v2475 = vlaneseq
    %v2476 = vshrl.u32 %v2475, 7
    %v2477 = vsub.s32 %v793, %v2476
    %v2478 = vrot.slane %v2450, %v2477
    %v2479 = vlaneseq
    %v2480 = vshrl.u32 %v2479, 7
    %v2481 = vsub.s32 %v793, %v2480
    %v2482 = vrot.slane %v2453, %v2481
    %v2483 = vlaneseq
    %v2484 = vshrl.u32 %v2483, 7
    %v2485 = vsub.s32 %v793, %v2484
    %v2486 = vrot.slane %v2456, %v2485
    %v2487 = vlaneseq
    %v2488 = vshrl.u32 %v2487, 7
    %v2489 = vsub.s32 %v793, %v2488
    %v2490 = vrot.slane %v2459, %v2489
    %v2491 = vlaneseq
    %v2492 = vshrl.u32 %v2491, 7
    %v2493 = vsub.s32 %v793, %v2492
    %v2494 = vrot.slane %v2462, %v2493
    %v2495 = vsel %vm858, %v2470, %v2466
    %v2496 = vsel %vm860, %v2474, %v2495
    %v2497 = vsel %vm862, %v2478, %v2496
    %v2498 = vsel %vm864, %v2482, %v2497
    %v2499 = vsel %vm866, %v2486, %v2498
    %v2500 = vsel %vm868, %v2490, %v2499
    %v2501 = vsel %vm870, %v2494, %v2500
    %2503 = vrot.lane.b32.xlu0 %v413, 120
    %v2504 = vpop.permute.xlu0 %2503
    %v2506 = vsel %vm415, %v2501, 0
    %2508 = vmatprep.subr.mxu0 0.0
    %2509 = vmatpush1.msra.mxu0 %v2504
    %2510 = vmatprep.subr.mxu0 0.0
    %2511 = vmatpush1.msra.mxu0 0.0
    %2512 = vmatprep.subr.mxu0 0.0
    %2513 = vmatpush1.msra.mxu0 0.0
    %2514 = vmatprep.subr.mxu0 0.0
    %2515 = vmatpush1.msra.mxu0 0.0
    %2516 = vmatprep.subr.mxu0 0.0
    %2517 = vmatpush1.msra.mxu0 0.0
    %2518 = vmatprep.subr.mxu0 0.0
    %2519 = vmatpush1.msra.mxu0 0.0
    %2520 = vmatprep.subr.mxu0 0.0
    %2521 = vmatpush1.msra.mxu0 0.0
    %2522 = vmatprep.subr.mxu0 0.0
    %2523 = vmatpush1.msra.mxu0 0.0
    %2524 = vmatprep.subr.mxu0 0.0
    %2525 = vmatpush1.msra.mxu0 0.0
    %2526 = vmatprep.subr.mxu0 0.0
    %2527 = vmatpush1.msra.mxu0 0.0
    %2528 = vmatprep.subr.mxu0 0.0
    %2529 = vmatpush1.msra.mxu0 0.0
    %2530 = vmatprep.subr.mxu0 0.0
    %2531 = vmatpush1.msra.mxu0 0.0
    %2532 = vmatprep.subr.mxu0 0.0
    %2533 = vmatpush1.msra.mxu0 0.0
    %2534 = vmatprep.subr.mxu0 0.0
    %2535 = vmatpush1.msra.mxu0 0.0
    %2536 = vmatprep.subr.mxu0 0.0
    %2537 = vmatpush1.msra.mxu0 0.0
    %2538 = vmatprep.subr.mxu0 0.0
    %2539 = vmatpush1.msra.mxu0 0.0
    %2540 = vmatprep.subr.mxu0 0.0
    %2541 = vmatpush1.msra.mxu0 0.0
    %2542 = vmatprep.subr.mxu0 0.0
    %2543 = vmatpush1.msra.mxu0 0.0
    %2544 = vmatprep.subr.mxu0 0.0
    %2545 = vmatpush1.msra.mxu0 0.0
    %2546 = vmatprep.subr.mxu0 0.0
    %2547 = vmatpush1.msra.mxu0 0.0
    %2548 = vmatprep.subr.mxu0 0.0
    %2549 = vmatpush1.msra.mxu0 0.0
    %2550 = vmatprep.subr.mxu0 0.0
    %2551 = vmatpush1.msra.mxu0 0.0
    %2552 = vmatprep.subr.mxu0 0.0
    %2553 = vmatpush1.msra.mxu0 0.0
    %2554 = vmatprep.subr.mxu0 0.0
    %2555 = vmatpush1.msra.mxu0 0.0
    %2556 = vmatprep.subr.mxu0 0.0
    %2557 = vmatpush1.msra.mxu0 0.0
    %2558 = vmatprep.subr.mxu0 0.0
    %2559 = vmatpush1.msra.mxu0 0.0
    %2560 = vmatprep.subr.mxu0 0.0
    %2561 = vmatpush1.msra.mxu0 0.0
    %2562 = vmatprep.subr.mxu0 0.0
    %2563 = vmatpush1.msra.mxu0 0.0
    %2564 = vmatprep.subr.mxu0 0.0
    %2565 = vmatpush1.msra.mxu0 0.0
    %2566 = vmatprep.subr.mxu0 0.0
    %2567 = vmatpush1.msra.mxu0 0.0
    %2568 = vmatprep.subr.mxu0 0.0
    %2569 = vmatpush1.msra.mxu0 0.0
    %2570 = vmatprep.subr.mxu0 0.0
    %2571 = vmatpush1.msra.mxu0 0.0
    %2572 = vmatprep.mubr.f32.mxu0 0.0
    %2573 = vmatmul.mubr.f32.gmra.mrb[0].mxu0 %v2506
    %v2574 = vpop.f32.mrb[0].mxu0
    %v2575 = vadd.f32 0.0, %v2574
    %v2576 = vpop.f32.mrb[0].mxu0
    %2577 = vdwg.mxu0
    %2586 = vset.pattern.permute.xlu0 0
    %2587 = vperm.xlu0 %2586, %v2416
    %v2588 = vpop.permute.xlu0 %2587
    %2589 = vset.pattern.permute.xlu0 0
    %2590 = vperm.xlu0 %2589, %v2418
    %v2591 = vpop.permute.xlu0 %2590
    %2592 = vset.pattern.permute.xlu0 0
    %2593 = vperm.xlu0 %2592, %v2420
    %v2594 = vpop.permute.xlu0 %2593
    %2595 = vset.pattern.permute.xlu0 0
    %2596 = vperm.xlu0 %2595, %v2422
    %v2597 = vpop.permute.xlu0 %2596
    %2598 = vset.pattern.permute.xlu0 0
    %2599 = vperm.xlu0 %2598, %v2424
    %v2600 = vpop.permute.xlu0 %2599
    %2601 = vset.pattern.permute.xlu0 0
    %2602 = vperm.xlu0 %2601, %v2426
    %v2603 = vpop.permute.xlu0 %2602
    %2604 = vset.pattern.permute.xlu0 0
    %2605 = vperm.xlu0 %2604, %v2428
    %v2606 = vpop.permute.xlu0 %2605
    %2607 = vset.pattern.permute.xlu0 0
    %2608 = vperm.xlu0 %2607, %v2430
    %v2609 = vpop.permute.xlu0 %2608
    %v2610 = vlaneseq
    %v2611 = vshrl.u32 %v2610, 7
    %v2612 = vsub.s32 %v793, %v2611
    %v2613 = vrot.slane %v2588, %v2612
    %v2614 = vlaneseq
    %v2615 = vshrl.u32 %v2614, 7
    %v2616 = vsub.s32 %v793, %v2615
    %v2617 = vrot.slane %v2591, %v2616
    %v2618 = vlaneseq
    %v2619 = vshrl.u32 %v2618, 7
    %v2620 = vsub.s32 %v793, %v2619
    %v2621 = vrot.slane %v2594, %v2620
    %v2622 = vlaneseq
    %v2623 = vshrl.u32 %v2622, 7
    %v2624 = vsub.s32 %v793, %v2623
    %v2625 = vrot.slane %v2597, %v2624
    %v2626 = vlaneseq
    %v2627 = vshrl.u32 %v2626, 7
    %v2628 = vsub.s32 %v793, %v2627
    %v2629 = vrot.slane %v2600, %v2628
    %v2630 = vlaneseq
    %v2631 = vshrl.u32 %v2630, 7
    %v2632 = vsub.s32 %v793, %v2631
    %v2633 = vrot.slane %v2603, %v2632
    %v2634 = vlaneseq
    %v2635 = vshrl.u32 %v2634, 7
    %v2636 = vsub.s32 %v793, %v2635
    %v2637 = vrot.slane %v2606, %v2636
    %v2638 = vlaneseq
    %v2639 = vshrl.u32 %v2638, 7
    %v2640 = vsub.s32 %v793, %v2639
    %v2641 = vrot.slane %v2609, %v2640
    %v2642 = vsel %vm858, %v2617, %v2613
    %v2643 = vsel %vm860, %v2621, %v2642
    %v2644 = vsel %vm862, %v2625, %v2643
    %v2645 = vsel %vm864, %v2629, %v2644
    %v2646 = vsel %vm866, %v2633, %v2645
    %v2647 = vsel %vm868, %v2637, %v2646
    %v2648 = vsel %vm870, %v2641, %v2647
    %2650 = vrot.lane.b32.xlu0 %v414, 120
    %v2651 = vpop.permute.xlu0 %2650
    %v2653 = vsel %vm415, %v2648, 0
    %2655 = vmatprep.subr.mxu0 0.0
    %2656 = vmatpush1.msra.mxu0 %v2651
    %2657 = vmatprep.subr.mxu0 0.0
    %2658 = vmatpush1.msra.mxu0 0.0
    %2659 = vmatprep.subr.mxu0 0.0
    %2660 = vmatpush1.msra.mxu0 0.0
    %2661 = vmatprep.subr.mxu0 0.0
    %2662 = vmatpush1.msra.mxu0 0.0
    %2663 = vmatprep.subr.mxu0 0.0
    %2664 = vmatpush1.msra.mxu0 0.0
    %2665 = vmatprep.subr.mxu0 0.0
    %2666 = vmatpush1.msra.mxu0 0.0
    %2667 = vmatprep.subr.mxu0 0.0
    %2668 = vmatpush1.msra.mxu0 0.0
    %2669 = vmatprep.subr.mxu0 0.0
    %2670 = vmatpush1.msra.mxu0 0.0
    %2671 = vmatprep.subr.mxu0 0.0
    %2672 = vmatpush1.msra.mxu0 0.0
    %2673 = vmatprep.subr.mxu0 0.0
    %2674 = vmatpush1.msra.mxu0 0.0
    %2675 = vmatprep.subr.mxu0 0.0
    %2676 = vmatpush1.msra.mxu0 0.0
    %2677 = vmatprep.subr.mxu0 0.0
    %2678 = vmatpush1.msra.mxu0 0.0
    %2679 = vmatprep.subr.mxu0 0.0
    %2680 = vmatpush1.msra.mxu0 0.0
    %2681 = vmatprep.subr.mxu0 0.0
    %2682 = vmatpush1.msra.mxu0 0.0
    %2683 = vmatprep.subr.mxu0 0.0
    %2684 = vmatpush1.msra.mxu0 0.0
    %2685 = vmatprep.subr.mxu0 0.0
    %2686 = vmatpush1.msra.mxu0 0.0
    %2687 = vmatprep.subr.mxu0 0.0
    %2688 = vmatpush1.msra.mxu0 0.0
    %2689 = vmatprep.subr.mxu0 0.0
    %2690 = vmatpush1.msra.mxu0 0.0
    %2691 = vmatprep.subr.mxu0 0.0
    %2692 = vmatpush1.msra.mxu0 0.0
    %2693 = vmatprep.subr.mxu0 0.0
    %2694 = vmatpush1.msra.mxu0 0.0
    %2695 = vmatprep.subr.mxu0 0.0
    %2696 = vmatpush1.msra.mxu0 0.0
    %2697 = vmatprep.subr.mxu0 0.0
    %2698 = vmatpush1.msra.mxu0 0.0
    %2699 = vmatprep.subr.mxu0 0.0
    %2700 = vmatpush1.msra.mxu0 0.0
    %2701 = vmatprep.subr.mxu0 0.0
    %2702 = vmatpush1.msra.mxu0 0.0
    %2703 = vmatprep.subr.mxu0 0.0
    %2704 = vmatpush1.msra.mxu0 0.0
    %2705 = vmatprep.subr.mxu0 0.0
    %2706 = vmatpush1.msra.mxu0 0.0
    %2707 = vmatprep.subr.mxu0 0.0
    %2708 = vmatpush1.msra.mxu0 0.0
    %2709 = vmatprep.subr.mxu0 0.0
    %2710 = vmatpush1.msra.mxu0 0.0
    %2711 = vmatprep.subr.mxu0 0.0
    %2712 = vmatpush1.msra.mxu0 0.0
    %2713 = vmatprep.subr.mxu0 0.0
    %2714 = vmatpush1.msra.mxu0 0.0
    %2715 = vmatprep.subr.mxu0 0.0
    %2716 = vmatpush1.msra.mxu0 0.0
    %2717 = vmatprep.subr.mxu0 0.0
    %2718 = vmatpush1.msra.mxu0 0.0
    %2719 = vmatprep.mubr.f32.mxu0 0.0
    %2720 = vmatmul.mubr.f32.gmra.mrb[0].mxu0 %v2653
    %v2721 = vpop.f32.mrb[0].mxu0
    %v2722 = vadd.f32 0.0, %v2721
    %v2723 = vpop.f32.mrb[0].mxu0
    %2724 = vdwg.mxu0
    %2727 = vrot.lane.b32.xlu0 %v2575, 8
    %v2728 = vpop.permute.xlu0 %2727
    %2729 = vrot.lane.b32.xlu0 %v2722, 8
    %v2730 = vpop.permute.xlu0 %2729
    %vm2733 = vcmask 130112
    %2734 = vst.msk [vmem:[#allocation2] sm:$0xff] %vm2733, %v2728
    %2735 = vst.msk [vmem:[#allocation2 + $0x8] sm:$0xff] %vm2733, %v2730
    %2736 = vrot.lane.b32.xlu0 %v225, 112
    %v2737 = vpop.permute.xlu0 %2736
    %2738 = vrot.lane.b32.xlu0 %v319, 112
    %v2739 = vpop.permute.xlu0 %2738
    %v2740 = vsel %vm415, %v2737, 0
    %v2742 = vsel %vm415, %v2739, 0
    %2744 = vmatprep.subr.mxu0 0.0
    %2745 = vmatpush1.xpose.msra.mxu0 %v2742
    %2746 = vmatprep.subr.mxu0 0.0
    %2747 = vmatpush1.xpose.msra.mxu0 0.0
    %2748 = vmatprep.subr.mxu0 0.0
    %2749 = vmatpush1.xpose.msra.mxu0 0.0
    %2750 = vmatprep.subr.mxu0 0.0
    %2751 = vmatpush1.xpose.msra.mxu0 0.0
    %2752 = vmatprep.subr.mxu0 0.0
    %2753 = vmatpush1.xpose.msra.mxu0 0.0
    %2754 = vmatprep.subr.mxu0 0.0
    %2755 = vmatpush1.xpose.msra.mxu0 0.0
    %2756 = vmatprep.subr.mxu0 0.0
    %2757 = vmatpush1.xpose.msra.mxu0 0.0
    %2758 = vmatprep.subr.mxu0 0.0
    %2759 = vmatpush1.xpose.msra.mxu0 0.0
    %2760 = vmatprep.subr.mxu0 0.0
    %2761 = vmatpush1.xpose.msra.mxu0 0.0
    %2762 = vmatprep.subr.mxu0 0.0
    %2763 = vmatpush1.xpose.msra.mxu0 0.0
    %2764 = vmatprep.subr.mxu0 0.0
    %2765 = vmatpush1.xpose.msra.mxu0 0.0
    %2766 = vmatprep.subr.mxu0 0.0
    %2767 = vmatpush1.xpose.msra.mxu0 0.0
    %2768 = vmatprep.subr.mxu0 0.0
    %2769 = vmatpush1.xpose.msra.mxu0 0.0
    %2770 = vmatprep.subr.mxu0 0.0
    %2771 = vmatpush1.xpose.msra.mxu0 0.0
    %2772 = vmatprep.subr.mxu0 0.0
    %2773 = vmatpush1.xpose.msra.mxu0 0.0
    %2774 = vmatprep.subr.mxu0 0.0
    %2775 = vmatpush1.xpose.msra.mxu0 0.0
    %2776 = vmatprep.subr.mxu0 0.0
    %2777 = vmatpush1.xpose.msra.mxu0 0.0
    %2778 = vmatprep.subr.mxu0 0.0
    %2779 = vmatpush1.xpose.msra.mxu0 0.0
    %2780 = vmatprep.subr.mxu0 0.0
    %2781 = vmatpush1.xpose.msra.mxu0 0.0
    %2782 = vmatprep.subr.mxu0 0.0
    %2783 = vmatpush1.xpose.msra.mxu0 0.0
    %2784 = vmatprep.subr.mxu0 0.0
    %2785 = vmatpush1.xpose.msra.mxu0 0.0
    %2786 = vmatprep.subr.mxu0 0.0
    %2787 = vmatpush1.xpose.msra.mxu0 0.0
    %2788 = vmatprep.subr.mxu0 0.0
    %2789 = vmatpush1.xpose.msra.mxu0 0.0
    %2790 = vmatprep.subr.mxu0 0.0
    %2791 = vmatpush1.xpose.msra.mxu0 0.0
    %2792 = vmatprep.subr.mxu0 0.0
    %2793 = vmatpush1.xpose.msra.mxu0 0.0
    %2794 = vmatprep.subr.mxu0 0.0
    %2795 = vmatpush1.xpose.msra.mxu0 0.0
    %2796 = vmatprep.subr.mxu0 0.0
    %2797 = vmatpush1.xpose.msra.mxu0 0.0
    %2798 = vmatprep.subr.mxu0 0.0
    %2799 = vmatpush1.xpose.msra.mxu0 0.0
    %2800 = vmatprep.subr.mxu0 0.0
    %2801 = vmatpush1.xpose.msra.mxu0 0.0
    %2802 = vmatprep.subr.mxu0 0.0
    %2803 = vmatpush1.xpose.msra.mxu0 0.0
    %2804 = vmatprep.subr.mxu0 0.0
    %2805 = vmatpush1.xpose.msra.mxu0 0.0
    %2806 = vmatprep.subr.mxu0 0.0
    %2807 = vmatpush1.xpose.msra.mxu0 0.0
    %2808 = vmatprep.mubr.f32.mxu0 0.0
    %2809 = vmatmul.mubr.f32.gmra.mrb[0].mxu0 %v2740
    %v2810 = vpop.f32.mrb[0].mxu0
    %v2811 = vadd.f32 0.0, %v2810
    %v2812 = vpop.f32.mrb[0].mxu0
    %2813 = vdwg.mxu0
    %2814 = vrot.lane.b32.xlu0 %v226, 112
    %v2815 = vpop.permute.xlu0 %2814
    %2816 = vrot.lane.b32.xlu0 %v320, 112
    %v2817 = vpop.permute.xlu0 %2816
    %v2818 = vsel %vm415, %v2815, 0
    %v2820 = vsel %vm415, %v2817, 0
    %2822 = vmatprep.subr.mxu0 0.0
    %2823 = vmatpush1.xpose.msra.mxu0 %v2820
    %2824 = vmatprep.subr.mxu0 0.0
    %2825 = vmatpush1.xpose.msra.mxu0 0.0
    %2826 = vmatprep.subr.mxu0 0.0
    %2827 = vmatpush1.xpose.msra.mxu0 0.0
    %2828 = vmatprep.subr.mxu0 0.0
    %2829 = vmatpush1.xpose.msra.mxu0 0.0
    %2830 = vmatprep.subr.mxu0 0.0
    %2831 = vmatpush1.xpose.msra.mxu0 0.0
    %2832 = vmatprep.subr.mxu0 0.0
    %2833 = vmatpush1.xpose.msra.mxu0 0.0
    %2834 = vmatprep.subr.mxu0 0.0
    %2835 = vmatpush1.xpose.msra.mxu0 0.0
    %2836 = vmatprep.subr.mxu0 0.0
    %2837 = vmatpush1.xpose.msra.mxu0 0.0
    %2838 = vmatprep.subr.mxu0 0.0
    %2839 = vmatpush1.xpose.msra.mxu0 0.0
    %2840 = vmatprep.subr.mxu0 0.0
    %2841 = vmatpush1.xpose.msra.mxu0 0.0
    %2842 = vmatprep.subr.mxu0 0.0
    %2843 = vmatpush1.xpose.msra.mxu0 0.0
    %2844 = vmatprep.subr.mxu0 0.0
    %2845 = vmatpush1.xpose.msra.mxu0 0.0
    %2846 = vmatprep.subr.mxu0 0.0
    %2847 = vmatpush1.xpose.msra.mxu0 0.0
    %2848 = vmatprep.subr.mxu0 0.0
    %2849 = vmatpush1.xpose.msra.mxu0 0.0
    %2850 = vmatprep.subr.mxu0 0.0
    %2851 = vmatpush1.xpose.msra.mxu0 0.0
    %2852 = vmatprep.subr.mxu0 0.0
    %2853 = vmatpush1.xpose.msra.mxu0 0.0
    %2854 = vmatprep.subr.mxu0 0.0
    %2855 = vmatpush1.xpose.msra.mxu0 0.0
    %2856 = vmatprep.subr.mxu0 0.0
    %2857 = vmatpush1.xpose.msra.mxu0 0.0
    %2858 = vmatprep.subr.mxu0 0.0
    %2859 = vmatpush1.xpose.msra.mxu0 0.0
    %2860 = vmatprep.subr.mxu0 0.0
    %2861 = vmatpush1.xpose.msra.mxu0 0.0
    %2862 = vmatprep.subr.mxu0 0.0
    %2863 = vmatpush1.xpose.msra.mxu0 0.0
    %2864 = vmatprep.subr.mxu0 0.0
    %2865 = vmatpush1.xpose.msra.mxu0 0.0
    %2866 = vmatprep.subr.mxu0 0.0
    %2867 = vmatpush1.xpose.msra.mxu0 0.0
    %2868 = vmatprep.subr.mxu0 0.0
    %2869 = vmatpush1.xpose.msra.mxu0 0.0
    %2870 = vmatprep.subr.mxu0 0.0
    %2871 = vmatpush1.xpose.msra.mxu0 0.0
    %2872 = vmatprep.subr.mxu0 0.0
    %2873 = vmatpush1.xpose.msra.mxu0 0.0
    %2874 = vmatprep.subr.mxu0 0.0
    %2875 = vmatpush1.xpose.msra.mxu0 0.0
    %2876 = vmatprep.subr.mxu0 0.0
    %2877 = vmatpush1.xpose.msra.mxu0 0.0
    %2878 = vmatprep.subr.mxu0 0.0
    %2879 = vmatpush1.xpose.msra.mxu0 0.0
    %2880 = vmatprep.subr.mxu0 0.0
    %2881 = vmatpush1.xpose.msra.mxu0 0.0
    %2882 = vmatprep.subr.mxu0 0.0
    %2883 = vmatpush1.xpose.msra.mxu0 0.0
    %2884 = vmatprep.subr.mxu0 0.0
    %2885 = vmatpush1.xpose.msra.mxu0 0.0
    %2886 = vmatprep.mubr.f32.mxu0 0.0
    %2887 = vmatmul.mubr.f32.gmra.mrb[0].mxu0 %v2818
    %v2888 = vpop.f32.mrb[0].mxu0
    %v2889 = vadd.f32 0.0, %v2888
    %v2890 = vpop.f32.mrb[0].mxu0
    %2891 = vdwg.mxu0
    %v2892 = vmul.f32 %v2811, 0.35355338
    %v2893 = vmul.f32 %v2889, 0.35355338
    %v2896 = vsel %vm415, %v2739, 0.0
    %2897 = vadd.xlane.f32.xlu0 %v2896
    %v2898 = vpop.xlane.xlu0 %2897
    %v2899 = vsel %vm415, %v2817, 0.0
    %2900 = vadd.xlane.f32.xlu0 %v2899
    %v2901 = vpop.xlane.xlu0 %2900
    %vm2902 = vcmp.eq.f32.partialorder %v2898, 0.0
    %vm2903 = vcmp.eq.f32.partialorder %v2901, 0.0
    %v2904 = vsel %vm2902, 1, 0
    %v2905 = vsel %vm2903, 1, 0
    %vm2906 = vcmp.eq.s32.totalorder %v2904, 1
    %vm2907 = vcmp.eq.s32.totalorder %v2905, 1
    %v2910 = vlaneseq
    %v2911 = vshrl.u32 %v2910, 7
    %v2912 = vsub.s32 0, %v2911
    %v2913 = vrot.slane %v2892, %v2912
    %2915 = vbcast.lane.b32.xlu0 %v2913, 256
    %v2916 = vpop.permute.xlu0 %2915
    %v2917 = vlaneseq
    %v2918 = vshrl.u32 %v2917, 7
    %v2919 = vsub.s32 1, %v2918
    %v2920 = vrot.slane %v2892, %v2919
    %2922 = vbcast.lane.b32.xlu0 %v2920, 256
    %v2923 = vpop.permute.xlu0 %2922
    %v2924 = vlaneseq
    %v2925 = vshrl.u32 %v2924, 7
    %v2926 = vsub.s32 2, %v2925
    %v2927 = vrot.slane %v2892, %v2926
    %2929 = vbcast.lane.b32.xlu0 %v2927, 256
    %v2930 = vpop.permute.xlu0 %2929
    %v2931 = vlaneseq
    %v2932 = vshrl.u32 %v2931, 7
    %v2933 = vsub.s32 3, %v2932
    %v2934 = vrot.slane %v2892, %v2933
    %2936 = vbcast.lane.b32.xlu0 %v2934, 256
    %v2937 = vpop.permute.xlu0 %2936
    %v2938 = vlaneseq
    %v2939 = vshrl.u32 %v2938, 7
    %v2940 = vsub.s32 4, %v2939
    %v2941 = vrot.slane %v2892, %v2940
    %2943 = vbcast.lane.b32.xlu0 %v2941, 256
    %v2944 = vpop.permute.xlu0 %2943
    %v2945 = vlaneseq
    %v2946 = vshrl.u32 %v2945, 7
    %v2947 = vsub.s32 5, %v2946
    %v2948 = vrot.slane %v2892, %v2947
    %2950 = vbcast.lane.b32.xlu0 %v2948, 256
    %v2951 = vpop.permute.xlu0 %2950
    %v2952 = vlaneseq
    %v2953 = vshrl.u32 %v2952, 7
    %v2954 = vsub.s32 6, %v2953
    %v2955 = vrot.slane %v2892, %v2954
    %2957 = vbcast.lane.b32.xlu0 %v2955, 256
    %v2958 = vpop.permute.xlu0 %2957
    %v2959 = vlaneseq
    %v2960 = vshrl.u32 %v2959, 7
    %v2961 = vsub.s32 7, %v2960
    %v2962 = vrot.slane %v2892, %v2961
    %2964 = vbcast.lane.b32.xlu0 %v2962, 256
    %v2965 = vpop.permute.xlu0 %2964
    %v2966 = vlaneseq
    %v2967 = vshrl.u32 %v2966, 7
    %v2968 = vsub.s32 0, %v2967
    %v2969 = vrot.slane %v2893, %v2968
    %2971 = vbcast.lane.b32.xlu0 %v2969, 256
    %v2972 = vpop.permute.xlu0 %2971
    %v2973 = vlaneseq
    %v2974 = vshrl.u32 %v2973, 7
    %v2975 = vsub.s32 1, %v2974
    %v2976 = vrot.slane %v2893, %v2975
    %2978 = vbcast.lane.b32.xlu0 %v2976, 256
    %v2979 = vpop.permute.xlu0 %2978
    %v2980 = vlaneseq
    %v2981 = vshrl.u32 %v2980, 7
    %v2982 = vsub.s32 2, %v2981
    %v2983 = vrot.slane %v2893, %v2982
    %2985 = vbcast.lane.b32.xlu0 %v2983, 256
    %v2986 = vpop.permute.xlu0 %2985
    %v2987 = vlaneseq
    %v2988 = vshrl.u32 %v2987, 7
    %v2989 = vsub.s32 3, %v2988
    %v2990 = vrot.slane %v2893, %v2989
    %2992 = vbcast.lane.b32.xlu0 %v2990, 256
    %v2993 = vpop.permute.xlu0 %2992
    %v2994 = vlaneseq
    %v2995 = vshrl.u32 %v2994, 7
    %v2996 = vsub.s32 4, %v2995
    %v2997 = vrot.slane %v2893, %v2996
    %2999 = vbcast.lane.b32.xlu0 %v2997, 256
    %v3000 = vpop.permute.xlu0 %2999
    %v3001 = vlaneseq
    %v3002 = vshrl.u32 %v3001, 7
    %v3003 = vsub.s32 5, %v3002
    %v3004 = vrot.slane %v2893, %v3003
    %3006 = vbcast.lane.b32.xlu0 %v3004, 256
    %v3007 = vpop.permute.xlu0 %3006
    %v3008 = vlaneseq
    %v3009 = vshrl.u32 %v3008, 7
    %v3010 = vsub.s32 6, %v3009
    %v3011 = vrot.slane %v2893, %v3010
    %3013 = vbcast.lane.b32.xlu0 %v3011, 256
    %v3014 = vpop.permute.xlu0 %3013
    %v3015 = vlaneseq
    %v3016 = vshrl.u32 %v3015, 7
    %v3017 = vsub.s32 7, %v3016
    %v3018 = vrot.slane %v2893, %v3017
    %3020 = vbcast.lane.b32.xlu0 %v3018, 256
    %v3021 = vpop.permute.xlu0 %3020
    %v3038 = vsel %vm2906, -4.2949673e+09, %v2916
    %v3039 = vsel %vm2906, -4.2949673e+09, %v2923
    %v3040 = vsel %vm2906, -4.2949673e+09, %v2930
    %v3041 = vsel %vm2906, -4.2949673e+09, %v2937
    %v3042 = vsel %vm2906, -4.2949673e+09, %v2944
    %v3043 = vsel %vm2906, -4.2949673e+09, %v2951
    %v3044 = vsel %vm2906, -4.2949673e+09, %v2958
    %v3045 = vsel %vm2906, -4.2949673e+09, %v2965
    %v3046 = vsel %vm2907, -4.2949673e+09, %v2972
    %v3047 = vsel %vm2907, -4.2949673e+09, %v2979
    %v3048 = vsel %vm2907, -4.2949673e+09, %v2986
    %v3049 = vsel %vm2907, -4.2949673e+09, %v2993
    %v3050 = vsel %vm2907, -4.2949673e+09, %v3000
    %v3051 = vsel %vm2907, -4.2949673e+09, %v3007
    %v3052 = vsel %vm2907, -4.2949673e+09, %v3014
    %v3053 = vsel %vm2907, -4.2949673e+09, %v3021
    %3070 = vset.pattern.permute.xlu0 0
    %3071 = vperm.xlu0 %3070, %v3038
    %v3072 = vpop.permute.xlu0 %3071
    %3073 = vset.pattern.permute.xlu0 0
    %3074 = vperm.xlu0 %3073, %v3039
    %v3075 = vpop.permute.xlu0 %3074
    %3076 = vset.pattern.permute.xlu0 0
    %3077 = vperm.xlu0 %3076, %v3040
    %v3078 = vpop.permute.xlu0 %3077
    %3079 = vset.pattern.permute.xlu0 0
    %3080 = vperm.xlu0 %3079, %v3041
    %v3081 = vpop.permute.xlu0 %3080
    %3082 = vset.pattern.permute.xlu0 0
    %3083 = vperm.xlu0 %3082, %v3042
    %v3084 = vpop.permute.xlu0 %3083
    %3085 = vset.pattern.permute.xlu0 0
    %3086 = vperm.xlu0 %3085, %v3043
    %v3087 = vpop.permute.xlu0 %3086
    %3088 = vset.pattern.permute.xlu0 0
    %3089 = vperm.xlu0 %3088, %v3044
    %v3090 = vpop.permute.xlu0 %3089
    %3091 = vset.pattern.permute.xlu0 0
    %3092 = vperm.xlu0 %3091, %v3045
    %v3093 = vpop.permute.xlu0 %3092
    %3094 = vset.pattern.permute.xlu0 0
    %3095 = vperm.xlu0 %3094, %v3046
    %v3096 = vpop.permute.xlu0 %3095
    %3097 = vset.pattern.permute.xlu0 0
    %3098 = vperm.xlu0 %3097, %v3047
    %v3099 = vpop.permute.xlu0 %3098
    %3100 = vset.pattern.permute.xlu0 0
    %3101 = vperm.xlu0 %3100, %v3048
    %v3102 = vpop.permute.xlu0 %3101
    %3103 = vset.pattern.permute.xlu0 0
    %3104 = vperm.xlu0 %3103, %v3049
    %v3105 = vpop.permute.xlu0 %3104
    %3106 = vset.pattern.permute.xlu0 0
    %3107 = vperm.xlu0 %3106, %v3050
    %v3108 = vpop.permute.xlu0 %3107
    %3109 = vset.pattern.permute.xlu0 0
    %3110 = vperm.xlu0 %3109, %v3051
    %v3111 = vpop.permute.xlu0 %3110
    %3112 = vset.pattern.permute.xlu0 0
    %3113 = vperm.xlu0 %3112, %v3052
    %v3114 = vpop.permute.xlu0 %3113
    %3115 = vset.pattern.permute.xlu0 0
    %3116 = vperm.xlu0 %3115, %v3053
    %v3117 = vpop.permute.xlu0 %3116
    %v3118 = vlaneseq
    %v3119 = vshrl.u32 %v3118, 7
    %v3120 = vsub.s32 %v793, %v3119
    %v3121 = vrot.slane %v3072, %v3120
    %v3122 = vlaneseq
    %v3123 = vshrl.u32 %v3122, 7
    %v3124 = vsub.s32 %v793, %v3123
    %v3125 = vrot.slane %v3075, %v3124
    %v3126 = vlaneseq
    %v3127 = vshrl.u32 %v3126, 7
    %v3128 = vsub.s32 %v793, %v3127
    %v3129 = vrot.slane %v3078, %v3128
    %v3130 = vlaneseq
    %v3131 = vshrl.u32 %v3130, 7
    %v3132 = vsub.s32 %v793, %v3131
    %v3133 = vrot.slane %v3081, %v3132
    %v3134 = vlaneseq
    %v3135 = vshrl.u32 %v3134, 7
    %v3136 = vsub.s32 %v793, %v3135
    %v3137 = vrot.slane %v3084, %v3136
    %v3138 = vlaneseq
    %v3139 = vshrl.u32 %v3138, 7
    %v3140 = vsub.s32 %v793, %v3139
    %v3141 = vrot.slane %v3087, %v3140
    %v3142 = vlaneseq
    %v3143 = vshrl.u32 %v3142, 7
    %v3144 = vsub.s32 %v793, %v3143
    %v3145 = vrot.slane %v3090, %v3144
    %v3146 = vlaneseq
    %v3147 = vshrl.u32 %v3146, 7
    %v3148 = vsub.s32 %v793, %v3147
    %v3149 = vrot.slane %v3093, %v3148
    %v3150 = vlaneseq
    %v3151 = vshrl.u32 %v3150, 7
    %v3152 = vsub.s32 %v793, %v3151
    %v3153 = vrot.slane %v3096, %v3152
    %v3154 = vlaneseq
    %v3155 = vshrl.u32 %v3154, 7
    %v3156 = vsub.s32 %v793, %v3155
    %v3157 = vrot.slane %v3099, %v3156
    %v3158 = vlaneseq
    %v3159 = vshrl.u32 %v3158, 7
    %v3160 = vsub.s32 %v793, %v3159
    %v3161 = vrot.slane %v3102, %v3160
    %v3162 = vlaneseq
    %v3163 = vshrl.u32 %v3162, 7
    %v3164 = vsub.s32 %v793, %v3163
    %v3165 = vrot.slane %v3105, %v3164
    %v3166 = vlaneseq
    %v3167 = vshrl.u32 %v3166, 7
    %v3168 = vsub.s32 %v793, %v3167
    %v3169 = vrot.slane %v3108, %v3168
    %v3170 = vlaneseq
    %v3171 = vshrl.u32 %v3170, 7
    %v3172 = vsub.s32 %v793, %v3171
    %v3173 = vrot.slane %v3111, %v3172
    %v3174 = vlaneseq
    %v3175 = vshrl.u32 %v3174, 7
    %v3176 = vsub.s32 %v793, %v3175
    %v3177 = vrot.slane %v3114, %v3176
    %v3178 = vlaneseq
    %v3179 = vshrl.u32 %v3178, 7
    %v3180 = vsub.s32 %v793, %v3179
    %v3181 = vrot.slane %v3117, %v3180
    %v3182 = vsel %vm858, %v3125, %v3121
    %v3183 = vsel %vm860, %v3129, %v3182
    %v3184 = vsel %vm862, %v3133, %v3183
    %v3185 = vsel %vm864, %v3137, %v3184
    %v3186 = vsel %vm866, %v3141, %v3185
    %v3187 = vsel %vm868, %v3145, %v3186
    %v3188 = vsel %vm870, %v3149, %v3187
    %v3189 = vsel %vm858, %v3157, %v3153
    %v3190 = vsel %vm860, %v3161, %v3189
    %v3191 = vsel %vm862, %v3165, %v3190
    %v3192 = vsel %vm864, %v3169, %v3191
    %v3193 = vsel %vm866, %v3173, %v3192
    %v3194 = vsel %vm868, %v3177, %v3193
    %v3195 = vsel %vm870, %v3181, %v3194
    %v3198 = vsel %vm415, %v3188, -inf
    %3199 = vmax.xlane.f32.xlu0 %v3198
    %v3200 = vpop.xlane.xlu0 %3199
    %v3201 = vsel %vm415, %v3195, -inf
    %3202 = vmax.xlane.f32.xlu0 %v3201
    %v3203 = vpop.xlane.xlu0 %3202
    %v3206 = vlaneseq
    %v3207 = vshrl.u32 %v3206, 7
    %v3208 = vsub.s32 0, %v3207
    %v3209 = vrot.slane %v3200, %v3208
    %v3210 = vlaneseq
    %v3211 = vshrl.u32 %v3210, 7
    %v3212 = vsub.s32 1, %v3211
    %v3213 = vrot.slane %v3200, %v3212
    %v3214 = vlaneseq
    %v3215 = vshrl.u32 %v3214, 7
    %v3216 = vsub.s32 2, %v3215
    %v3217 = vrot.slane %v3200, %v3216
    %v3218 = vlaneseq
    %v3219 = vshrl.u32 %v3218, 7
    %v3220 = vsub.s32 3, %v3219
    %v3221 = vrot.slane %v3200, %v3220
    %v3222 = vlaneseq
    %v3223 = vshrl.u32 %v3222, 7
    %v3224 = vsub.s32 4, %v3223
    %v3225 = vrot.slane %v3200, %v3224
    %v3226 = vlaneseq
    %v3227 = vshrl.u32 %v3226, 7
    %v3228 = vsub.s32 5, %v3227
    %v3229 = vrot.slane %v3200, %v3228
    %v3230 = vlaneseq
    %v3231 = vshrl.u32 %v3230, 7
    %v3232 = vsub.s32 6, %v3231
    %v3233 = vrot.slane %v3200, %v3232
    %v3234 = vlaneseq
    %v3235 = vshrl.u32 %v3234, 7
    %v3236 = vsub.s32 7, %v3235
    %v3237 = vrot.slane %v3200, %v3236
    %v3238 = vlaneseq
    %v3239 = vshrl.u32 %v3238, 7
    %v3240 = vsub.s32 0, %v3239
    %v3241 = vrot.slane %v3203, %v3240
    %v3242 = vlaneseq
    %v3243 = vshrl.u32 %v3242, 7
    %v3244 = vsub.s32 1, %v3243
    %v3245 = vrot.slane %v3203, %v3244
    %v3246 = vlaneseq
    %v3247 = vshrl.u32 %v3246, 7
    %v3248 = vsub.s32 2, %v3247
    %v3249 = vrot.slane %v3203, %v3248
    %v3250 = vlaneseq
    %v3251 = vshrl.u32 %v3250, 7
    %v3252 = vsub.s32 3, %v3251
    %v3253 = vrot.slane %v3203, %v3252
    %v3254 = vlaneseq
    %v3255 = vshrl.u32 %v3254, 7
    %v3256 = vsub.s32 4, %v3255
    %v3257 = vrot.slane %v3203, %v3256
    %v3258 = vlaneseq
    %v3259 = vshrl.u32 %v3258, 7
    %v3260 = vsub.s32 5, %v3259
    %v3261 = vrot.slane %v3203, %v3260
    %v3262 = vlaneseq
    %v3263 = vshrl.u32 %v3262, 7
    %v3264 = vsub.s32 6, %v3263
    %v3265 = vrot.slane %v3203, %v3264
    %v3266 = vlaneseq
    %v3267 = vshrl.u32 %v3266, 7
    %v3268 = vsub.s32 7, %v3267
    %v3269 = vrot.slane %v3203, %v3268
    %v3286 = vsub.f32 %v3038, %v3209
    %v3287 = vsub.f32 %v3039, %v3213
    %v3288 = vsub.f32 %v3040, %v3217
    %v3289 = vsub.f32 %v3041, %v3221
    %v3290 = vsub.f32 %v3042, %v3225
    %v3291 = vsub.f32 %v3043, %v3229
    %v3292 = vsub.f32 %v3044, %v3233
    %v3293 = vsub.f32 %v3045, %v3237
    %v3294 = vsub.f32 %v3046, %v3241
    %v3295 = vsub.f32 %v3047, %v3245
    %v3296 = vsub.f32 %v3048, %v3249
    %v3297 = vsub.f32 %v3049, %v3253
    %v3298 = vsub.f32 %v3050, %v3257
    %v3299 = vsub.f32 %v3051, %v3261
    %v3300 = vsub.f32 %v3052, %v3265
    %v3301 = vsub.f32 %v3053, %v3269
    %v3302 = vmul.f32 %v3286, 1.442695
    %v3303 = vpow.pop %v3302
    %v3304 = vmul.f32 %v3287, 1.442695
    %v3305 = vpow.pop %v3304
    %v3306 = vmul.f32 %v3288, 1.442695
    %v3307 = vpow.pop %v3306
    %v3308 = vmul.f32 %v3289, 1.442695
    %v3309 = vpow.pop %v3308
    %v3310 = vmul.f32 %v3290, 1.442695
    %v3311 = vpow.pop %v3310
    %v3312 = vmul.f32 %v3291, 1.442695
    %v3313 = vpow.pop %v3312
    %v3314 = vmul.f32 %v3292, 1.442695
    %v3315 = vpow.pop %v3314
    %v3316 = vmul.f32 %v3293, 1.442695
    %v3317 = vpow.pop %v3316
    %v3318 = vmul.f32 %v3294, 1.442695
    %v3319 = vpow.pop %v3318
    %v3320 = vmul.f32 %v3295, 1.442695
    %v3321 = vpow.pop %v3320
    %v3322 = vmul.f32 %v3296, 1.442695
    %v3323 = vpow.pop %v3322
    %v3324 = vmul.f32 %v3297, 1.442695
    %v3325 = vpow.pop %v3324
    %v3326 = vmul.f32 %v3298, 1.442695
    %v3327 = vpow.pop %v3326
    %v3328 = vmul.f32 %v3299, 1.442695
    %v3329 = vpow.pop %v3328
    %v3330 = vmul.f32 %v3300, 1.442695
    %v3331 = vpow.pop %v3330
    %v3332 = vmul.f32 %v3301, 1.442695
    %v3333 = vpow.pop %v3332
    %3350 = vset.pattern.permute.xlu0 0
    %3351 = vperm.xlu0 %3350, %v3303
    %v3352 = vpop.permute.xlu0 %3351
    %3353 = vset.pattern.permute.xlu0 0
    %3354 = vperm.xlu0 %3353, %v3305
    %v3355 = vpop.permute.xlu0 %3354
    %3356 = vset.pattern.permute.xlu0 0
    %3357 = vperm.xlu0 %3356, %v3307
    %v3358 = vpop.permute.xlu0 %3357
    %3359 = vset.pattern.permute.xlu0 0
    %3360 = vperm.xlu0 %3359, %v3309
    %v3361 = vpop.permute.xlu0 %3360
    %3362 = vset.pattern.permute.xlu0 0
    %3363 = vperm.xlu0 %3362, %v3311
    %v3364 = vpop.permute.xlu0 %3363
    %3365 = vset.pattern.permute.xlu0 0
    %3366 = vperm.xlu0 %3365, %v3313
    %v3367 = vpop.permute.xlu0 %3366
    %3368 = vset.pattern.permute.xlu0 0
    %3369 = vperm.xlu0 %3368, %v3315
    %v3370 = vpop.permute.xlu0 %3369
    %3371 = vset.pattern.permute.xlu0 0
    %3372 = vperm.xlu0 %3371, %v3317
    %v3373 = vpop.permute.xlu0 %3372
    %3374 = vset.pattern.permute.xlu0 0
    %3375 = vperm.xlu0 %3374, %v3319
    %v3376 = vpop.permute.xlu0 %3375
    %3377 = vset.pattern.permute.xlu0 0
    %3378 = vperm.xlu0 %3377, %v3321
    %v3379 = vpop.permute.xlu0 %3378
    %3380 = vset.pattern.permute.xlu0 0
    %3381 = vperm.xlu0 %3380, %v3323
    %v3382 = vpop.permute.xlu0 %3381
    %3383 = vset.pattern.permute.xlu0 0
    %3384 = vperm.xlu0 %3383, %v3325
    %v3385 = vpop.permute.xlu0 %3384
    %3386 = vset.pattern.permute.xlu0 0
    %3387 = vperm.xlu0 %3386, %v3327
    %v3388 = vpop.permute.xlu0 %3387
    %3389 = vset.pattern.permute.xlu0 0
    %3390 = vperm.xlu0 %3389, %v3329
    %v3391 = vpop.permute.xlu0 %3390
    %3392 = vset.pattern.permute.xlu0 0
    %3393 = vperm.xlu0 %3392, %v3331
    %v3394 = vpop.permute.xlu0 %3393
    %3395 = vset.pattern.permute.xlu0 0
    %3396 = vperm.xlu0 %3395, %v3333
    %v3397 = vpop.permute.xlu0 %3396
    %v3398 = vlaneseq
    %v3399 = vshrl.u32 %v3398, 7
    %v3400 = vsub.s32 %v793, %v3399
    %v3401 = vrot.slane %v3352, %v3400
    %v3402 = vlaneseq
    %v3403 = vshrl.u32 %v3402, 7
    %v3404 = vsub.s32 %v793, %v3403
    %v3405 = vrot.slane %v3355, %v3404
    %v3406 = vlaneseq
    %v3407 = vshrl.u32 %v3406, 7
    %v3408 = vsub.s32 %v793, %v3407
    %v3409 = vrot.slane %v3358, %v3408
    %v3410 = vlaneseq
    %v3411 = vshrl.u32 %v3410, 7
    %v3412 = vsub.s32 %v793, %v3411
    %v3413 = vrot.slane %v3361, %v3412
    %v3414 = vlaneseq
    %v3415 = vshrl.u32 %v3414, 7
    %v3416 = vsub.s32 %v793, %v3415
    %v3417 = vrot.slane %v3364, %v3416
    %v3418 = vlaneseq
    %v3419 = vshrl.u32 %v3418, 7
    %v3420 = vsub.s32 %v793, %v3419
    %v3421 = vrot.slane %v3367, %v3420
    %v3422 = vlaneseq
    %v3423 = vshrl.u32 %v3422, 7
    %v3424 = vsub.s32 %v793, %v3423
    %v3425 = vrot.slane %v3370, %v3424
    %v3426 = vlaneseq
    %v3427 = vshrl.u32 %v3426, 7
    %v3428 = vsub.s32 %v793, %v3427
    %v3429 = vrot.slane %v3373, %v3428
    %v3430 = vlaneseq
    %v3431 = vshrl.u32 %v3430, 7
    %v3432 = vsub.s32 %v793, %v3431
    %v3433 = vrot.slane %v3376, %v3432
    %v3434 = vlaneseq
    %v3435 = vshrl.u32 %v3434, 7
    %v3436 = vsub.s32 %v793, %v3435
    %v3437 = vrot.slane %v3379, %v3436
    %v3438 = vlaneseq
    %v3439 = vshrl.u32 %v3438, 7
    %v3440 = vsub.s32 %v793, %v3439
    %v3441 = vrot.slane %v3382, %v3440
    %v3442 = vlaneseq
    %v3443 = vshrl.u32 %v3442, 7
    %v3444 = vsub.s32 %v793, %v3443
    %v3445 = vrot.slane %v3385, %v3444
    %v3446 = vlaneseq
    %v3447 = vshrl.u32 %v3446, 7
    %v3448 = vsub.s32 %v793, %v3447
    %v3449 = vrot.slane %v3388, %v3448
    %v3450 = vlaneseq
    %v3451 = vshrl.u32 %v3450, 7
    %v3452 = vsub.s32 %v793, %v3451
    %v3453 = vrot.slane %v3391, %v3452
    %v3454 = vlaneseq
    %v3455 = vshrl.u32 %v3454, 7
    %v3456 = vsub.s32 %v793, %v3455
    %v3457 = vrot.slane %v3394, %v3456
    %v3458 = vlaneseq
    %v3459 = vshrl.u32 %v3458, 7
    %v3460 = vsub.s32 %v793, %v3459
    %v3461 = vrot.slane %v3397, %v3460
    %v3462 = vsel %vm858, %v3405, %v3401
    %v3463 = vsel %vm860, %v3409, %v3462
    %v3464 = vsel %vm862, %v3413, %v3463
    %v3465 = vsel %vm864, %v3417, %v3464
    %v3466 = vsel %vm866, %v3421, %v3465
    %v3467 = vsel %vm868, %v3425, %v3466
    %v3468 = vsel %vm870, %v3429, %v3467
    %v3469 = vsel %vm858, %v3437, %v3433
    %v3470 = vsel %vm860, %v3441, %v3469
    %v3471 = vsel %vm862, %v3445, %v3470
    %v3472 = vsel %vm864, %v3449, %v3471
    %v3473 = vsel %vm866, %v3453, %v3472
    %v3474 = vsel %vm868, %v3457, %v3473
    %v3475 = vsel %vm870, %v3461, %v3474
    %v3478 = vsel %vm415, %v3468, 0.0
    %3479 = vadd.xlane.f32.xlu0 %v3478
    %v3480 = vpop.xlane.xlu0 %3479
    %v3481 = vsel %vm415, %v3475, 0.0
    %3482 = vadd.xlane.f32.xlu0 %v3481
    %v3483 = vpop.xlane.xlu0 %3482
    %v3486 = vlaneseq
    %v3487 = vshrl.u32 %v3486, 7
    %v3488 = vsub.s32 0, %v3487
    %v3489 = vrot.slane %v3480, %v3488
    %v3490 = vlaneseq
    %v3491 = vshrl.u32 %v3490, 7
    %v3492 = vsub.s32 1, %v3491
    %v3493 = vrot.slane %v3480, %v3492
    %v3494 = vlaneseq
    %v3495 = vshrl.u32 %v3494, 7
    %v3496 = vsub.s32 2, %v3495
    %v3497 = vrot.slane %v3480, %v3496
    %v3498 = vlaneseq
    %v3499 = vshrl.u32 %v3498, 7
    %v3500 = vsub.s32 3, %v3499
    %v3501 = vrot.slane %v3480, %v3500
    %v3502 = vlaneseq
    %v3503 = vshrl.u32 %v3502, 7
    %v3504 = vsub.s32 4, %v3503
    %v3505 = vrot.slane %v3480, %v3504
    %v3506 = vlaneseq
    %v3507 = vshrl.u32 %v3506, 7
    %v3508 = vsub.s32 5, %v3507
    %v3509 = vrot.slane %v3480, %v3508
    %v3510 = vlaneseq
    %v3511 = vshrl.u32 %v3510, 7
    %v3512 = vsub.s32 6, %v3511
    %v3513 = vrot.slane %v3480, %v3512
    %v3514 = vlaneseq
    %v3515 = vshrl.u32 %v3514, 7
    %v3516 = vsub.s32 7, %v3515
    %v3517 = vrot.slane %v3480, %v3516
    %v3518 = vlaneseq
    %v3519 = vshrl.u32 %v3518, 7
    %v3520 = vsub.s32 0, %v3519
    %v3521 = vrot.slane %v3483, %v3520
    %v3522 = vlaneseq
    %v3523 = vshrl.u32 %v3522, 7
    %v3524 = vsub.s32 1, %v3523
    %v3525 = vrot.slane %v3483, %v3524
    %v3526 = vlaneseq
    %v3527 = vshrl.u32 %v3526, 7
    %v3528 = vsub.s32 2, %v3527
    %v3529 = vrot.slane %v3483, %v3528
    %v3530 = vlaneseq
    %v3531 = vshrl.u32 %v3530, 7
    %v3532 = vsub.s32 3, %v3531
    %v3533 = vrot.slane %v3483, %v3532
    %v3534 = vlaneseq
    %v3535 = vshrl.u32 %v3534, 7
    %v3536 = vsub.s32 4, %v3535
    %v3537 = vrot.slane %v3483, %v3536
    %v3538 = vlaneseq
    %v3539 = vshrl.u32 %v3538, 7
    %v3540 = vsub.s32 5, %v3539
    %v3541 = vrot.slane %v3483, %v3540
    %v3542 = vlaneseq
    %v3543 = vshrl.u32 %v3542, 7
    %v3544 = vsub.s32 6, %v3543
    %v3545 = vrot.slane %v3483, %v3544
    %v3546 = vlaneseq
    %v3547 = vshrl.u32 %v3546, 7
    %v3548 = vsub.s32 7, %v3547
    %v3549 = vrot.slane %v3483, %v3548
    %v3566 = vrcp.pop %v3489
    %v3567 = vmul.f32 %v3303, %v3566
    %v3568 = vrcp.pop %v3493
    %v3569 = vmul.f32 %v3305, %v3568
    %v3570 = vrcp.pop %v3497
    %v3571 = vmul.f32 %v3307, %v3570
    %v3572 = vrcp.pop %v3501
    %v3573 = vmul.f32 %v3309, %v3572
    %v3574 = vrcp.pop %v3505
    %v3575 = vmul.f32 %v3311, %v3574
    %v3576 = vrcp.pop %v3509
    %v3577 = vmul.f32 %v3313, %v3576
    %v3578 = vrcp.pop %v3513
    %v3579 = vmul.f32 %v3315, %v3578
    %v3580 = vrcp.pop %v3517
    %v3581 = vmul.f32 %v3317, %v3580
    %v3582 = vrcp.pop %v3521
    %v3583 = vmul.f32 %v3319, %v3582
    %v3584 = vrcp.pop %v3525
    %v3585 = vmul.f32 %v3321, %v3584
    %v3586 = vrcp.pop %v3529
    %v3587 = vmul.f32 %v3323, %v3586
    %v3588 = vrcp.pop %v3533
    %v3589 = vmul.f32 %v3325, %v3588
    %v3590 = vrcp.pop %v3537
    %v3591 = vmul.f32 %v3327, %v3590
    %v3592 = vrcp.pop %v3541
    %v3593 = vmul.f32 %v3329, %v3592
    %v3594 = vrcp.pop %v3545
    %v3595 = vmul.f32 %v3331, %v3594
    %v3596 = vrcp.pop %v3549
    %v3597 = vmul.f32 %v3333, %v3596
    %3606 = vset.pattern.permute.xlu0 0
    %3607 = vperm.xlu0 %3606, %v3567
    %v3608 = vpop.permute.xlu0 %3607
    %3609 = vset.pattern.permute.xlu0 0
    %3610 = vperm.xlu0 %3609, %v3569
    %v3611 = vpop.permute.xlu0 %3610
    %3612 = vset.pattern.permute.xlu0 0
    %3613 = vperm.xlu0 %3612, %v3571
    %v3614 = vpop.permute.xlu0 %3613
    %3615 = vset.pattern.permute.xlu0 0
    %3616 = vperm.xlu0 %3615, %v3573
    %v3617 = vpop.permute.xlu0 %3616
    %3618 = vset.pattern.permute.xlu0 0
    %3619 = vperm.xlu0 %3618, %v3575
    %v3620 = vpop.permute.xlu0 %3619
    %3621 = vset.pattern.permute.xlu0 0
    %3622 = vperm.xlu0 %3621, %v3577
    %v3623 = vpop.permute.xlu0 %3622
    %3624 = vset.pattern.permute.xlu0 0
    %3625 = vperm.xlu0 %3624, %v3579
    %v3626 = vpop.permute.xlu0 %3625
    %3627 = vset.pattern.permute.xlu0 0
    %3628 = vperm.xlu0 %3627, %v3581
    %v3629 = vpop.permute.xlu0 %3628
    %v3630 = vlaneseq
    %v3631 = vshrl.u32 %v3630, 7
    %v3632 = vsub.s32 %v793, %v3631
    %v3633 = vrot.slane %v3608, %v3632
    %v3634 = vlaneseq
    %v3635 = vshrl.u32 %v3634, 7
    %v3636 = vsub.s32 %v793, %v3635
    %v3637 = vrot.slane %v3611, %v3636
    %v3638 = vlaneseq
    %v3639 = vshrl.u32 %v3638, 7
    %v3640 = vsub.s32 %v793, %v3639
    %v3641 = vrot.slane %v3614, %v3640
    %v3642 = vlaneseq
    %v3643 = vshrl.u32 %v3642, 7
    %v3644 = vsub.s32 %v793, %v3643
    %v3645 = vrot.slane %v3617, %v3644
    %v3646 = vlaneseq
    %v3647 = vshrl.u32 %v3646, 7
    %v3648 = vsub.s32 %v793, %v3647
    %v3649 = vrot.slane %v3620, %v3648
    %v3650 = vlaneseq
    %v3651 = vshrl.u32 %v3650, 7
    %v3652 = vsub.s32 %v793, %v3651
    %v3653 = vrot.slane %v3623, %v3652
    %v3654 = vlaneseq
    %v3655 = vshrl.u32 %v3654, 7
    %v3656 = vsub.s32 %v793, %v3655
    %v3657 = vrot.slane %v3626, %v3656
    %v3658 = vlaneseq
    %v3659 = vshrl.u32 %v3658, 7
    %v3660 = vsub.s32 %v793, %v3659
    %v3661 = vrot.slane %v3629, %v3660
    %v3662 = vsel %vm858, %v3637, %v3633
    %v3663 = vsel %vm860, %v3641, %v3662
    %v3664 = vsel %vm862, %v3645, %v3663
    %v3665 = vsel %vm864, %v3649, %v3664
    %v3666 = vsel %vm866, %v3653, %v3665
    %v3667 = vsel %vm868, %v3657, %v3666
    %v3668 = vsel %vm870, %v3661, %v3667
    %3669 = vrot.lane.b32.xlu0 %v413, 112
    %v3670 = vpop.permute.xlu0 %3669
    %v3672 = vsel %vm415, %v3668, 0
    %3674 = vmatprep.subr.mxu0 0.0
    %3675 = vmatpush1.msra.mxu0 %v3670
    %3676 = vmatprep.subr.mxu0 0.0
    %3677 = vmatpush1.msra.mxu0 0.0
    %3678 = vmatprep.subr.mxu0 0.0
    %3679 = vmatpush1.msra.mxu0 0.0
    %3680 = vmatprep.subr.mxu0 0.0
    %3681 = vmatpush1.msra.mxu0 0.0
    %3682 = vmatprep.subr.mxu0 0.0
    %3683 = vmatpush1.msra.mxu0 0.0
    %3684 = vmatprep.subr.mxu0 0.0
    %3685 = vmatpush1.msra.mxu0 0.0
    %3686 = vmatprep.subr.mxu0 0.0
    %3687 = vmatpush1.msra.mxu0 0.0
    %3688 = vmatprep.subr.mxu0 0.0
    %3689 = vmatpush1.msra.mxu0 0.0
    %3690 = vmatprep.subr.mxu0 0.0
    %3691 = vmatpush1.msra.mxu0 0.0
    %3692 = vmatprep.subr.mxu0 0.0
    %3693 = vmatpush1.msra.mxu0 0.0
    %3694 = vmatprep.subr.mxu0 0.0
    %3695 = vmatpush1.msra.mxu0 0.0
    %3696 = vmatprep.subr.mxu0 0.0
    %3697 = vmatpush1.msra.mxu0 0.0
    %3698 = vmatprep.subr.mxu0 0.0
    %3699 = vmatpush1.msra.mxu0 0.0
    %3700 = vmatprep.subr.mxu0 0.0
    %3701 = vmatpush1.msra.mxu0 0.0
    %3702 = vmatprep.subr.mxu0 0.0
    %3703 = vmatpush1.msra.mxu0 0.0
    %3704 = vmatprep.subr.mxu0 0.0
    %3705 = vmatpush1.msra.mxu0 0.0
    %3706 = vmatprep.subr.mxu0 0.0
    %3707 = vmatpush1.msra.mxu0 0.0
    %3708 = vmatprep.subr.mxu0 0.0
    %3709 = vmatpush1.msra.mxu0 0.0
    %3710 = vmatprep.subr.mxu0 0.0
    %3711 = vmatpush1.msra.mxu0 0.0
    %3712 = vmatprep.subr.mxu0 0.0
    %3713 = vmatpush1.msra.mxu0 0.0
    %3714 = vmatprep.subr.mxu0 0.0
    %3715 = vmatpush1.msra.mxu0 0.0
    %3716 = vmatprep.subr.mxu0 0.0
    %3717 = vmatpush1.msra.mxu0 0.0
    %3718 = vmatprep.subr.mxu0 0.0
    %3719 = vmatpush1.msra.mxu0 0.0
    %3720 = vmatprep.subr.mxu0 0.0
    %3721 = vmatpush1.msra.mxu0 0.0
    %3722 = vmatprep.subr.mxu0 0.0
    %3723 = vmatpush1.msra.mxu0 0.0
    %3724 = vmatprep.subr.mxu0 0.0
    %3725 = vmatpush1.msra.mxu0 0.0
    %3726 = vmatprep.subr.mxu0 0.0
    %3727 = vmatpush1.msra.mxu0 0.0
    %3728 = vmatprep.subr.mxu0 0.0
    %3729 = vmatpush1.msra.mxu0 0.0
    %3730 = vmatprep.subr.mxu0 0.0
    %3731 = vmatpush1.msra.mxu0 0.0
    %3732 = vmatprep.subr.mxu0 0.0
    %3733 = vmatpush1.msra.mxu0 0.0
    %3734 = vmatprep.subr.mxu0 0.0
    %3735 = vmatpush1.msra.mxu0 0.0
    %3736 = vmatprep.subr.mxu0 0.0
    %3737 = vmatpush1.msra.mxu0 0.0
    %3738 = vmatprep.mubr.f32.mxu0 0.0
    %3739 = vmatmul.mubr.f32.gmra.mrb[0].mxu0 %v3672
    %v3740 = vpop.f32.mrb[0].mxu0
    %v3741 = vadd.f32 0.0, %v3740
    %v3742 = vpop.f32.mrb[0].mxu0
    %3743 = vdwg.mxu0
    %3752 = vset.pattern.permute.xlu0 0
    %3753 = vperm.xlu0 %3752, %v3583
    %v3754 = vpop.permute.xlu0 %3753
    %3755 = vset.pattern.permute.xlu0 0
    %3756 = vperm.xlu0 %3755, %v3585
    %v3757 = vpop.permute.xlu0 %3756
    %3758 = vset.pattern.permute.xlu0 0
    %3759 = vperm.xlu0 %3758, %v3587
    %v3760 = vpop.permute.xlu0 %3759
    %3761 = vset.pattern.permute.xlu0 0
    %3762 = vperm.xlu0 %3761, %v3589
    %v3763 = vpop.permute.xlu0 %3762
    %3764 = vset.pattern.permute.xlu0 0
    %3765 = vperm.xlu0 %3764, %v3591
    %v3766 = vpop.permute.xlu0 %3765
    %3767 = vset.pattern.permute.xlu0 0
    %3768 = vperm.xlu0 %3767, %v3593
    %v3769 = vpop.permute.xlu0 %3768
    %3770 = vset.pattern.permute.xlu0 0
    %3771 = vperm.xlu0 %3770, %v3595
    %v3772 = vpop.permute.xlu0 %3771
    %3773 = vset.pattern.permute.xlu0 0
    %3774 = vperm.xlu0 %3773, %v3597
    %v3775 = vpop.permute.xlu0 %3774
    %v3776 = vlaneseq
    %v3777 = vshrl.u32 %v3776, 7
    %v3778 = vsub.s32 %v793, %v3777
    %v3779 = vrot.slane %v3754, %v3778
    %v3780 = vlaneseq
    %v3781 = vshrl.u32 %v3780, 7
    %v3782 = vsub.s32 %v793, %v3781
    %v3783 = vrot.slane %v3757, %v3782
    %v3784 = vlaneseq
    %v3785 = vshrl.u32 %v3784, 7
    %v3786 = vsub.s32 %v793, %v3785
    %v3787 = vrot.slane %v3760, %v3786
    %v3788 = vlaneseq
    %v3789 = vshrl.u32 %v3788, 7
    %v3790 = vsub.s32 %v793, %v3789
    %v3791 = vrot.slane %v3763, %v3790
    %v3792 = vlaneseq
    %v3793 = vshrl.u32 %v3792, 7
    %v3794 = vsub.s32 %v793, %v3793
    %v3795 = vrot.slane %v3766, %v3794
    %v3796 = vlaneseq
    %v3797 = vshrl.u32 %v3796, 7
    %v3798 = vsub.s32 %v793, %v3797
    %v3799 = vrot.slane %v3769, %v3798
    %v3800 = vlaneseq
    %v3801 = vshrl.u32 %v3800, 7
    %v3802 = vsub.s32 %v793, %v3801
    %v3803 = vrot.slane %v3772, %v3802
    %v3804 = vlaneseq
    %v3805 = vshrl.u32 %v3804, 7
    %v3806 = vsub.s32 %v793, %v3805
    %v3807 = vrot.slane %v3775, %v3806
    %v3808 = vsel %vm858, %v3783, %v3779
    %v3809 = vsel %vm860, %v3787, %v3808
    %v3810 = vsel %vm862, %v3791, %v3809
    %v3811 = vsel %vm864, %v3795, %v3810
    %v3812 = vsel %vm866, %v3799, %v3811
    %v3813 = vsel %vm868, %v3803, %v3812
    %v3814 = vsel %vm870, %v3807, %v3813
    %3815 = vrot.lane.b32.xlu0 %v414, 112
    %v3816 = vpop.permute.xlu0 %3815
    %v3818 = vsel %vm415, %v3814, 0
    %3820 = vmatprep.subr.mxu0 0.0
    %3821 = vmatpush1.msra.mxu0 %v3816
    %3822 = vmatprep.subr.mxu0 0.0
    %3823 = vmatpush1.msra.mxu0 0.0
    %3824 = vmatprep.subr.mxu0 0.0
    %3825 = vmatpush1.msra.mxu0 0.0
    %3826 = vmatprep.subr.mxu0 0.0
    %3827 = vmatpush1.msra.mxu0 0.0
    %3828 = vmatprep.subr.mxu0 0.0
    %3829 = vmatpush1.msra.mxu0 0.0
    %3830 = vmatprep.subr.mxu0 0.0
    %3831 = vmatpush1.msra.mxu0 0.0
    %3832 = vmatprep.subr.mxu0 0.0
    %3833 = vmatpush1.msra.mxu0 0.0
    %3834 = vmatprep.subr.mxu0 0.0
    %3835 = vmatpush1.msra.mxu0 0.0
    %3836 = vmatprep.subr.mxu0 0.0
    %3837 = vmatpush1.msra.mxu0 0.0
    %3838 = vmatprep.subr.mxu0 0.0
    %3839 = vmatpush1.msra.mxu0 0.0
    %3840 = vmatprep.subr.mxu0 0.0
    %3841 = vmatpush1.msra.mxu0 0.0
    %3842 = vmatprep.subr.mxu0 0.0
    %3843 = vmatpush1.msra.mxu0 0.0
    %3844 = vmatprep.subr.mxu0 0.0
    %3845 = vmatpush1.msra.mxu0 0.0
    %3846 = vmatprep.subr.mxu0 0.0
    %3847 = vmatpush1.msra.mxu0 0.0
    %3848 = vmatprep.subr.mxu0 0.0
    %3849 = vmatpush1.msra.mxu0 0.0
    %3850 = vmatprep.subr.mxu0 0.0
    %3851 = vmatpush1.msra.mxu0 0.0
    %3852 = vmatprep.subr.mxu0 0.0
    %3853 = vmatpush1.msra.mxu0 0.0
    %3854 = vmatprep.subr.mxu0 0.0
    %3855 = vmatpush1.msra.mxu0 0.0
    %3856 = vmatprep.subr.mxu0 0.0
    %3857 = vmatpush1.msra.mxu0 0.0
    %3858 = vmatprep.subr.mxu0 0.0
    %3859 = vmatpush1.msra.mxu0 0.0
    %3860 = vmatprep.subr.mxu0 0.0
    %3861 = vmatpush1.msra.mxu0 0.0
    %3862 = vmatprep.subr.mxu0 0.0
    %3863 = vmatpush1.msra.mxu0 0.0
    %3864 = vmatprep.subr.mxu0 0.0
    %3865 = vmatpush1.msra.mxu0 0.0
    %3866 = vmatprep.subr.mxu0 0.0
    %3867 = vmatpush1.msra.mxu0 0.0
    %3868 = vmatprep.subr.mxu0 0.0
    %3869 = vmatpush1.msra.mxu0 0.0
    %3870 = vmatprep.subr.mxu0 0.0
    %3871 = vmatpush1.msra.mxu0 0.0
    %3872 = vmatprep.subr.mxu0 0.0
    %3873 = vmatpush1.msra.mxu0 0.0
    %3874 = vmatprep.subr.mxu0 0.0
    %3875 = vmatpush1.msra.mxu0 0.0
    %3876 = vmatprep.subr.mxu0 0.0
    %3877 = vmatpush1.msra.mxu0 0.0
    %3878 = vmatprep.subr.mxu0 0.0
    %3879 = vmatpush1.msra.mxu0 0.0
    %3880 = vmatprep.subr.mxu0 0.0
    %3881 = vmatpush1.msra.mxu0 0.0
    %3882 = vmatprep.subr.mxu0 0.0
    %3883 = vmatpush1.msra.mxu0 0.0
    %3884 = vmatprep.mubr.f32.mxu0 0.0
    %3885 = vmatmul.mubr.f32.gmra.mrb[0].mxu0 %v3818
    %v3886 = vpop.f32.mrb[0].mxu0
    %v3887 = vadd.f32 0.0, %v3886
    %v3888 = vpop.f32.mrb[0].mxu0
    %3889 = vdwg.mxu0
    %3892 = vrot.lane.b32.xlu0 %v3741, 16
    %v3893 = vpop.permute.xlu0 %3892
    %3894 = vrot.lane.b32.xlu0 %v3887, 16
    %v3895 = vpop.permute.xlu0 %3894
    %vm3898 = vcmask 195712
    %3899 = vst.msk [vmem:[#allocation2] sm:$0xff] %vm3898, %v3893
    %3900 = vst.msk [vmem:[#allocation2 + $0x8] sm:$0xff] %vm3898, %v3895
    %3901 = vrot.lane.b32.xlu0 %v225, 104
    %v3902 = vpop.permute.xlu0 %3901
    %3903 = vrot.lane.b32.xlu0 %v319, 104
    %v3904 = vpop.permute.xlu0 %3903
    %v3905 = vsel %vm415, %v3902, 0
    %v3907 = vsel %vm415, %v3904, 0
    %3909 = vmatprep.subr.mxu0 0.0
    %3910 = vmatpush1.xpose.msra.mxu0 %v3907
    %3911 = vmatprep.subr.mxu0 0.0
    %3912 = vmatpush1.xpose.msra.mxu0 0.0
    %3913 = vmatprep.subr.mxu0 0.0
    %3914 = vmatpush1.xpose.msra.mxu0 0.0
    %3915 = vmatprep.subr.mxu0 0.0
    %3916 = vmatpush1.xpose.msra.mxu0 0.0
    %3917 = vmatprep.subr.mxu0 0.0
    %3918 = vmatpush1.xpose.msra.mxu0 0.0
    %3919 = vmatprep.subr.mxu0 0.0
    %3920 = vmatpush1.xpose.msra.mxu0 0.0
    %3921 = vmatprep.subr.mxu0 0.0
    %3922 = vmatpush1.xpose.msra.mxu0 0.0
    %3923 = vmatprep.subr.mxu0 0.0
    %3924 = vmatpush1.xpose.msra.mxu0 0.0
    %3925 = vmatprep.subr.mxu0 0.0
    %3926 = vmatpush1.xpose.msra.mxu0 0.0
    %3927 = vmatprep.subr.mxu0 0.0
    %3928 = vmatpush1.xpose.msra.mxu0 0.0
    %3929 = vmatprep.subr.mxu0 0.0
    %3930 = vmatpush1.xpose.msra.mxu0 0.0
    %3931 = vmatprep.subr.mxu0 0.0
    %3932 = vmatpush1.xpose.msra.mxu0 0.0
    %3933 = vmatprep.subr.mxu0 0.0
    %3934 = vmatpush1.xpose.msra.mxu0 0.0
    %3935 = vmatprep.subr.mxu0 0.0
    %3936 = vmatpush1.xpose.msra.mxu0 0.0
    %3937 = vmatprep.subr.mxu0 0.0
    %3938 = vmatpush1.xpose.msra.mxu0 0.0
    %3939 = vmatprep.subr.mxu0 0.0
    %3940 = vmatpush1.xpose.msra.mxu0 0.0
    %3941 = vmatprep.subr.mxu0 0.0
    %3942 = vmatpush1.xpose.msra.mxu0 0.0
    %3943 = vmatprep.subr.mxu0 0.0
    %3944 = vmatpush1.xpose.msra.mxu0 0.0
    %3945 = vmatprep.subr.mxu0 0.0
    %3946 = vmatpush1.xpose.msra.mxu0 0.0
    %3947 = vmatprep.subr.mxu0 0.0
    %3948 = vmatpush1.xpose.msra.mxu0 0.0
    %3949 = vmatprep.subr.mxu0 0.0
    %3950 = vmatpush1.xpose.msra.mxu0 0.0
    %3951 = vmatprep.subr.mxu0 0.0
    %3952 = vmatpush1.xpose.msra.mxu0 0.0
    %3953 = vmatprep.subr.mxu0 0.0
    %3954 = vmatpush1.xpose.msra.mxu0 0.0
    %3955 = vmatprep.subr.mxu0 0.0
    %3956 = vmatpush1.xpose.msra.mxu0 0.0
    %3957 = vmatprep.subr.mxu0 0.0
    %3958 = vmatpush1.xpose.msra.mxu0 0.0
    %3959 = vmatprep.subr.mxu0 0.0
    %3960 = vmatpush1.xpose.msra.mxu0 0.0
    %3961 = vmatprep.subr.mxu0 0.0
    %3962 = vmatpush1.xpose.msra.mxu0 0.0
    %3963 = vmatprep.subr.mxu0 0.0
    %3964 = vmatpush1.xpose.msra.mxu0 0.0
    %3965 = vmatprep.subr.mxu0 0.0
    %3966 = vmatpush1.xpose.msra.mxu0 0.0
    %3967 = vmatprep.subr.mxu0 0.0
    %3968 = vmatpush1.xpose.msra.mxu0 0.0
    %3969 = vmatprep.subr.mxu0 0.0
    %3970 = vmatpush1.xpose.msra.mxu0 0.0
    %3971 = vmatprep.subr.mxu0 0.0
    %3972 = vmatpush1.xpose.msra.mxu0 0.0
    %3973 = vmatprep.mubr.f32.mxu0 0.0
    %3974 = vmatmul.mubr.f32.gmra.mrb[0].mxu0 %v3905
    %v3975 = vpop.f32.mrb[0].mxu0
    %v3976 = vadd.f32 0.0, %v3975
    %v3977 = vpop.f32.mrb[0].mxu0
    %3978 = vdwg.mxu0
    %3979 = vrot.lane.b32.xlu0 %v226, 104
    %v3980 = vpop.permute.xlu0 %3979
    %3981 = vrot.lane.b32.xlu0 %v320, 104
    %v3982 = vpop.permute.xlu0 %3981
    %v3983 = vsel %vm415, %v3980, 0
    %v3985 = vsel %vm415, %v3982, 0
    %3987 = vmatprep.subr.mxu0 0.0
    %3988 = vmatpush1.xpose.msra.mxu0 %v3985
    %3989 = vmatprep.subr.mxu0 0.0
    %3990 = vmatpush1.xpose.msra.mxu0 0.0
    %3991 = vmatprep.subr.mxu0 0.0
    %3992 = vmatpush1.xpose.msra.mxu0 0.0
    %3993 = vmatprep.subr.mxu0 0.0
    %3994 = vmatpush1.xpose.msra.mxu0 0.0
    %3995 = vmatprep.subr.mxu0 0.0
    %3996 = vmatpush1.xpose.msra.mxu0 0.0
    %3997 = vmatprep.subr.mxu0 0.0
    %3998 = vmatpush1.xpose.msra.mxu0 0.0
    %3999 = vmatprep.subr.mxu0 0.0
    %4000 = vmatpush1.xpose.msra.mxu0 0.0
    %4001 = vmatprep.subr.mxu0 0.0
    %4002 = vmatpush1.xpose.msra.mxu0 0.0
    %4003 = vmatprep.subr.mxu0 0.0
    %4004 = vmatpush1.xpose.msra.mxu0 0.0
    %4005 = vmatprep.subr.mxu0 0.0
    %4006 = vmatpush1.xpose.msra.mxu0 0.0
    %4007 = vmatprep.subr.mxu0 0.0
    %4008 = vmatpush1.xpose.msra.mxu0 0.0
    %4009 = vmatprep.subr.mxu0 0.0
    %4010 = vmatpush1.xpose.msra.mxu0 0.0
    %4011 = vmatprep.subr.mxu0 0.0
    %4012 = vmatpush1.xpose.msra.mxu0 0.0
    %4013 = vmatprep.subr.mxu0 0.0
    %4014 = vmatpush1.xpose.msra.mxu0 0.0
    %4015 = vmatprep.subr.mxu0 0.0
    %4016 = vmatpush1.xpose.msra.mxu0 0.0
    %4017 = vmatprep.subr.mxu0 0.0
    %4018 = vmatpush1.xpose.msra.mxu0 0.0
    %4019 = vmatprep.subr.mxu0 0.0
    %4020 = vmatpush1.xpose.msra.mxu0 0.0
    %4021 = vmatprep.subr.mxu0 0.0
    %4022 = vmatpush1.xpose.msra.mxu0 0.0
    %4023 = vmatprep.subr.mxu0 0.0
    %4024 = vmatpush1.xpose.msra.mxu0 0.0
    %4025 = vmatprep.subr.mxu0 0.0
    %4026 = vmatpush1.xpose.msra.mxu0 0.0
    %4027 = vmatprep.subr.mxu0 0.0
    %4028 = vmatpush1.xpose.msra.mxu0 0.0
    %4029 = vmatprep.subr.mxu0 0.0
    %4030 = vmatpush1.xpose.msra.mxu0 0.0
    %4031 = vmatprep.subr.mxu0 0.0
    %4032 = vmatpush1.xpose.msra.mxu0 0.0
    %4033 = vmatprep.subr.mxu0 0.0
    %4034 = vmatpush1.xpose.msra.mxu0 0.0
    %4035 = vmatprep.subr.mxu0 0.0
    %4036 = vmatpush1.xpose.msra.mxu0 0.0
    %4037 = vmatprep.subr.mxu0 0.0
    %4038 = vmatpush1.xpose.msra.mxu0 0.0
    %4039 = vmatprep.subr.mxu0 0.0
    %4040 = vmatpush1.xpose.msra.mxu0 0.0
    %4041 = vmatprep.subr.mxu0 0.0
    %4042 = vmatpush1.xpose.msra.mxu0 0.0
    %4043 = vmatprep.subr.mxu0 0.0
    %4044 = vmatpush1.xpose.msra.mxu0 0.0
    %4045 = vmatprep.subr.mxu0 0.0
    %4046 = vmatpush1.xpose.msra.mxu0 0.0
    %4047 = vmatprep.subr.mxu0 0.0
    %4048 = vmatpush1.xpose.msra.mxu0 0.0
    %4049 = vmatprep.subr.mxu0 0.0
    %4050 = vmatpush1.xpose.msra.mxu0 0.0
    %4051 = vmatprep.mubr.f32.mxu0 0.0
    %4052 = vmatmul.mubr.f32.gmra.mrb[0].mxu0 %v3983
    %v4053 = vpop.f32.mrb[0].mxu0
    %v4054 = vadd.f32 0.0, %v4053
    %v4055 = vpop.f32.mrb[0].mxu0
    %4056 = vdwg.mxu0
    %v4057 = vmul.f32 %v3976, 0.35355338
    %v4058 = vmul.f32 %v4054, 0.35355338
    %v4061 = vsel %vm415, %v3904, 0.0
    %4062 = vadd.xlane.f32.xlu0 %v4061
    %v4063 = vpop.xlane.xlu0 %4062
    %v4064 = vsel %vm415, %v3982, 0.0
    %4065 = vadd.xlane.f32.xlu0 %v4064
    %v4066 = vpop.xlane.xlu0 %4065
    %vm4067 = vcmp.eq.f32.partialorder %v4063, 0.0
    %vm4068 = vcmp.eq.f32.partialorder %v4066, 0.0
    %v4069 = vsel %vm4067, 1, 0
    %v4070 = vsel %vm4068, 1, 0
    %vm4071 = vcmp.eq.s32.totalorder %v4069, 1
    %vm4072 = vcmp.eq.s32.totalorder %v4070, 1
    %v4075 = vlaneseq
    %v4076 = vshrl.u32 %v4075, 7
    %v4077 = vsub.s32 0, %v4076
    %v4078 = vrot.slane %v4057, %v4077
    %4080 = vbcast.lane.b32.xlu0 %v4078, 256
    %v4081 = vpop.permute.xlu0 %4080
    %v4082 = vlaneseq
    %v4083 = vshrl.u32 %v4082, 7
    %v4084 = vsub.s32 1, %v4083
    %v4085 = vrot.slane %v4057, %v4084
    %4087 = vbcast.lane.b32.xlu0 %v4085, 256
    %v4088 = vpop.permute.xlu0 %4087
    %v4089 = vlaneseq
    %v4090 = vshrl.u32 %v4089, 7
    %v4091 = vsub.s32 2, %v4090
    %v4092 = vrot.slane %v4057, %v4091
    %4094 = vbcast.lane.b32.xlu0 %v4092, 256
    %v4095 = vpop.permute.xlu0 %4094
    %v4096 = vlaneseq
    %v4097 = vshrl.u32 %v4096, 7
    %v4098 = vsub.s32 3, %v4097
    %v4099 = vrot.slane %v4057, %v4098
    %4101 = vbcast.lane.b32.xlu0 %v4099, 256
    %v4102 = vpop.permute.xlu0 %4101
    %v4103 = vlaneseq
    %v4104 = vshrl.u32 %v4103, 7
    %v4105 = vsub.s32 4, %v4104
    %v4106 = vrot.slane %v4057, %v4105
    %4108 = vbcast.lane.b32.xlu0 %v4106, 256
    %v4109 = vpop.permute.xlu0 %4108
    %v4110 = vlaneseq
    %v4111 = vshrl.u32 %v4110, 7
    %v4112 = vsub.s32 5, %v4111
    %v4113 = vrot.slane %v4057, %v4112
    %4115 = vbcast.lane.b32.xlu0 %v4113, 256
    %v4116 = vpop.permute.xlu0 %4115
    %v4117 = vlaneseq
    %v4118 = vshrl.u32 %v4117, 7
    %v4119 = vsub.s32 6, %v4118
    %v4120 = vrot.slane %v4057, %v4119
    %4122 = vbcast.lane.b32.xlu0 %v4120, 256
    %v4123 = vpop.permute.xlu0 %4122
    %v4124 = vlaneseq
    %v4125 = vshrl.u32 %v4124, 7
    %v4126 = vsub.s32 7, %v4125
    %v4127 = vrot.slane %v4057, %v4126
    %4129 = vbcast.lane.b32.xlu0 %v4127, 256
    %v4130 = vpop.permute.xlu0 %4129
    %v4131 = vlaneseq
    %v4132 = vshrl.u32 %v4131, 7
    %v4133 = vsub.s32 0, %v4132
    %v4134 = vrot.slane %v4058, %v4133
    %4136 = vbcast.lane.b32.xlu0 %v4134, 256
    %v4137 = vpop.permute.xlu0 %4136
    %v4138 = vlaneseq
    %v4139 = vshrl.u32 %v4138, 7
    %v4140 = vsub.s32 1, %v4139
    %v4141 = vrot.slane %v4058, %v4140
    %4143 = vbcast.lane.b32.xlu0 %v4141, 256
    %v4144 = vpop.permute.xlu0 %4143
    %v4145 = vlaneseq
    %v4146 = vshrl.u32 %v4145, 7
    %v4147 = vsub.s32 2, %v4146
    %v4148 = vrot.slane %v4058, %v4147
    %4150 = vbcast.lane.b32.xlu0 %v4148, 256
    %v4151 = vpop.permute.xlu0 %4150
    %v4152 = vlaneseq
    %v4153 = vshrl.u32 %v4152, 7
    %v4154 = vsub.s32 3, %v4153
    %v4155 = vrot.slane %v4058, %v4154
    %4157 = vbcast.lane.b32.xlu0 %v4155, 256
    %v4158 = vpop.permute.xlu0 %4157
    %v4159 = vlaneseq
    %v4160 = vshrl.u32 %v4159, 7
    %v4161 = vsub.s32 4, %v4160
    %v4162 = vrot.slane %v4058, %v4161
    %4164 = vbcast.lane.b32.xlu0 %v4162, 256
    %v4165 = vpop.permute.xlu0 %4164
    %v4166 = vlaneseq
    %v4167 = vshrl.u32 %v4166, 7
    %v4168 = vsub.s32 5, %v4167
    %v4169 = vrot.slane %v4058, %v4168
    %4171 = vbcast.lane.b32.xlu0 %v4169, 256
    %v4172 = vpop.permute.xlu0 %4171
    %v4173 = vlaneseq
    %v4174 = vshrl.u32 %v4173, 7
    %v4175 = vsub.s32 6, %v4174
    %v4176 = vrot.slane %v4058, %v4175
    %4178 = vbcast.lane.b32.xlu0 %v4176, 256
    %v4179 = vpop.permute.xlu0 %4178
    %v4180 = vlaneseq
    %v4181 = vshrl.u32 %v4180, 7
    %v4182 = vsub.s32 7, %v4181
    %v4183 = vrot.slane %v4058, %v4182
    %4185 = vbcast.lane.b32.xlu0 %v4183, 256
    %v4186 = vpop.permute.xlu0 %4185
    %v4203 = vsel %vm4071, -4.2949673e+09, %v4081
    %v4204 = vsel %vm4071, -4.2949673e+09, %v4088
    %v4205 = vsel %vm4071, -4.2949673e+09, %v4095
    %v4206 = vsel %vm4071, -4.2949673e+09, %v4102
    %v4207 = vsel %vm4071, -4.2949673e+09, %v4109
    %v4208 = vsel %vm4071, -4.2949673e+09, %v4116
    %v4209 = vsel %vm4071, -4.2949673e+09, %v4123
    %v4210 = vsel %vm4071, -4.2949673e+09, %v4130
    %v4211 = vsel %vm4072, -4.2949673e+09, %v4137
    %v4212 = vsel %vm4072, -4.2949673e+09, %v4144
    %v4213 = vsel %vm4072, -4.2949673e+09, %v4151
    %v4214 = vsel %vm4072, -4.2949673e+09, %v4158
    %v4215 = vsel %vm4072, -4.2949673e+09, %v4165
    %v4216 = vsel %vm4072, -4.2949673e+09, %v4172
    %v4217 = vsel %vm4072, -4.2949673e+09, %v4179
    %v4218 = vsel %vm4072, -4.2949673e+09, %v4186
    %4235 = vset.pattern.permute.xlu0 0
    %4236 = vperm.xlu0 %4235, %v4203
    %v4237 = vpop.permute.xlu0 %4236
    %4238 = vset.pattern.permute.xlu0 0
    %4239 = vperm.xlu0 %4238, %v4204
    %v4240 = vpop.permute.xlu0 %4239
    %4241 = vset.pattern.permute.xlu0 0
    %4242 = vperm.xlu0 %4241, %v4205
    %v4243 = vpop.permute.xlu0 %4242
    %4244 = vset.pattern.permute.xlu0 0
    %4245 = vperm.xlu0 %4244, %v4206
    %v4246 = vpop.permute.xlu0 %4245
    %4247 = vset.pattern.permute.xlu0 0
    %4248 = vperm.xlu0 %4247, %v4207
    %v4249 = vpop.permute.xlu0 %4248
    %4250 = vset.pattern.permute.xlu0 0
    %4251 = vperm.xlu0 %4250, %v4208
    %v4252 = vpop.permute.xlu0 %4251
    %4253 = vset.pattern.permute.xlu0 0
    %4254 = vperm.xlu0 %4253, %v4209
    %v4255 = vpop.permute.xlu0 %4254
    %4256 = vset.pattern.permute.xlu0 0
    %4257 = vperm.xlu0 %4256, %v4210
    %v4258 = vpop.permute.xlu0 %4257
    %4259 = vset.pattern.permute.xlu0 0
    %4260 = vperm.xlu0 %4259, %v4211
    %v4261 = vpop.permute.xlu0 %4260
    %4262 = vset.pattern.permute.xlu0 0
    %4263 = vperm.xlu0 %4262, %v4212
    %v4264 = vpop.permute.xlu0 %4263
    %4265 = vset.pattern.permute.xlu0 0
    %4266 = vperm.xlu0 %4265, %v4213
    %v4267 = vpop.permute.xlu0 %4266
    %4268 = vset.pattern.permute.xlu0 0
    %4269 = vperm.xlu0 %4268, %v4214
    %v4270 = vpop.permute.xlu0 %4269
    %4271 = vset.pattern.permute.xlu0 0
    %4272 = vperm.xlu0 %4271, %v4215
    %v4273 = vpop.permute.xlu0 %4272
    %4274 = vset.pattern.permute.xlu0 0
    %4275 = vperm.xlu0 %4274, %v4216
    %v4276 = vpop.permute.xlu0 %4275
    %4277 = vset.pattern.permute.xlu0 0
    %4278 = vperm.xlu0 %4277, %v4217
    %v4279 = vpop.permute.xlu0 %4278
    %4280 = vset.pattern.permute.xlu0 0
    %4281 = vperm.xlu0 %4280, %v4218
    %v4282 = vpop.permute.xlu0 %4281
    %v4283 = vlaneseq
    %v4284 = vshrl.u32 %v4283, 7
    %v4285 = vsub.s32 %v793, %v4284
    %v4286 = vrot.slane %v4237, %v4285
    %v4287 = vlaneseq
    %v4288 = vshrl.u32 %v4287, 7
    %v4289 = vsub.s32 %v793, %v4288
    %v4290 = vrot.slane %v4240, %v4289
    %v4291 = vlaneseq
    %v4292 = vshrl.u32 %v4291, 7
    %v4293 = vsub.s32 %v793, %v4292
    %v4294 = vrot.slane %v4243, %v4293
    %v4295 = vlaneseq
    %v4296 = vshrl.u32 %v4295, 7
    %v4297 = vsub.s32 %v793, %v4296
    %v4298 = vrot.slane %v4246, %v4297
    %v4299 = vlaneseq
    %v4300 = vshrl.u32 %v4299, 7
    %v4301 = vsub.s32 %v793, %v4300
    %v4302 = vrot.slane %v4249, %v4301
    %v4303 = vlaneseq
    %v4304 = vshrl.u32 %v4303, 7
    %v4305 = vsub.s32 %v793, %v4304
    %v4306 = vrot.slane %v4252, %v4305
    %v4307 = vlaneseq
    %v4308 = vshrl.u32 %v4307, 7
    %v4309 = vsub.s32 %v793, %v4308
    %v4310 = vrot.slane %v4255, %v4309
    %v4311 = vlaneseq
    %v4312 = vshrl.u32 %v4311, 7
    %v4313 = vsub.s32 %v793, %v4312
    %v4314 = vrot.slane %v4258, %v4313
    %v4315 = vlaneseq
    %v4316 = vshrl.u32 %v4315, 7
    %v4317 = vsub.s32 %v793, %v4316
    %v4318 = vrot.slane %v4261, %v4317
    %v4319 = vlaneseq
    %v4320 = vshrl.u32 %v4319, 7
    %v4321 = vsub.s32 %v793, %v4320
    %v4322 = vrot.slane %v4264, %v4321
    %v4323 = vlaneseq
    %v4324 = vshrl.u32 %v4323, 7
    %v4325 = vsub.s32 %v793, %v4324
    %v4326 = vrot.slane %v4267, %v4325
    %v4327 = vlaneseq
    %v4328 = vshrl.u32 %v4327, 7
    %v4329 = vsub.s32 %v793, %v4328
    %v4330 = vrot.slane %v4270, %v4329
    %v4331 = vlaneseq
    %v4332 = vshrl.u32 %v4331, 7
    %v4333 = vsub.s32 %v793, %v4332
    %v4334 = vrot.slane %v4273, %v4333
    %v4335 = vlaneseq
    %v4336 = vshrl.u32 %v4335, 7
    %v4337 = vsub.s32 %v793, %v4336
    %v4338 = vrot.slane %v4276, %v4337
    %v4339 = vlaneseq
    %v4340 = vshrl.u32 %v4339, 7
    %v4341 = vsub.s32 %v793, %v4340
    %v4342 = vrot.slane %v4279, %v4341
    %v4343 = vlaneseq
    %v4344 = vshrl.u32 %v4343, 7
    %v4345 = vsub.s32 %v793, %v4344
    %v4346 = vrot.slane %v4282, %v4345
    %v4347 = vsel %vm858, %v4290, %v4286
    %v4348 = vsel %vm860, %v4294, %v4347
    %v4349 = vsel %vm862, %v4298, %v4348
    %v4350 = vsel %vm864, %v4302, %v4349
    %v4351 = vsel %vm866, %v4306, %v4350
    %v4352 = vsel %vm868, %v4310, %v4351
    %v4353 = vsel %vm870, %v4314, %v4352
    %v4354 = vsel %vm858, %v4322, %v4318
    %v4355 = vsel %vm860, %v4326, %v4354
    %v4356 = vsel %vm862, %v4330, %v4355
    %v4357 = vsel %vm864, %v4334, %v4356
    %v4358 = vsel %vm866, %v4338, %v4357
    %v4359 = vsel %vm868, %v4342, %v4358
    %v4360 = vsel %vm870, %v4346, %v4359
    %v4363 = vsel %vm415, %v4353, -inf
    %4364 = vmax.xlane.f32.xlu0 %v4363
    %v4365 = vpop.xlane.xlu0 %4364
    %v4366 = vsel %vm415, %v4360, -inf
    %4367 = vmax.xlane.f32.xlu0 %v4366
    %v4368 = vpop.xlane.xlu0 %4367
    %v4371 = vlaneseq
    %v4372 = vshrl.u32 %v4371, 7
    %v4373 = vsub.s32 0, %v4372
    %v4374 = vrot.slane %v4365, %v4373
    %v4375 = vlaneseq
    %v4376 = vshrl.u32 %v4375, 7
    %v4377 = vsub.s32 1, %v4376
    %v4378 = vrot.slane %v4365, %v4377
    %v4379 = vlaneseq
    %v4380 = vshrl.u32 %v4379, 7
    %v4381 = vsub.s32 2, %v4380
    %v4382 = vrot.slane %v4365, %v4381
    %v4383 = vlaneseq
    %v4384 = vshrl.u32 %v4383, 7
    %v4385 = vsub.s32 3, %v4384
    %v4386 = vrot.slane %v4365, %v4385
    %v4387 = vlaneseq
    %v4388 = vshrl.u32 %v4387, 7
    %v4389 = vsub.s32 4, %v4388
    %v4390 = vrot.slane %v4365, %v4389
    %v4391 = vlaneseq
    %v4392 = vshrl.u32 %v4391, 7
    %v4393 = vsub.s32 5, %v4392
    %v4394 = vrot.slane %v4365, %v4393
    %v4395 = vlaneseq
    %v4396 = vshrl.u32 %v4395, 7
    %v4397 = vsub.s32 6, %v4396
    %v4398 = vrot.slane %v4365, %v4397
    %v4399 = vlaneseq
    %v4400 = vshrl.u32 %v4399, 7
    %v4401 = vsub.s32 7, %v4400
    %v4402 = vrot.slane %v4365, %v4401
    %v4403 = vlaneseq
    %v4404 = vshrl.u32 %v4403, 7
    %v4405 = vsub.s32 0, %v4404
    %v4406 = vrot.slane %v4368, %v4405
    %v4407 = vlaneseq
    %v4408 = vshrl.u32 %v4407, 7
    %v4409 = vsub.s32 1, %v4408
    %v4410 = vrot.slane %v4368, %v4409
    %v4411 = vlaneseq
    %v4412 = vshrl.u32 %v4411, 7
    %v4413 = vsub.s32 2, %v4412
    %v4414 = vrot.slane %v4368, %v4413
    %v4415 = vlaneseq
    %v4416 = vshrl.u32 %v4415, 7
    %v4417 = vsub.s32 3, %v4416
    %v4418 = vrot.slane %v4368, %v4417
    %v4419 = vlaneseq
    %v4420 = vshrl.u32 %v4419, 7
    %v4421 = vsub.s32 4, %v4420
    %v4422 = vrot.slane %v4368, %v4421
    %v4423 = vlaneseq
    %v4424 = vshrl.u32 %v4423, 7
    %v4425 = vsub.s32 5, %v4424
    %v4426 = vrot.slane %v4368, %v4425
    %v4427 = vlaneseq
    %v4428 = vshrl.u32 %v4427, 7
    %v4429 = vsub.s32 6, %v4428
    %v4430 = vrot.slane %v4368, %v4429
    %v4431 = vlaneseq
    %v4432 = vshrl.u32 %v4431, 7
    %v4433 = vsub.s32 7, %v4432
    %v4434 = vrot.slane %v4368, %v4433
    %v4451 = vsub.f32 %v4203, %v4374
    %v4452 = vsub.f32 %v4204, %v4378
    %v4453 = vsub.f32 %v4205, %v4382
    %v4454 = vsub.f32 %v4206, %v4386
    %v4455 = vsub.f32 %v4207, %v4390
    %v4456 = vsub.f32 %v4208, %v4394
    %v4457 = vsub.f32 %v4209, %v4398
    %v4458 = vsub.f32 %v4210, %v4402
    %v4459 = vsub.f32 %v4211, %v4406
    %v4460 = vsub.f32 %v4212, %v4410
    %v4461 = vsub.f32 %v4213, %v4414
    %v4462 = vsub.f32 %v4214, %v4418
    %v4463 = vsub.f32 %v4215, %v4422
    %v4464 = vsub.f32 %v4216, %v4426
    %v4465 = vsub.f32 %v4217, %v4430
    %v4466 = vsub.f32 %v4218, %v4434
    %v4467 = vmul.f32 %v4451, 1.442695
    %v4468 = vpow.pop %v4467
    %v4469 = vmul.f32 %v4452, 1.442695
    %v4470 = vpow.pop %v4469
    %v4471 = vmul.f32 %v4453, 1.442695
    %v4472 = vpow.pop %v4471
    %v4473 = vmul.f32 %v4454, 1.442695
    %v4474 = vpow.pop %v4473
    %v4475 = vmul.f32 %v4455, 1.442695
    %v4476 = vpow.pop %v4475
    %v4477 = vmul.f32 %v4456, 1.442695
    %v4478 = vpow.pop %v4477
    %v4479 = vmul.f32 %v4457, 1.442695
    %v4480 = vpow.pop %v4479
    %v4481 = vmul.f32 %v4458, 1.442695
    %v4482 = vpow.pop %v4481
    %v4483 = vmul.f32 %v4459, 1.442695
    %v4484 = vpow.pop %v4483
    %v4485 = vmul.f32 %v4460, 1.442695
    %v4486 = vpow.pop %v4485
    %v4487 = vmul.f32 %v4461, 1.442695
    %v4488 = vpow.pop %v4487
    %v4489 = vmul.f32 %v4462, 1.442695
    %v4490 = vpow.pop %v4489
    %v4491 = vmul.f32 %v4463, 1.442695
    %v4492 = vpow.pop %v4491
    %v4493 = vmul.f32 %v4464, 1.442695
    %v4494 = vpow.pop %v4493
    %v4495 = vmul.f32 %v4465, 1.442695
    %v4496 = vpow.pop %v4495
    %v4497 = vmul.f32 %v4466, 1.442695
    %v4498 = vpow.pop %v4497
    %4515 = vset.pattern.permute.xlu0 0
    %4516 = vperm.xlu0 %4515, %v4468
    %v4517 = vpop.permute.xlu0 %4516
    %4518 = vset.pattern.permute.xlu0 0
    %4519 = vperm.xlu0 %4518, %v4470
    %v4520 = vpop.permute.xlu0 %4519
    %4521 = vset.pattern.permute.xlu0 0
    %4522 = vperm.xlu0 %4521, %v4472
    %v4523 = vpop.permute.xlu0 %4522
    %4524 = vset.pattern.permute.xlu0 0
    %4525 = vperm.xlu0 %4524, %v4474
    %v4526 = vpop.permute.xlu0 %4525
    %4527 = vset.pattern.permute.xlu0 0
    %4528 = vperm.xlu0 %4527, %v4476
    %v4529 = vpop.permute.xlu0 %4528
    %4530 = vset.pattern.permute.xlu0 0
    %4531 = vperm.xlu0 %4530, %v4478
    %v4532 = vpop.permute.xlu0 %4531
    %4533 = vset.pattern.permute.xlu0 0
    %4534 = vperm.xlu0 %4533, %v4480
    %v4535 = vpop.permute.xlu0 %4534
    %4536 = vset.pattern.permute.xlu0 0
    %4537 = vperm.xlu0 %4536, %v4482
    %v4538 = vpop.permute.xlu0 %4537
    %4539 = vset.pattern.permute.xlu0 0
    %4540 = vperm.xlu0 %4539, %v4484
    %v4541 = vpop.permute.xlu0 %4540
    %4542 = vset.pattern.permute.xlu0 0
    %4543 = vperm.xlu0 %4542, %v4486
    %v4544 = vpop.permute.xlu0 %4543
    %4545 = vset.pattern.permute.xlu0 0
    %4546 = vperm.xlu0 %4545, %v4488
    %v4547 = vpop.permute.xlu0 %4546
    %4548 = vset.pattern.permute.xlu0 0
    %4549 = vperm.xlu0 %4548, %v4490
    %v4550 = vpop.permute.xlu0 %4549
    %4551 = vset.pattern.permute.xlu0 0
    %4552 = vperm.xlu0 %4551, %v4492
    %v4553 = vpop.permute.xlu0 %4552
    %4554 = vset.pattern.permute.xlu0 0
    %4555 = vperm.xlu0 %4554, %v4494
    %v4556 = vpop.permute.xlu0 %4555
    %4557 = vset.pattern.permute.xlu0 0
    %4558 = vperm.xlu0 %4557, %v4496
    %v4559 = vpop.permute.xlu0 %4558
    %4560 = vset.pattern.permute.xlu0 0
    %4561 = vperm.xlu0 %4560, %v4498
    %v4562 = vpop.permute.xlu0 %4561
    %v4563 = vlaneseq
    %v4564 = vshrl.u32 %v4563, 7
    %v4565 = vsub.s32 %v793, %v4564
    %v4566 = vrot.slane %v4517, %v4565
    %v4567 = vlaneseq
    %v4568 = vshrl.u32 %v4567, 7
    %v4569 = vsub.s32 %v793, %v4568
    %v4570 = vrot.slane %v4520, %v4569
    %v4571 = vlaneseq
    %v4572 = vshrl.u32 %v4571, 7
    %v4573 = vsub.s32 %v793, %v4572
    %v4574 = vrot.slane %v4523, %v4573
    %v4575 = vlaneseq
    %v4576 = vshrl.u32 %v4575, 7
    %v4577 = vsub.s32 %v793, %v4576
    %v4578 = vrot.slane %v4526, %v4577
    %v4579 = vlaneseq
    %v4580 = vshrl.u32 %v4579, 7
    %v4581 = vsub.s32 %v793, %v4580
    %v4582 = vrot.slane %v4529, %v4581
    %v4583 = vlaneseq
    %v4584 = vshrl.u32 %v4583, 7
    %v4585 = vsub.s32 %v793, %v4584
    %v4586 = vrot.slane %v4532, %v4585
    %v4587 = vlaneseq
    %v4588 = vshrl.u32 %v4587, 7
    %v4589 = vsub.s32 %v793, %v4588
    %v4590 = vrot.slane %v4535, %v4589
    %v4591 = vlaneseq
    %v4592 = vshrl.u32 %v4591, 7
    %v4593 = vsub.s32 %v793, %v4592
    %v4594 = vrot.slane %v4538, %v4593
    %v4595 = vlaneseq
    %v4596 = vshrl.u32 %v4595, 7
    %v4597 = vsub.s32 %v793, %v4596
    %v4598 = vrot.slane %v4541, %v4597
    %v4599 = vlaneseq
    %v4600 = vshrl.u32 %v4599, 7
    %v4601 = vsub.s32 %v793, %v4600
    %v4602 = vrot.slane %v4544, %v4601
    %v4603 = vlaneseq
    %v4604 = vshrl.u32 %v4603, 7
    %v4605 = vsub.s32 %v793, %v4604
    %v4606 = vrot.slane %v4547, %v4605
    %v4607 = vlaneseq
    %v4608 = vshrl.u32 %v4607, 7
    %v4609 = vsub.s32 %v793, %v4608
    %v4610 = vrot.slane %v4550, %v4609
    %v4611 = vlaneseq
    %v4612 = vshrl.u32 %v4611, 7
    %v4613 = vsub.s32 %v793, %v4612
    %v4614 = vrot.slane %v4553, %v4613
    %v4615 = vlaneseq
    %v4616 = vshrl.u32 %v4615, 7
    %v4617 = vsub.s32 %v793, %v4616
    %v4618 = vrot.slane %v4556, %v4617
    %v4619 = vlaneseq
    %v4620 = vshrl.u32 %v4619, 7
    %v4621 = vsub.s32 %v793, %v4620
    %v4622 = vrot.slane %v4559, %v4621
    %v4623 = vlaneseq
    %v4624 = vshrl.u32 %v4623, 7
    %v4625 = vsub.s32 %v793, %v4624
    %v4626 = vrot.slane %v4562, %v4625
    %v4627 = vsel %vm858, %v4570, %v4566
    %v4628 = vsel %vm860, %v4574, %v4627
    %v4629 = vsel %vm862, %v4578, %v4628
    %v4630 = vsel %vm864, %v4582, %v4629
    %v4631 = vsel %vm866, %v4586, %v4630
    %v4632 = vsel %vm868, %v4590, %v4631
    %v4633 = vsel %vm870, %v4594, %v4632
    %v4634 = vsel %vm858, %v4602, %v4598
    %v4635 = vsel %vm860, %v4606, %v4634
    %v4636 = vsel %vm862, %v4610, %v4635
    %v4637 = vsel %vm864, %v4614, %v4636
    %v4638 = vsel %vm866, %v4618, %v4637
    %v4639 = vsel %vm868, %v4622, %v4638
    %v4640 = vsel %vm870, %v4626, %v4639
    %v4643 = vsel %vm415, %v4633, 0.0
    %4644 = vadd.xlane.f32.xlu0 %v4643
    %v4645 = vpop.xlane.xlu0 %4644
    %v4646 = vsel %vm415, %v4640, 0.0
    %4647 = vadd.xlane.f32.xlu0 %v4646
    %v4648 = vpop.xlane.xlu0 %4647
    %v4651 = vlaneseq
    %v4652 = vshrl.u32 %v4651, 7
    %v4653 = vsub.s32 0, %v4652
    %v4654 = vrot.slane %v4645, %v4653
    %v4655 = vlaneseq
    %v4656 = vshrl.u32 %v4655, 7
    %v4657 = vsub.s32 1, %v4656
    %v4658 = vrot.slane %v4645, %v4657
    %v4659 = vlaneseq
    %v4660 = vshrl.u32 %v4659, 7
    %v4661 = vsub.s32 2, %v4660
    %v4662 = vrot.slane %v4645, %v4661
    %v4663 = vlaneseq
    %v4664 = vshrl.u32 %v4663, 7
    %v4665 = vsub.s32 3, %v4664
    %v4666 = vrot.slane %v4645, %v4665
    %v4667 = vlaneseq
    %v4668 = vshrl.u32 %v4667, 7
    %v4669 = vsub.s32 4, %v4668
    %v4670 = vrot.slane %v4645, %v4669
    %v4671 = vlaneseq
    %v4672 = vshrl.u32 %v4671, 7
    %v4673 = vsub.s32 5, %v4672
    %v4674 = vrot.slane %v4645, %v4673
    %v4675 = vlaneseq
    %v4676 = vshrl.u32 %v4675, 7
    %v4677 = vsub.s32 6, %v4676
    %v4678 = vrot.slane %v4645, %v4677
    %v4679 = vlaneseq
    %v4680 = vshrl.u32 %v4679, 7
    %v4681 = vsub.s32 7, %v4680
    %v4682 = vrot.slane %v4645, %v4681
    %v4683 = vlaneseq
    %v4684 = vshrl.u32 %v4683, 7
    %v4685 = vsub.s32 0, %v4684
    %v4686 = vrot.slane %v4648, %v4685
    %v4687 = vlaneseq
    %v4688 = vshrl.u32 %v4687, 7
    %v4689 = vsub.s32 1, %v4688
    %v4690 = vrot.slane %v4648, %v4689
    %v4691 = vlaneseq
    %v4692 = vshrl.u32 %v4691, 7
    %v4693 = vsub.s32 2, %v4692
    %v4694 = vrot.slane %v4648, %v4693
    %v4695 = vlaneseq
    %v4696 = vshrl.u32 %v4695, 7
    %v4697 = vsub.s32 3, %v4696
    %v4698 = vrot.slane %v4648, %v4697
    %v4699 = vlaneseq
    %v4700 = vshrl.u32 %v4699, 7
    %v4701 = vsub.s32 4, %v4700
    %v4702 = vrot.slane %v4648, %v4701
    %v4703 = vlaneseq
    %v4704 = vshrl.u32 %v4703, 7
    %v4705 = vsub.s32 5, %v4704
    %v4706 = vrot.slane %v4648, %v4705
    %v4707 = vlaneseq
    %v4708 = vshrl.u32 %v4707, 7
    %v4709 = vsub.s32 6, %v4708
    %v4710 = vrot.slane %v4648, %v4709
    %v4711 = vlaneseq
    %v4712 = vshrl.u32 %v4711, 7
    %v4713 = vsub.s32 7, %v4712
    %v4714 = vrot.slane %v4648, %v4713
    %v4731 = vrcp.pop %v4654
    %v4732 = vmul.f32 %v4468, %v4731
    %v4733 = vrcp.pop %v4658
    %v4734 = vmul.f32 %v4470, %v4733
    %v4735 = vrcp.pop %v4662
    %v4736 = vmul.f32 %v4472, %v4735
    %v4737 = vrcp.pop %v4666
    %v4738 = vmul.f32 %v4474, %v4737
    %v4739 = vrcp.pop %v4670
    %v4740 = vmul.f32 %v4476, %v4739
    %v4741 = vrcp.pop %v4674
    %v4742 = vmul.f32 %v4478, %v4741
    %v4743 = vrcp.pop %v4678
    %v4744 = vmul.f32 %v4480, %v4743
    %v4745 = vrcp.pop %v4682
    %v4746 = vmul.f32 %v4482, %v4745
    %v4747 = vrcp.pop %v4686
    %v4748 = vmul.f32 %v4484, %v4747
    %v4749 = vrcp.pop %v4690
    %v4750 = vmul.f32 %v4486, %v4749
    %v4751 = vrcp.pop %v4694
    %v4752 = vmul.f32 %v4488, %v4751
    %v4753 = vrcp.pop %v4698
    %v4754 = vmul.f32 %v4490, %v4753
    %v4755 = vrcp.pop %v4702
    %v4756 = vmul.f32 %v4492, %v4755
    %v4757 = vrcp.pop %v4706
    %v4758 = vmul.f32 %v4494, %v4757
    %v4759 = vrcp.pop %v4710
    %v4760 = vmul.f32 %v4496, %v4759
    %v4761 = vrcp.pop %v4714
    %v4762 = vmul.f32 %v4498, %v4761
    %4771 = vset.pattern.permute.xlu0 0
    %4772 = vperm.xlu0 %4771, %v4732
    %v4773 = vpop.permute.xlu0 %4772
    %4774 = vset.pattern.permute.xlu0 0
    %4775 = vperm.xlu0 %4774, %v4734
    %v4776 = vpop.permute.xlu0 %4775
    %4777 = vset.pattern.permute.xlu0 0
    %4778 = vperm.xlu0 %4777, %v4736
    %v4779 = vpop.permute.xlu0 %4778
    %4780 = vset.pattern.permute.xlu0 0
    %4781 = vperm.xlu0 %4780, %v4738
    %v4782 = vpop.permute.xlu0 %4781
    %4783 = vset.pattern.permute.xlu0 0
    %4784 = vperm.xlu0 %4783, %v4740
    %v4785 = vpop.permute.xlu0 %4784
    %4786 = vset.pattern.permute.xlu0 0
    %4787 = vperm.xlu0 %4786, %v4742
    %v4788 = vpop.permute.xlu0 %4787
    %4789 = vset.pattern.permute.xlu0 0
    %4790 = vperm.xlu0 %4789, %v4744
    %v4791 = vpop.permute.xlu0 %4790
    %4792 = vset.pattern.permute.xlu0 0
    %4793 = vperm.xlu0 %4792, %v4746
    %v4794 = vpop.permute.xlu0 %4793
    %v4795 = vlaneseq
    %v4796 = vshrl.u32 %v4795, 7
    %v4797 = vsub.s32 %v793, %v4796
    %v4798 = vrot.slane %v4773, %v4797
    %v4799 = vlaneseq
    %v4800 = vshrl.u32 %v4799, 7
    %v4801 = vsub.s32 %v793, %v4800
    %v4802 = vrot.slane %v4776, %v4801
    %v4803 = vlaneseq
    %v4804 = vshrl.u32 %v4803, 7
    %v4805 = vsub.s32 %v793, %v4804
    %v4806 = vrot.slane %v4779, %v4805
    %v4807 = vlaneseq
    %v4808 = vshrl.u32 %v4807, 7
    %v4809 = vsub.s32 %v793, %v4808
    %v4810 = vrot.slane %v4782, %v4809
    %v4811 = vlaneseq
    %v4812 = vshrl.u32 %v4811, 7
    %v4813 = vsub.s32 %v793, %v4812
    %v4814 = vrot.slane %v4785, %v4813
    %v4815 = vlaneseq
    %v4816 = vshrl.u32 %v4815, 7
    %v4817 = vsub.s32 %v793, %v4816
    %v4818 = vrot.slane %v4788, %v4817
    %v4819 = vlaneseq
    %v4820 = vshrl.u32 %v4819, 7
    %v4821 = vsub.s32 %v793, %v4820
    %v4822 = vrot.slane %v4791, %v4821
    %v4823 = vlaneseq
    %v4824 = vshrl.u32 %v4823, 7
    %v4825 = vsub.s32 %v793, %v4824
    %v4826 = vrot.slane %v4794, %v4825
    %v4827 = vsel %vm858, %v4802, %v4798
    %v4828 = vsel %vm860, %v4806, %v4827
    %v4829 = vsel %vm862, %v4810, %v4828
    %v4830 = vsel %vm864, %v4814, %v4829
    %v4831 = vsel %vm866, %v4818, %v4830
    %v4832 = vsel %vm868, %v4822, %v4831
    %v4833 = vsel %vm870, %v4826, %v4832
    %4834 = vrot.lane.b32.xlu0 %v413, 104
    %v4835 = vpop.permute.xlu0 %4834
    %v4837 = vsel %vm415, %v4833, 0
    %4839 = vmatprep.subr.mxu0 0.0
    %4840 = vmatpush1.msra.mxu0 %v4835
    %4841 = vmatprep.subr.mxu0 0.0
    %4842 = vmatpush1.msra.mxu0 0.0
    %4843 = vmatprep.subr.mxu0 0.0
    %4844 = vmatpush1.msra.mxu0 0.0
    %4845 = vmatprep.subr.mxu0 0.0
    %4846 = vmatpush1.msra.mxu0 0.0
    %4847 = vmatprep.subr.mxu0 0.0
    %4848 = vmatpush1.msra.mxu0 0.0
    %4849 = vmatprep.subr.mxu0 0.0
    %4850 = vmatpush1.msra.mxu0 0.0
    %4851 = vmatprep.subr.mxu0 0.0
    %4852 = vmatpush1.msra.mxu0 0.0
    %4853 = vmatprep.subr.mxu0 0.0
    %4854 = vmatpush1.msra.mxu0 0.0
    %4855 = vmatprep.subr.mxu0 0.0
    %4856 = vmatpush1.msra.mxu0 0.0
    %4857 = vmatprep.subr.mxu0 0.0
    %4858 = vmatpush1.msra.mxu0 0.0
    %4859 = vmatprep.subr.mxu0 0.0
    %4860 = vmatpush1.msra.mxu0 0.0
    %4861 = vmatprep.subr.mxu0 0.0
    %4862 = vmatpush1.msra.mxu0 0.0
    %4863 = vmatprep.subr.mxu0 0.0
    %4864 = vmatpush1.msra.mxu0 0.0
    %4865 = vmatprep.subr.mxu0 0.0
    %4866 = vmatpush1.msra.mxu0 0.0
    %4867 = vmatprep.subr.mxu0 0.0
    %4868 = vmatpush1.msra.mxu0 0.0
    %4869 = vmatprep.subr.mxu0 0.0
    %4870 = vmatpush1.msra.mxu0 0.0
    %4871 = vmatprep.subr.mxu0 0.0
    %4872 = vmatpush1.msra.mxu0 0.0
    %4873 = vmatprep.subr.mxu0 0.0
    %4874 = vmatpush1.msra.mxu0 0.0
    %4875 = vmatprep.subr.mxu0 0.0
    %4876 = vmatpush1.msra.mxu0 0.0
    %4877 = vmatprep.subr.mxu0 0.0
    %4878 = vmatpush1.msra.mxu0 0.0
    %4879 = vmatprep.subr.mxu0 0.0
    %4880 = vmatpush1.msra.mxu0 0.0
    %4881 = vmatprep.subr.mxu0 0.0
    %4882 = vmatpush1.msra.mxu0 0.0
    %4883 = vmatprep.subr.mxu0 0.0
    %4884 = vmatpush1.msra.mxu0 0.0
    %4885 = vmatprep.subr.mxu0 0.0
    %4886 = vmatpush1.msra.mxu0 0.0
    %4887 = vmatprep.subr.mxu0 0.0
    %4888 = vmatpush1.msra.mxu0 0.0
    %4889 = vmatprep.subr.mxu0 0.0
    %4890 = vmatpush1.msra.mxu0 0.0
    %4891 = vmatprep.subr.mxu0 0.0
    %4892 = vmatpush1.msra.mxu0 0.0
    %4893 = vmatprep.subr.mxu0 0.0
    %4894 = vmatpush1.msra.mxu0 0.0
    %4895 = vmatprep.subr.mxu0 0.0
    %4896 = vmatpush1.msra.mxu0 0.0
    %4897 = vmatprep.subr.mxu0 0.0
    %4898 = vmatpush1.msra.mxu0 0.0
    %4899 = vmatprep.subr.mxu0 0.0
    %4900 = vmatpush1.msra.mxu0 0.0
    %4901 = vmatprep.subr.mxu0 0.0
    %4902 = vmatpush1.msra.mxu0 0.0
    %4903 = vmatprep.mubr.f32.mxu0 0.0
    %4904 = vmatmul.mubr.f32.gmra.mrb[0].mxu0 %v4837
    %v4905 = vpop.f32.mrb[0].mxu0
    %v4906 = vadd.f32 0.0, %v4905
    %v4907 = vpop.f32.mrb[0].mxu0
    %4908 = vdwg.mxu0
    %4917 = vset.pattern.permute.xlu0 0
    %4918 = vperm.xlu0 %4917, %v4748
    %v4919 = vpop.permute.xlu0 %4918
    %4920 = vset.pattern.permute.xlu0 0
    %4921 = vperm.xlu0 %4920, %v4750
    %v4922 = vpop.permute.xlu0 %4921
    %4923 = vset.pattern.permute.xlu0 0
    %4924 = vperm.xlu0 %4923, %v4752
    %v4925 = vpop.permute.xlu0 %4924
    %4926 = vset.pattern.permute.xlu0 0
    %4927 = vperm.xlu0 %4926, %v4754
    %v4928 = vpop.permute.xlu0 %4927
    %4929 = vset.pattern.permute.xlu0 0
    %4930 = vperm.xlu0 %4929, %v4756
    %v4931 = vpop.permute.xlu0 %4930
    %4932 = vset.pattern.permute.xlu0 0
    %4933 = vperm.xlu0 %4932, %v4758
    %v4934 = vpop.permute.xlu0 %4933
    %4935 = vset.pattern.permute.xlu0 0
    %4936 = vperm.xlu0 %4935, %v4760
    %v4937 = vpop.permute.xlu0 %4936
    %4938 = vset.pattern.permute.xlu0 0
    %4939 = vperm.xlu0 %4938, %v4762
    %v4940 = vpop.permute.xlu0 %4939
    %v4941 = vlaneseq
    %v4942 = vshrl.u32 %v4941, 7
    %v4943 = vsub.s32 %v793, %v4942
    %v4944 = vrot.slane %v4919, %v4943
    %v4945 = vlaneseq
    %v4946 = vshrl.u32 %v4945, 7
    %v4947 = vsub.s32 %v793, %v4946
    %v4948 = vrot.slane %v4922, %v4947
    %v4949 = vlaneseq
    %v4950 = vshrl.u32 %v4949, 7
    %v4951 = vsub.s32 %v793, %v4950
    %v4952 = vrot.slane %v4925, %v4951
    %v4953 = vlaneseq
    %v4954 = vshrl.u32 %v4953, 7
    %v4955 = vsub.s32 %v793, %v4954
    %v4956 = vrot.slane %v4928, %v4955
    %v4957 = vlaneseq
    %v4958 = vshrl.u32 %v4957, 7
    %v4959 = vsub.s32 %v793, %v4958
    %v4960 = vrot.slane %v4931, %v4959
    %v4961 = vlaneseq
    %v4962 = vshrl.u32 %v4961, 7
    %v4963 = vsub.s32 %v793, %v4962
    %v4964 = vrot.slane %v4934, %v4963
    %v4965 = vlaneseq
    %v4966 = vshrl.u32 %v4965, 7
    %v4967 = vsub.s32 %v793, %v4966
    %v4968 = vrot.slane %v4937, %v4967
    %v4969 = vlaneseq
    %v4970 = vshrl.u32 %v4969, 7
    %v4971 = vsub.s32 %v793, %v4970
    %v4972 = vrot.slane %v4940, %v4971
    %v4973 = vsel %vm858, %v4948, %v4944
    %v4974 = vsel %vm860, %v4952, %v4973
    %v4975 = vsel %vm862, %v4956, %v4974
    %v4976 = vsel %vm864, %v4960, %v4975
    %v4977 = vsel %vm866, %v4964, %v4976
    %v4978 = vsel %vm868, %v4968, %v4977
    %v4979 = vsel %vm870, %v4972, %v4978
    %4980 = vrot.lane.b32.xlu0 %v414, 104
    %v4981 = vpop.permute.xlu0 %4980
    %v4983 = vsel %vm415, %v4979, 0
    %4985 = vmatprep.subr.mxu0 0.0
    %4986 = vmatpush1.msra.mxu0 %v4981
    %4987 = vmatprep.subr.mxu0 0.0
    %4988 = vmatpush1.msra.mxu0 0.0
    %4989 = vmatprep.subr.mxu0 0.0
    %4990 = vmatpush1.msra.mxu0 0.0
    %4991 = vmatprep.subr.mxu0 0.0
    %4992 = vmatpush1.msra.mxu0 0.0
    %4993 = vmatprep.subr.mxu0 0.0
    %4994 = vmatpush1.msra.mxu0 0.0
    %4995 = vmatprep.subr.mxu0 0.0
    %4996 = vmatpush1.msra.mxu0 0.0
    %4997 = vmatprep.subr.mxu0 0.0
    %4998 = vmatpush1.msra.mxu0 0.0
    %4999 = vmatprep.subr.mxu0 0.0
    %5000 = vmatpush1.msra.mxu0 0.0
    %5001 = vmatprep.subr.mxu0 0.0
    %5002 = vmatpush1.msra.mxu0 0.0
    %5003 = vmatprep.subr.mxu0 0.0
    %5004 = vmatpush1.msra.mxu0 0.0
    %5005 = vmatprep.subr.mxu0 0.0
    %5006 = vmatpush1.msra.mxu0 0.0
    %5007 = vmatprep.subr.mxu0 0.0
    %5008 = vmatpush1.msra.mxu0 0.0
    %5009 = vmatprep.subr.mxu0 0.0
    %5010 = vmatpush1.msra.mxu0 0.0
    %5011 = vmatprep.subr.mxu0 0.0
    %5012 = vmatpush1.msra.mxu0 0.0
    %5013 = vmatprep.subr.mxu0 0.0
    %5014 = vmatpush1.msra.mxu0 0.0
    %5015 = vmatprep.subr.mxu0 0.0
    %5016 = vmatpush1.msra.mxu0 0.0
    %5017 = vmatprep.subr.mxu0 0.0
    %5018 = vmatpush1.msra.mxu0 0.0
    %5019 = vmatprep.subr.mxu0 0.0
    %5020 = vmatpush1.msra.mxu0 0.0
    %5021 = vmatprep.subr.mxu0 0.0
    %5022 = vmatpush1.msra.mxu0 0.0
    %5023 = vmatprep.subr.mxu0 0.0
    %5024 = vmatpush1.msra.mxu0 0.0
    %5025 = vmatprep.subr.mxu0 0.0
    %5026 = vmatpush1.msra.mxu0 0.0
    %5027 = vmatprep.subr.mxu0 0.0
    %5028 = vmatpush1.msra.mxu0 0.0
    %5029 = vmatprep.subr.mxu0 0.0
    %5030 = vmatpush1.msra.mxu0 0.0
    %5031 = vmatprep.subr.mxu0 0.0
    %5032 = vmatpush1.msra.mxu0 0.0
    %5033 = vmatprep.subr.mxu0 0.0
    %5034 = vmatpush1.msra.mxu0 0.0
    %5035 = vmatprep.subr.mxu0 0.0
    %5036 = vmatpush1.msra.mxu0 0.0
    %5037 = vmatprep.subr.mxu0 0.0
    %5038 = vmatpush1.msra.mxu0 0.0
    %5039 = vmatprep.subr.mxu0 0.0
    %5040 = vmatpush1.msra.mxu0 0.0
    %5041 = vmatprep.subr.mxu0 0.0
    %5042 = vmatpush1.msra.mxu0 0.0
    %5043 = vmatprep.subr.mxu0 0.0
    %5044 = vmatpush1.msra.mxu0 0.0
    %5045 = vmatprep.subr.mxu0 0.0
    %5046 = vmatpush1.msra.mxu0 0.0
    %5047 = vmatprep.subr.mxu0 0.0
    %5048 = vmatpush1.msra.mxu0 0.0
    %5049 = vmatprep.mubr.f32.mxu0 0.0
    %5050 = vmatmul.mubr.f32.gmra.mrb[0].mxu0 %v4983
    %v5051 = vpop.f32.mrb[0].mxu0
    %v5052 = vadd.f32 0.0, %v5051
    %v5053 = vpop.f32.mrb[0].mxu0
    %5054 = vdwg.mxu0
    %5057 = vrot.lane.b32.xlu0 %v4906, 24
    %v5058 = vpop.permute.xlu0 %5057
    %5059 = vrot.lane.b32.xlu0 %v5052, 24
    %v5060 = vpop.permute.xlu0 %5059
    %vm5063 = vcmask 261312
    %5064 = vst.msk [vmem:[#allocation2] sm:$0xff] %vm5063, %v5058
    %5065 = vst.msk [vmem:[#allocation2 + $0x8] sm:$0xff] %vm5063, %v5060
    %v5066 = vld [vmem:[#allocation2] sm:$0xff]
    %v5067 = vld [vmem:[#allocation2 + $0x8] sm:$0xff]
    %v5068 = vld [vmem:[%s9] sm:$0xff]
    %v5069 = vld [vmem:[%s9 + $0x8] sm:$0xff]
    %v5070 = vld [vmem:[%s9 + $0x10] sm:$0xff]
    %v5071 = vld [vmem:[%s9 + $0x18] sm:$0xff]
    %v5072 = vld [vmem:[%s10] sm:$0x1]
    %v5074 = vlaneseq
    %v5075 = vshrl.u32 %v5074, 7
    %v5076 = vsub.s32 0, %v5075
    %v5077 = vrot.slane %v5072, %v5076
    %vm5079 = vcmask 261120
    %v5081 = vsel %vm5079, %v5066, 0
    %v5084 = vsel %vm5079, %v5067, 0
    %5086 = vmatprep.subr.mxu0 0.0
    %5087 = vmatpush1.msra.mxu0 %v5068
    %5088 = vmatprep.subr.mxu0 0.0
    %5089 = vmatpush1.msra.mxu0 %v5069
    %5090 = vmatprep.subr.mxu0 0.0
    %5091 = vmatpush1.msra.mxu0 %v5070
    %5092 = vmatprep.subr.mxu0 0.0
    %5093 = vmatpush1.msra.mxu0 %v5071
    %5094 = vmatprep.subr.mxu0 0.0
    %5095 = vmatpush1.msra.mxu0 0.0
    %5096 = vmatprep.subr.mxu0 0.0
    %5097 = vmatpush1.msra.mxu0 0.0
    %5098 = vmatprep.subr.mxu0 0.0
    %5099 = vmatpush1.msra.mxu0 0.0
    %5100 = vmatprep.subr.mxu0 0.0
    %5101 = vmatpush1.msra.mxu0 0.0
    %5102 = vmatprep.subr.mxu0 0.0
    %5103 = vmatpush1.msra.mxu0 0.0
    %5104 = vmatprep.subr.mxu0 0.0
    %5105 = vmatpush1.msra.mxu0 0.0
    %5106 = vmatprep.subr.mxu0 0.0
    %5107 = vmatpush1.msra.mxu0 0.0
    %5108 = vmatprep.subr.mxu0 0.0
    %5109 = vmatpush1.msra.mxu0 0.0
    %5110 = vmatprep.subr.mxu0 0.0
    %5111 = vmatpush1.msra.mxu0 0.0
    %5112 = vmatprep.subr.mxu0 0.0
    %5113 = vmatpush1.msra.mxu0 0.0
    %5114 = vmatprep.subr.mxu0 0.0
    %5115 = vmatpush1.msra.mxu0 0.0
    %5116 = vmatprep.subr.mxu0 0.0
    %5117 = vmatpush1.msra.mxu0 0.0
    %5118 = vmatprep.subr.mxu0 0.0
    %5119 = vmatpush1.msra.mxu0 0.0
    %5120 = vmatprep.subr.mxu0 0.0
    %5121 = vmatpush1.msra.mxu0 0.0
    %5122 = vmatprep.subr.mxu0 0.0
    %5123 = vmatpush1.msra.mxu0 0.0
    %5124 = vmatprep.subr.mxu0 0.0
    %5125 = vmatpush1.msra.mxu0 0.0
    %5126 = vmatprep.subr.mxu0 0.0
    %5127 = vmatpush1.msra.mxu0 0.0
    %5128 = vmatprep.subr.mxu0 0.0
    %5129 = vmatpush1.msra.mxu0 0.0
    %5130 = vmatprep.subr.mxu0 0.0
    %5131 = vmatpush1.msra.mxu0 0.0
    %5132 = vmatprep.subr.mxu0 0.0
    %5133 = vmatpush1.msra.mxu0 0.0
    %5134 = vmatprep.subr.mxu0 0.0
    %5135 = vmatpush1.msra.mxu0 0.0
    %5136 = vmatprep.subr.mxu0 0.0
    %5137 = vmatpush1.msra.mxu0 0.0
    %5138 = vmatprep.subr.mxu0 0.0
    %5139 = vmatpush1.msra.mxu0 0.0
    %5140 = vmatprep.subr.mxu0 0.0
    %5141 = vmatpush1.msra.mxu0 0.0
    %5142 = vmatprep.subr.mxu0 0.0
    %5143 = vmatpush1.msra.mxu0 0.0
    %5144 = vmatprep.subr.mxu0 0.0
    %5145 = vmatpush1.msra.mxu0 0.0
    %5146 = vmatprep.subr.mxu0 0.0
    %5147 = vmatpush1.msra.mxu0 0.0
    %5148 = vmatprep.subr.mxu0 0.0
    %5149 = vmatpush1.msra.mxu0 0.0
    %5150 = vmatprep.mubr.f32.mxu0 0.0
    %5151 = vmatmul.mubr.f32.gmra.mrb[0].mxu0 %v5081
    %v5152 = vpop.f32.mrb[0].mxu0
    %v5153 = vadd.f32 %v5077, %v5152
    %v5154 = vpop.f32.mrb[0].mxu0
    %5155 = vmatprep.mubr.f32.mxu0 0.0
    %5156 = vmatmul.mubr.f32.gmra.mrb[0].mxu0 %v5084
    %v5157 = vpop.f32.mrb[0].mxu0
    %v5158 = vadd.f32 %v5077, %v5157
    %v5159 = vpop.f32.mrb[0].mxu0
    %5160 = vdwg.mxu0
    %5161 = vst [vmem:[#allocation15] sm:$0xff] %v5153
    %5162 = vst [vmem:[#allocation15 + $0x8] sm:$0xff] %v5158
    // Predicated region
    $region74: #{tpu_custom_call.1} parent=1 // pred_check
      _
    $region75: #{tpu_custom_call.1} parent=1 // pred_check_branch
      %5164 = sbr.rel (0) target = $region77
    $region76: #{tpu_custom_call.1} parent=1 // pred_region
      %s5166 = ssub.s32 256, 256
      %5167 = vsyncadd [#allocation5], %s5166
      %s5168 = sshll.u32 [#allocation15], 4
      %s5169 = int_to_ptr.vmem [resolvable:$true] %s5168
      %5174 = dma.vmem_to_hbm [thread:$0]  %s5169, 256, %s11, [#allocation5], 128, 128, 8
    $region77: #{tpu_custom_call.1} parent=1 // pred_fallthru
      _
    // Predicated region
    $region78: #{tpu_custom_call.1} parent=1 // pred_check
      _
    $region79: #{tpu_custom_call.1} parent=1 // pred_check_branch
      %5176 = sbr.rel (0) target = $region81
    $region80: #{tpu_custom_call.1} parent=1 // pred_region
      %5177 = dma.done [#allocation5], 256
    $region81: #{tpu_custom_call.1} parent=1 // pred_fallthru
      _
    %5178 = vsyncpa [#allocation4], 1
    %5179 = vsyncpa [#allocation7], 1
    %5180 = vsyncpa [#allocation10], 1
    %5181 = vsyncpa [#allocation13], 1
    %5182 = vsyncpa [#allocation5], 1

</llo_original>
